<compile_context>
chip_gen: v6e
topology: v6e:2x2x1
jax: 0.10.0
libtpu: 0.0.40
codegen_flags: <defaults>
</compile_context>

<pallas_src>
import functools

import jax
import jax.numpy as jnp
from jax.experimental import pallas as pl
from jax.experimental.pallas import tpu as pltpu

_LANES = 128     # per-batch lane block (valid spatial index s in [0,49), rest zero)
_K1 = 80         # conv1 im2col contraction rows (3*5*5=75 padded to 80)
_K2 = 200        # conv2 stacked contraction rows (25 taps x 8 channel rows)
_FC_PAD = 128    # every fc width zero-padded to 128 lanes
_NCLASS = 10


def _vmem():
    return pl.BlockSpec(memory_space=pltpu.MemorySpace.VMEM)


# ------------------------------ fused kernel --------------------------------

def _net_kernel(cols1_ref, w1f_ref, b1c_ref, w2r_ref, b2c_ref,
                w1e_ref, b1f_ref, w2f_ref, b2f_ref, w3f_ref, b3f_ref,
                o_ref, *, batch):
    nb = batch * _LANES

    # ---- conv1 + bias + ReLU + 2x2 pool (single merged matmul) ----
    # cols1 lanes: ((p*2+q)*4 + (dh*2+dw)) * nb + b*128 + (u*7+v)
    z = jnp.dot(w1f_ref[...], cols1_ref[...],
                preferred_element_type=jnp.float32)            # (8, 16*nb) f32
    b1 = b1c_ref[...]
    slabs = []                                                 # a1 parity slabs (p,q)
    for g in range(4):
        m = None
        for t in range(4):                                     # conv1 pool phase
            blk = z[:, (4 * g + t) * nb:(4 * g + t + 1) * nb]  # lane-tile aligned
            m = blk if m is None else jnp.maximum(m, blk)
        slabs.append(jnp.maximum(m + b1, 0.0))                 # (8, nb) f32

    # ---- conv2 + bias + ReLU + 2x2 pool ----
    # In-kernel "im2col": each of the 25 taps of each pool phase is a static
    # lane shift of one parity slab; the 25 shifted slabs are stacked along the
    # contraction axis and hit with one (16, 200) matmul per phase.
    def lane_shift(g, delta):                                  # out[:, l] = slab[:, l+delta]
        s = slabs[g]
        if delta == 0:
            return s
        return jnp.concatenate([s[:, delta:], s[:, :delta]], axis=1)

    cache = {}
    w2r = w2r_ref[...]
    mx = None
    for dh in range(2):
        for dw in range(2):                                    # conv2 pool phase
            rows = []
            for i in range(5):
                p, al = (dh + i) & 1, (dh + i) >> 1
                for j in range(5):
                    q, be = (dw + j) & 1, (dw + j) >> 1
                    key = (p * 2 + q, al * 7 + be)
                    if key not in cache:
                        cache[key] = lane_shift(*key)
                    rows.append(cache[key])
            stack = jnp.concatenate(rows, axis=0)              # (200, nb) f32
            pre = jnp.dot(w2r, stack.astype(jnp.bfloat16),
                          preferred_element_type=jnp.float32)  # (16, nb)
            mx = pre if mx is None else jnp.maximum(mx, pre)
    a2 = jnp.maximum(mx + b2c_ref[...], 0.0)                   # (16, nb); lane = b*128 + u*7+v

    # ---- fc1 + ReLU: accumulate 16 per-channel (B,128)x(128,128) matmuls ----
    h = None
    for oc in range(16):
        xo = jnp.concatenate(
            [a2[oc:oc + 1, b * _LANES:(b + 1) * _LANES] for b in range(batch)],
            axis=0)                                            # (B, 128)
        part = jnp.dot(xo.astype(jnp.bfloat16), w1e_ref[oc],
                       preferred_element_type=jnp.float32)
        h = part if h is None else h + part
    h = jnp.maximum(h + b1f_ref[...], 0.0)                     # (B, 128)

    # ---- fc2 + ReLU, fc3, softmax (lane-dense (B,128) store) ----
    h = jnp.maximum(jnp.dot(h.astype(jnp.bfloat16), w2f_ref[...],
                            preferred_element_type=jnp.float32) + b2f_ref[...], 0.0)
    logits = jnp.dot(h.astype(jnp.bfloat16), w3f_ref[...],
                     preferred_element_type=jnp.float32) + b3f_ref[...]
    lane = jax.lax.broadcasted_iota(jnp.int32, logits.shape, 1)
    logits = jnp.where(lane < _NCLASS, logits, -1e30)          # mask padded classes
    logits = logits - jnp.max(logits, axis=-1, keepdims=True)
    e = jnp.exp(logits)
    o_ref[...] = e / jnp.sum(e, axis=-1, keepdims=True)        # exact normalization


# ------------------------------ XLA-side glue --------------------------------

def _conv1_pool_cols(x):
    """(B,3,32,32) f32 -> (80, 16*B*128) bf16 conv1 im2col columns.

    Lane = ((p*2+q)*4 + (dh*2+dw)) * B*128 + b*128 + (u*7+v), where (p,q) is
    the parity of the pooled 14x14 grid (needed by the in-kernel conv2 stage),
    (dh,dw) the conv1 pool phase and (u,v) the 7x7 parity-grid position.
    Row = c*25 + i*5 + j (PyTorch conv-weight flatten order), padded 75 -> 80.
    """
    B = x.shape[0]
    pats = jnp.stack([x[:, :, i:i + 28, j:j + 28]
                      for i in range(5) for j in range(5)], axis=2)   # (B,3,25,28,28)
    pats = pats.transpose(1, 2, 0, 3, 4).reshape(75, B, 28, 28)       # rows (c,i,j)
    blocks = []
    for p in range(2):
        for q in range(2):
            for dh in range(2):
                for dw in range(2):
                    sub = pats[:, :, 2 * p + dh::4, 2 * q + dw::4]    # (75,B,7,7)
                    sub = sub.reshape(75, B, 49)
                    sub = jnp.pad(sub, ((0, _K1 - 75), (0, 0), (0, _LANES - 49)))
                    blocks.append(sub)                                # (80,B,128)
    cols = jnp.stack(blocks, axis=1)                                  # (80,16,B,128)
    return cols.reshape(_K1, 16 * B * _LANES).astype(jnp.bfloat16)


def net_forward(prepped, x):
    """x: (B,3,32,32) NCHW f32 -> (B,10) softmax probabilities."""
    B = x.shape[0]
    cols1 = _conv1_pool_cols(x)
    args = (cols1, prepped["conv1_w"], prepped["conv1_b"],
            prepped["conv2_w"], prepped["conv2_b"],
            prepped["fc1_w"], prepped["fc1_b"],
            prepped["fc2_w"], prepped["fc2_b"],
            prepped["fc3_w"], prepped["fc3_b"])
    flops = 2 * (8 * _K1 * 16 * B * _LANES        # conv1 (merged matmul)
                 + 4 * 16 * _K2 * B * _LANES      # conv2 (4 pool phases)
                 + 16 * B * _FC_PAD * _FC_PAD     # fc1 (16 per-channel matmuls)
                 + 2 * B * _FC_PAD * _FC_PAD)     # fc2 + fc3
    bytes_accessed = sum(int(a.size) * a.dtype.itemsize for a in args) + B * _FC_PAD * 4
    probs = pl.pallas_call(
        functools.partial(_net_kernel, batch=B),
        out_shape=jax.ShapeDtypeStruct((B, _FC_PAD), jnp.float32),
        in_specs=[_vmem() for _ in args],
        out_specs=_vmem(),
        cost_estimate=pl.CostEstimate(flops=flops, transcendentals=B * _FC_PAD,
                                      bytes_accessed=bytes_accessed),
    )(*args)
    return probs[:, :_NCLASS]


# ------------------------------- parameters ---------------------------------

def init_params(key):
    """Deterministic PyTorch-default-style uniform(-1/sqrt(fan_in)) init."""
    def uniform(k, shape, fan_in):
        bound = 1.0 / float(fan_in) ** 0.5
        return jax.random.uniform(k, shape, jnp.float32, -bound, bound)

    keys = jax.random.split(key, 10)
    return {
        "conv1_w": uniform(keys[0], (6, 3, 5, 5), 3 * 5 * 5),
        "conv1_b": uniform(keys[1], (6,), 3 * 5 * 5),
        "conv2_w": uniform(keys[2], (16, 6, 5, 5), 6 * 5 * 5),
        "conv2_b": uniform(keys[3], (16,), 6 * 5 * 5),
        "fc1_w": uniform(keys[4], (16 * 5 * 5, 120), 16 * 5 * 5),
        "fc1_b": uniform(keys[5], (120,), 16 * 5 * 5),
        "fc2_w": uniform(keys[6], (120, 84), 120),
        "fc2_b": uniform(keys[7], (84,), 120),
        "fc3_w": uniform(keys[8], (84, 10), 84),
        "fc3_b": uniform(keys[9], (10,), 84),
    }


def prepare_params(p):
    """One-time repack of PyTorch-layout params into MXU / lane-friendly slabs."""
    # conv1: (6,3,5,5) -> (8,80) bf16 (out_c 6->8, k 75->80); bias -> (8,1) f32
    w1 = jnp.zeros((8, _K1), jnp.float32).at[:6, :75].set(p["conv1_w"].reshape(6, 75))
    b1 = jnp.zeros((8, 1), jnp.float32).at[:6, 0].set(p["conv1_b"])
    # conv2: (16,6,5,5) -> (16,200) bf16, column = (i*5+j)*8 + c (pad channels zero)
    w2 = p["conv2_w"].transpose(0, 2, 3, 1).reshape(16, 25, 6)
    w2 = jnp.zeros((16, 25, 8), jnp.float32).at[:, :, :6].set(w2)
    # fc1: (400,120) -> (16,128,128); row s = u*7+v on the 7x7 parity grid the
    # kernel's conv2 stage emits (rows outside the valid 5x5 window are zero).
    f1 = p["fc1_w"].reshape(16, 5, 5, 120)
    w1e = jnp.zeros((16, 7, 7, _FC_PAD), jnp.float32).at[:, :5, :5, :120].set(f1)
    w1e = jnp.zeros((16, _FC_PAD, _FC_PAD), jnp.float32).at[:, :49, :].set(
        w1e.reshape(16, 49, _FC_PAD))
    pad2 = lambda a, shp: jnp.pad(a, [(0, t - s) for s, t in zip(a.shape, shp)])
    return {
        "conv1_w": w1.astype(jnp.bfloat16),
        "conv1_b": b1,
        "conv2_w": w2.reshape(16, _K2).astype(jnp.bfloat16),
        "conv2_b": p["conv2_b"].reshape(16, 1),
        "fc1_w": w1e.astype(jnp.bfloat16),
        "fc1_b": pad2(p["fc1_b"].reshape(1, -1), (1, _FC_PAD)),
        "fc2_w": pad2(p["fc2_w"], (_FC_PAD, _FC_PAD)).astype(jnp.bfloat16),
        "fc2_b": pad2(p["fc2_b"].reshape(1, -1), (1, _FC_PAD)),
        "fc3_w": pad2(p["fc3_w"], (_FC_PAD, _FC_PAD)).astype(jnp.bfloat16),
        "fc3_b": pad2(p["fc3_b"].reshape(1, -1), (1, _FC_PAD)),
    }


# ---------------------------- pure-JAX reference -----------------------------

def net_reference(p, x):
    dn = ("NCHW", "OIHW", "NCHW")
    y = jax.lax.conv_general_dilated(x, p["conv1_w"], (1, 1), "VALID",
                                     dimension_numbers=dn)
    y = jnp.maximum(y + p["conv1_b"][None, :, None, None], 0.0)
    y = jax.lax.reduce_window(y, -jnp.inf, jax.lax.max,
                              (1, 1, 2, 2), (1, 1, 2, 2), "VALID")
    y = jax.lax.conv_general_dilated(y, p["conv2_w"], (1, 1), "VALID",
                                     dimension_numbers=dn)
    y = jnp.maximum(y + p["conv2_b"][None, :, None, None], 0.0)
    y = jax.lax.reduce_window(y, -jnp.inf, jax.lax.max,
                              (1, 1, 2, 2), (1, 1, 2, 2), "VALID")
    y = y.reshape(y.shape[0], -1)
    y = jnp.maximum(y @ p["fc1_w"] + p["fc1_b"], 0.0)
    y = jnp.maximum(y @ p["fc2_w"] + p["fc2_b"], 0.0)
    y = y @ p["fc3_w"] + p["fc3_b"]
    return jax.nn.softmax(y, axis=1)


if __name__ == "__main__":
    key = jax.random.PRNGKey(0)
    pkey, xkey = jax.random.split(key)
    params = init_params(pkey)
    prepped = prepare_params(params)
    # 32x32 spatial is required by fc1's 16*5*5 input (CIFAR-10 image size).
    x = jax.random.normal(xkey, (2, 3, 32, 32), jnp.float32)
    fwd = jax.jit(net_forward)
    out = jax.block_until_ready(fwd(prepped, x))
    ref = jax.block_until_ready(net_reference(params, x))
    assert out.shape == (2, 10)
    assert bool(jnp.all(jnp.isfinite(out)))
    assert bool(jnp.allclose(jnp.sum(out, axis=1), 1.0, atol=1e-4))
    # bf16 MXU feed => loose tolerance vs f32 reference
    assert float(jnp.max(jnp.abs(out - ref))) < 5e-2
    print("KERNEL_OK")
</pallas_src>

<mosaic_0001>
module attributes {stable_mosaic.version = 11 : i64} {
  func.func @_net_kernel(%arg0: memref<80x4096xbf16, #tpu.memory_space<vmem>>, %arg1: memref<8x80xbf16, #tpu.memory_space<vmem>>, %arg2: memref<8x1xf32, #tpu.memory_space<vmem>>, %arg3: memref<16x200xbf16, #tpu.memory_space<vmem>>, %arg4: memref<16x1xf32, #tpu.memory_space<vmem>>, %arg5: memref<16x128x128xbf16, #tpu.memory_space<vmem>>, %arg6: memref<1x128xf32, #tpu.memory_space<vmem>>, %arg7: memref<128x128xbf16, #tpu.memory_space<vmem>>, %arg8: memref<1x128xf32, #tpu.memory_space<vmem>>, %arg9: memref<128x128xbf16, #tpu.memory_space<vmem>>, %arg10: memref<1x128xf32, #tpu.memory_space<vmem>>, %arg11: memref<2x128xf32, #tpu.memory_space<vmem>>) attributes {dimension_semantics = [], scalar_prefetch = 0 : i64, scratch_operands = 0 : i64, tpu.core_type = #tpu.core_type<tc>} {
    %c0 = arith.constant 0 : index
    %c0_0 = arith.constant 0 : index
    %0 = vector.load %arg1[%c0, %c0_0] : memref<8x80xbf16, #tpu.memory_space<vmem>>, vector<8x80xbf16>
    %c0_1 = arith.constant 0 : index
    %c0_2 = arith.constant 0 : index
    %1 = vector.load %arg0[%c0_1, %c0_2] : memref<80x4096xbf16, #tpu.memory_space<vmem>>, vector<80x4096xbf16>
    %cst = arith.constant dense<0.000000e+00> : vector<8x4096xf32>
    %2 = tpu.matmul %0, %1, %cst {dimension_numbers = #tpu.dot_dimension_numbers<[1], [0], [0], [1], [0, 0, 1, 1], [], []>} : vector<8x80xbf16>, vector<80x4096xbf16>, vector<8x4096xf32> -> vector<8x4096xf32>
    %c0_3 = arith.constant 0 : index
    %c0_4 = arith.constant 0 : index
    %3 = vector.load %arg2[%c0_3, %c0_4] : memref<8x1xf32, #tpu.memory_space<vmem>>, vector<8x1xf32>
    %4 = vector.extract_strided_slice %2 {offsets = [0, 0], sizes = [8, 256], strides = [1, 1]} : vector<8x4096xf32> to vector<8x256xf32>
    %5 = vector.extract_strided_slice %2 {offsets = [0, 256], sizes = [8, 256], strides = [1, 1]} : vector<8x4096xf32> to vector<8x256xf32>
    %6 = arith.maximumf %4, %5 : vector<8x256xf32>
    %7 = vector.extract_strided_slice %2 {offsets = [0, 512], sizes = [8, 256], strides = [1, 1]} : vector<8x4096xf32> to vector<8x256xf32>
    %8 = arith.maximumf %6, %7 : vector<8x256xf32>
    %9 = vector.extract_strided_slice %2 {offsets = [0, 768], sizes = [8, 256], strides = [1, 1]} : vector<8x4096xf32> to vector<8x256xf32>
    %10 = arith.maximumf %8, %9 : vector<8x256xf32>
    %11 = vector.broadcast %3 : vector<8x1xf32> to vector<8x256xf32>
    %12 = arith.addf %10, %11 : vector<8x256xf32>
    %cst_5 = arith.constant 0.000000e+00 : f32
    %13 = vector.broadcast %cst_5 : f32 to vector<8x256xf32>
    %14 = arith.maximumf %12, %13 : vector<8x256xf32>
    %15 = vector.extract_strided_slice %2 {offsets = [0, 1024], sizes = [8, 256], strides = [1, 1]} : vector<8x4096xf32> to vector<8x256xf32>
    %16 = vector.extract_strided_slice %2 {offsets = [0, 1280], sizes = [8, 256], strides = [1, 1]} : vector<8x4096xf32> to vector<8x256xf32>
    %17 = arith.maximumf %15, %16 : vector<8x256xf32>
    %18 = vector.extract_strided_slice %2 {offsets = [0, 1536], sizes = [8, 256], strides = [1, 1]} : vector<8x4096xf32> to vector<8x256xf32>
    %19 = arith.maximumf %17, %18 : vector<8x256xf32>
    %20 = vector.extract_strided_slice %2 {offsets = [0, 1792], sizes = [8, 256], strides = [1, 1]} : vector<8x4096xf32> to vector<8x256xf32>
    %21 = arith.maximumf %19, %20 : vector<8x256xf32>
    %22 = vector.broadcast %3 : vector<8x1xf32> to vector<8x256xf32>
    %23 = arith.addf %21, %22 : vector<8x256xf32>
    %cst_6 = arith.constant 0.000000e+00 : f32
    %24 = vector.broadcast %cst_6 : f32 to vector<8x256xf32>
    %25 = arith.maximumf %23, %24 : vector<8x256xf32>
    %26 = vector.extract_strided_slice %2 {offsets = [0, 2048], sizes = [8, 256], strides = [1, 1]} : vector<8x4096xf32> to vector<8x256xf32>
    %27 = vector.extract_strided_slice %2 {offsets = [0, 2304], sizes = [8, 256], strides = [1, 1]} : vector<8x4096xf32> to vector<8x256xf32>
    %28 = arith.maximumf %26, %27 : vector<8x256xf32>
    %29 = vector.extract_strided_slice %2 {offsets = [0, 2560], sizes = [8, 256], strides = [1, 1]} : vector<8x4096xf32> to vector<8x256xf32>
    %30 = arith.maximumf %28, %29 : vector<8x256xf32>
    %31 = vector.extract_strided_slice %2 {offsets = [0, 2816], sizes = [8, 256], strides = [1, 1]} : vector<8x4096xf32> to vector<8x256xf32>
    %32 = arith.maximumf %30, %31 : vector<8x256xf32>
    %33 = vector.broadcast %3 : vector<8x1xf32> to vector<8x256xf32>
    %34 = arith.addf %32, %33 : vector<8x256xf32>
    %cst_7 = arith.constant 0.000000e+00 : f32
    %35 = vector.broadcast %cst_7 : f32 to vector<8x256xf32>
    %36 = arith.maximumf %34, %35 : vector<8x256xf32>
    %37 = vector.extract_strided_slice %2 {offsets = [0, 3072], sizes = [8, 256], strides = [1, 1]} : vector<8x4096xf32> to vector<8x256xf32>
    %38 = vector.extract_strided_slice %2 {offsets = [0, 3328], sizes = [8, 256], strides = [1, 1]} : vector<8x4096xf32> to vector<8x256xf32>
    %39 = arith.maximumf %37, %38 : vector<8x256xf32>
    %40 = vector.extract_strided_slice %2 {offsets = [0, 3584], sizes = [8, 256], strides = [1, 1]} : vector<8x4096xf32> to vector<8x256xf32>
    %41 = arith.maximumf %39, %40 : vector<8x256xf32>
    %42 = vector.extract_strided_slice %2 {offsets = [0, 3840], sizes = [8, 256], strides = [1, 1]} : vector<8x4096xf32> to vector<8x256xf32>
    %43 = arith.maximumf %41, %42 : vector<8x256xf32>
    %44 = vector.broadcast %3 : vector<8x1xf32> to vector<8x256xf32>
    %45 = arith.addf %43, %44 : vector<8x256xf32>
    %cst_8 = arith.constant 0.000000e+00 : f32
    %46 = vector.broadcast %cst_8 : f32 to vector<8x256xf32>
    %47 = arith.maximumf %45, %46 : vector<8x256xf32>
    %c0_9 = arith.constant 0 : index
    %c0_10 = arith.constant 0 : index
    %48 = vector.load %arg3[%c0_9, %c0_10] : memref<16x200xbf16, #tpu.memory_space<vmem>>, vector<16x200xbf16>
    %49 = vector.extract_strided_slice %14 {offsets = [0, 1], sizes = [8, 255], strides = [1, 1]} : vector<8x256xf32> to vector<8x255xf32>
    %50 = vector.extract_strided_slice %14 {offsets = [0, 0], sizes = [8, 1], strides = [1, 1]} : vector<8x256xf32> to vector<8x1xf32>
    %51 = tpu.concatenate %49, %50 in 1 : vector<8x255xf32>, vector<8x1xf32> -> vector<8x256xf32>
    %52 = vector.extract_strided_slice %25 {offsets = [0, 1], sizes = [8, 255], strides = [1, 1]} : vector<8x256xf32> to vector<8x255xf32>
    %53 = vector.extract_strided_slice %25 {offsets = [0, 0], sizes = [8, 1], strides = [1, 1]} : vector<8x256xf32> to vector<8x1xf32>
    %54 = tpu.concatenate %52, %53 in 1 : vector<8x255xf32>, vector<8x1xf32> -> vector<8x256xf32>
    %55 = vector.extract_strided_slice %14 {offsets = [0, 2], sizes = [8, 254], strides = [1, 1]} : vector<8x256xf32> to vector<8x254xf32>
    %56 = vector.extract_strided_slice %14 {offsets = [0, 0], sizes = [8, 2], strides = [1, 1]} : vector<8x256xf32> to vector<8x2xf32>
    %57 = tpu.concatenate %55, %56 in 1 : vector<8x254xf32>, vector<8x2xf32> -> vector<8x256xf32>
    %58 = vector.extract_strided_slice %36 {offsets = [0, 1], sizes = [8, 255], strides = [1, 1]} : vector<8x256xf32> to vector<8x255xf32>
    %59 = vector.extract_strided_slice %36 {offsets = [0, 0], sizes = [8, 1], strides = [1, 1]} : vector<8x256xf32> to vector<8x1xf32>
    %60 = tpu.concatenate %58, %59 in 1 : vector<8x255xf32>, vector<8x1xf32> -> vector<8x256xf32>
    %61 = vector.extract_strided_slice %47 {offsets = [0, 1], sizes = [8, 255], strides = [1, 1]} : vector<8x256xf32> to vector<8x255xf32>
    %62 = vector.extract_strided_slice %47 {offsets = [0, 0], sizes = [8, 1], strides = [1, 1]} : vector<8x256xf32> to vector<8x1xf32>
    %63 = tpu.concatenate %61, %62 in 1 : vector<8x255xf32>, vector<8x1xf32> -> vector<8x256xf32>
    %64 = vector.extract_strided_slice %36 {offsets = [0, 2], sizes = [8, 254], strides = [1, 1]} : vector<8x256xf32> to vector<8x254xf32>
    %65 = vector.extract_strided_slice %36 {offsets = [0, 0], sizes = [8, 2], strides = [1, 1]} : vector<8x256xf32> to vector<8x2xf32>
    %66 = tpu.concatenate %64, %65 in 1 : vector<8x254xf32>, vector<8x2xf32> -> vector<8x256xf32>
    %67 = vector.extract_strided_slice %14 {offsets = [0, 7], sizes = [8, 249], strides = [1, 1]} : vector<8x256xf32> to vector<8x249xf32>
    %68 = vector.extract_strided_slice %14 {offsets = [0, 0], sizes = [8, 7], strides = [1, 1]} : vector<8x256xf32> to vector<8x7xf32>
    %69 = tpu.concatenate %67, %68 in 1 : vector<8x249xf32>, vector<8x7xf32> -> vector<8x256xf32>
    %70 = vector.extract_strided_slice %25 {offsets = [0, 7], sizes = [8, 249], strides = [1, 1]} : vector<8x256xf32> to vector<8x249xf32>
    %71 = vector.extract_strided_slice %25 {offsets = [0, 0], sizes = [8, 7], strides = [1, 1]} : vector<8x256xf32> to vector<8x7xf32>
    %72 = tpu.concatenate %70, %71 in 1 : vector<8x249xf32>, vector<8x7xf32> -> vector<8x256xf32>
    %73 = vector.extract_strided_slice %14 {offsets = [0, 8], sizes = [8, 248], strides = [1, 1]} : vector<8x256xf32> to vector<8x248xf32>
    %74 = vector.extract_strided_slice %14 {offsets = [0, 0], sizes = [8, 8], strides = [1, 1]} : vector<8x256xf32> to vector<8x8xf32>
    %75 = tpu.concatenate %73, %74 in 1 : vector<8x248xf32>, vector<8x8xf32> -> vector<8x256xf32>
    %76 = vector.extract_strided_slice %25 {offsets = [0, 8], sizes = [8, 248], strides = [1, 1]} : vector<8x256xf32> to vector<8x248xf32>
    %77 = vector.extract_strided_slice %25 {offsets = [0, 0], sizes = [8, 8], strides = [1, 1]} : vector<8x256xf32> to vector<8x8xf32>
    %78 = tpu.concatenate %76, %77 in 1 : vector<8x248xf32>, vector<8x8xf32> -> vector<8x256xf32>
    %79 = vector.extract_strided_slice %14 {offsets = [0, 9], sizes = [8, 247], strides = [1, 1]} : vector<8x256xf32> to vector<8x247xf32>
    %80 = vector.extract_strided_slice %14 {offsets = [0, 0], sizes = [8, 9], strides = [1, 1]} : vector<8x256xf32> to vector<8x9xf32>
    %81 = tpu.concatenate %79, %80 in 1 : vector<8x247xf32>, vector<8x9xf32> -> vector<8x256xf32>
    %82 = vector.extract_strided_slice %36 {offsets = [0, 7], sizes = [8, 249], strides = [1, 1]} : vector<8x256xf32> to vector<8x249xf32>
    %83 = vector.extract_strided_slice %36 {offsets = [0, 0], sizes = [8, 7], strides = [1, 1]} : vector<8x256xf32> to vector<8x7xf32>
    %84 = tpu.concatenate %82, %83 in 1 : vector<8x249xf32>, vector<8x7xf32> -> vector<8x256xf32>
    %85 = vector.extract_strided_slice %47 {offsets = [0, 7], sizes = [8, 249], strides = [1, 1]} : vector<8x256xf32> to vector<8x249xf32>
    %86 = vector.extract_strided_slice %47 {offsets = [0, 0], sizes = [8, 7], strides = [1, 1]} : vector<8x256xf32> to vector<8x7xf32>
    %87 = tpu.concatenate %85, %86 in 1 : vector<8x249xf32>, vector<8x7xf32> -> vector<8x256xf32>
    %88 = vector.extract_strided_slice %36 {offsets = [0, 8], sizes = [8, 248], strides = [1, 1]} : vector<8x256xf32> to vector<8x248xf32>
    %89 = vector.extract_strided_slice %36 {offsets = [0, 0], sizes = [8, 8], strides = [1, 1]} : vector<8x256xf32> to vector<8x8xf32>
    %90 = tpu.concatenate %88, %89 in 1 : vector<8x248xf32>, vector<8x8xf32> -> vector<8x256xf32>
    %91 = vector.extract_strided_slice %47 {offsets = [0, 8], sizes = [8, 248], strides = [1, 1]} : vector<8x256xf32> to vector<8x248xf32>
    %92 = vector.extract_strided_slice %47 {offsets = [0, 0], sizes = [8, 8], strides = [1, 1]} : vector<8x256xf32> to vector<8x8xf32>
    %93 = tpu.concatenate %91, %92 in 1 : vector<8x248xf32>, vector<8x8xf32> -> vector<8x256xf32>
    %94 = vector.extract_strided_slice %36 {offsets = [0, 9], sizes = [8, 247], strides = [1, 1]} : vector<8x256xf32> to vector<8x247xf32>
    %95 = vector.extract_strided_slice %36 {offsets = [0, 0], sizes = [8, 9], strides = [1, 1]} : vector<8x256xf32> to vector<8x9xf32>
    %96 = tpu.concatenate %94, %95 in 1 : vector<8x247xf32>, vector<8x9xf32> -> vector<8x256xf32>
    %97 = vector.extract_strided_slice %14 {offsets = [0, 14], sizes = [8, 242], strides = [1, 1]} : vector<8x256xf32> to vector<8x242xf32>
    %98 = vector.extract_strided_slice %14 {offsets = [0, 0], sizes = [8, 14], strides = [1, 1]} : vector<8x256xf32> to vector<8x14xf32>
    %99 = tpu.concatenate %97, %98 in 1 : vector<8x242xf32>, vector<8x14xf32> -> vector<8x256xf32>
    %100 = vector.extract_strided_slice %25 {offsets = [0, 14], sizes = [8, 242], strides = [1, 1]} : vector<8x256xf32> to vector<8x242xf32>
    %101 = vector.extract_strided_slice %25 {offsets = [0, 0], sizes = [8, 14], strides = [1, 1]} : vector<8x256xf32> to vector<8x14xf32>
    %102 = tpu.concatenate %100, %101 in 1 : vector<8x242xf32>, vector<8x14xf32> -> vector<8x256xf32>
    %103 = vector.extract_strided_slice %14 {offsets = [0, 15], sizes = [8, 241], strides = [1, 1]} : vector<8x256xf32> to vector<8x241xf32>
    %104 = vector.extract_strided_slice %14 {offsets = [0, 0], sizes = [8, 15], strides = [1, 1]} : vector<8x256xf32> to vector<8x15xf32>
    %105 = tpu.concatenate %103, %104 in 1 : vector<8x241xf32>, vector<8x15xf32> -> vector<8x256xf32>
    %106 = vector.extract_strided_slice %25 {offsets = [0, 15], sizes = [8, 241], strides = [1, 1]} : vector<8x256xf32> to vector<8x241xf32>
    %107 = vector.extract_strided_slice %25 {offsets = [0, 0], sizes = [8, 15], strides = [1, 1]} : vector<8x256xf32> to vector<8x15xf32>
    %108 = tpu.concatenate %106, %107 in 1 : vector<8x241xf32>, vector<8x15xf32> -> vector<8x256xf32>
    %109 = vector.extract_strided_slice %14 {offsets = [0, 16], sizes = [8, 240], strides = [1, 1]} : vector<8x256xf32> to vector<8x240xf32>
    %110 = vector.extract_strided_slice %14 {offsets = [0, 0], sizes = [8, 16], strides = [1, 1]} : vector<8x256xf32> to vector<8x16xf32>
    %111 = tpu.concatenate %109, %110 in 1 : vector<8x240xf32>, vector<8x16xf32> -> vector<8x256xf32>
    %112 = tpu.concatenate %14, %25, %51, %54, %57, %36, %47, %60, %63, %66, %69, %72, %75, %78, %81, %84 in 0 : vector<8x256xf32>, vector<8x256xf32>, vector<8x256xf32>, vector<8x256xf32>, vector<8x256xf32>, vector<8x256xf32>, vector<8x256xf32>, vector<8x256xf32>, vector<8x256xf32>, vector<8x256xf32>, vector<8x256xf32>, vector<8x256xf32>, vector<8x256xf32>, vector<8x256xf32>, vector<8x256xf32>, vector<8x256xf32> -> vector<128x256xf32>
    %113 = tpu.concatenate %87, %90, %93, %96, %99, %102, %105, %108, %111 in 0 : vector<8x256xf32>, vector<8x256xf32>, vector<8x256xf32>, vector<8x256xf32>, vector<8x256xf32>, vector<8x256xf32>, vector<8x256xf32>, vector<8x256xf32>, vector<8x256xf32> -> vector<72x256xf32>
    %114 = tpu.concatenate %112, %113 in 0 : vector<128x256xf32>, vector<72x256xf32> -> vector<200x256xf32>
    %115 = arith.truncf %114 : vector<200x256xf32> to vector<200x256xbf16>
    %cst_11 = arith.constant dense<0.000000e+00> : vector<16x256xf32>
    %116 = tpu.matmul %48, %115, %cst_11 {dimension_numbers = #tpu.dot_dimension_numbers<[1], [0], [0], [1], [0, 0, 1, 1], [], []>} : vector<16x200xbf16>, vector<200x256xbf16>, vector<16x256xf32> -> vector<16x256xf32>
    %117 = vector.extract_strided_slice %25 {offsets = [0, 2], sizes = [8, 254], strides = [1, 1]} : vector<8x256xf32> to vector<8x254xf32>
    %118 = vector.extract_strided_slice %25 {offsets = [0, 0], sizes = [8, 2], strides = [1, 1]} : vector<8x256xf32> to vector<8x2xf32>
    %119 = tpu.concatenate %117, %118 in 1 : vector<8x254xf32>, vector<8x2xf32> -> vector<8x256xf32>
    %120 = vector.extract_strided_slice %47 {offsets = [0, 2], sizes = [8, 254], strides = [1, 1]} : vector<8x256xf32> to vector<8x254xf32>
    %121 = vector.extract_strided_slice %47 {offsets = [0, 0], sizes = [8, 2], strides = [1, 1]} : vector<8x256xf32> to vector<8x2xf32>
    %122 = tpu.concatenate %120, %121 in 1 : vector<8x254xf32>, vector<8x2xf32> -> vector<8x256xf32>
    %123 = vector.extract_strided_slice %25 {offsets = [0, 9], sizes = [8, 247], strides = [1, 1]} : vector<8x256xf32> to vector<8x247xf32>
    %124 = vector.extract_strided_slice %25 {offsets = [0, 0], sizes = [8, 9], strides = [1, 1]} : vector<8x256xf32> to vector<8x9xf32>
    %125 = tpu.concatenate %123, %124 in 1 : vector<8x247xf32>, vector<8x9xf32> -> vector<8x256xf32>
    %126 = vector.extract_strided_slice %47 {offsets = [0, 9], sizes = [8, 247], strides = [1, 1]} : vector<8x256xf32> to vector<8x247xf32>
    %127 = vector.extract_strided_slice %47 {offsets = [0, 0], sizes = [8, 9], strides = [1, 1]} : vector<8x256xf32> to vector<8x9xf32>
    %128 = tpu.concatenate %126, %127 in 1 : vector<8x247xf32>, vector<8x9xf32> -> vector<8x256xf32>
    %129 = vector.extract_strided_slice %25 {offsets = [0, 16], sizes = [8, 240], strides = [1, 1]} : vector<8x256xf32> to vector<8x240xf32>
    %130 = vector.extract_strided_slice %25 {offsets = [0, 0], sizes = [8, 16], strides = [1, 1]} : vector<8x256xf32> to vector<8x16xf32>
    %131 = tpu.concatenate %129, %130 in 1 : vector<8x240xf32>, vector<8x16xf32> -> vector<8x256xf32>
    %132 = tpu.concatenate %25, %51, %54, %57, %119, %47, %60, %63, %66, %122, %72, %75, %78, %81, %125, %87 in 0 : vector<8x256xf32>, vector<8x256xf32>, vector<8x256xf32>, vector<8x256xf32>, vector<8x256xf32>, vector<8x256xf32>, vector<8x256xf32>, vector<8x256xf32>, vector<8x256xf32>, vector<8x256xf32>, vector<8x256xf32>, vector<8x256xf32>, vector<8x256xf32>, vector<8x256xf32>, vector<8x256xf32>, vector<8x256xf32> -> vector<128x256xf32>
    %133 = tpu.concatenate %90, %93, %96, %128, %102, %105, %108, %111, %131 in 0 : vector<8x256xf32>, vector<8x256xf32>, vector<8x256xf32>, vector<8x256xf32>, vector<8x256xf32>, vector<8x256xf32>, vector<8x256xf32>, vector<8x256xf32>, vector<8x256xf32> -> vector<72x256xf32>
    %134 = tpu.concatenate %132, %133 in 0 : vector<128x256xf32>, vector<72x256xf32> -> vector<200x256xf32>
    %135 = arith.truncf %134 : vector<200x256xf32> to vector<200x256xbf16>
    %cst_12 = arith.constant dense<0.000000e+00> : vector<16x256xf32>
    %136 = tpu.matmul %48, %135, %cst_12 {dimension_numbers = #tpu.dot_dimension_numbers<[1], [0], [0], [1], [0, 0, 1, 1], [], []>} : vector<16x200xbf16>, vector<200x256xbf16>, vector<16x256xf32> -> vector<16x256xf32>
    %137 = arith.maximumf %116, %136 : vector<16x256xf32>
    %138 = vector.extract_strided_slice %36 {offsets = [0, 14], sizes = [8, 242], strides = [1, 1]} : vector<8x256xf32> to vector<8x242xf32>
    %139 = vector.extract_strided_slice %36 {offsets = [0, 0], sizes = [8, 14], strides = [1, 1]} : vector<8x256xf32> to vector<8x14xf32>
    %140 = tpu.concatenate %138, %139 in 1 : vector<8x242xf32>, vector<8x14xf32> -> vector<8x256xf32>
    %141 = vector.extract_strided_slice %47 {offsets = [0, 14], sizes = [8, 242], strides = [1, 1]} : vector<8x256xf32> to vector<8x242xf32>
    %142 = vector.extract_strided_slice %47 {offsets = [0, 0], sizes = [8, 14], strides = [1, 1]} : vector<8x256xf32> to vector<8x14xf32>
    %143 = tpu.concatenate %141, %142 in 1 : vector<8x242xf32>, vector<8x14xf32> -> vector<8x256xf32>
    %144 = vector.extract_strided_slice %36 {offsets = [0, 15], sizes = [8, 241], strides = [1, 1]} : vector<8x256xf32> to vector<8x241xf32>
    %145 = vector.extract_strided_slice %36 {offsets = [0, 0], sizes = [8, 15], strides = [1, 1]} : vector<8x256xf32> to vector<8x15xf32>
    %146 = tpu.concatenate %144, %145 in 1 : vector<8x241xf32>, vector<8x15xf32> -> vector<8x256xf32>
    %147 = vector.extract_strided_slice %47 {offsets = [0, 15], sizes = [8, 241], strides = [1, 1]} : vector<8x256xf32> to vector<8x241xf32>
    %148 = vector.extract_strided_slice %47 {offsets = [0, 0], sizes = [8, 15], strides = [1, 1]} : vector<8x256xf32> to vector<8x15xf32>
    %149 = tpu.concatenate %147, %148 in 1 : vector<8x241xf32>, vector<8x15xf32> -> vector<8x256xf32>
    %150 = vector.extract_strided_slice %36 {offsets = [0, 16], sizes = [8, 240], strides = [1, 1]} : vector<8x256xf32> to vector<8x240xf32>
    %151 = vector.extract_strided_slice %36 {offsets = [0, 0], sizes = [8, 16], strides = [1, 1]} : vector<8x256xf32> to vector<8x16xf32>
    %152 = tpu.concatenate %150, %151 in 1 : vector<8x240xf32>, vector<8x16xf32> -> vector<8x256xf32>
    %153 = tpu.concatenate %36, %47, %60, %63, %66, %69, %72, %75, %78, %81, %84, %87, %90, %93, %96, %99 in 0 : vector<8x256xf32>, vector<8x256xf32>, vector<8x256xf32>, vector<8x256xf32>, vector<8x256xf32>, vector<8x256xf32>, vector<8x256xf32>, vector<8x256xf32>, vector<8x256xf32>, vector<8x256xf32>, vector<8x256xf32>, vector<8x256xf32>, vector<8x256xf32>, vector<8x256xf32>, vector<8x256xf32>, vector<8x256xf32> -> vector<128x256xf32>
    %154 = tpu.concatenate %102, %105, %108, %111, %140, %143, %146, %149, %152 in 0 : vector<8x256xf32>, vector<8x256xf32>, vector<8x256xf32>, vector<8x256xf32>, vector<8x256xf32>, vector<8x256xf32>, vector<8x256xf32>, vector<8x256xf32>, vector<8x256xf32> -> vector<72x256xf32>
    %155 = tpu.concatenate %153, %154 in 0 : vector<128x256xf32>, vector<72x256xf32> -> vector<200x256xf32>
    %156 = arith.truncf %155 : vector<200x256xf32> to vector<200x256xbf16>
    %cst_13 = arith.constant dense<0.000000e+00> : vector<16x256xf32>
    %157 = tpu.matmul %48, %156, %cst_13 {dimension_numbers = #tpu.dot_dimension_numbers<[1], [0], [0], [1], [0, 0, 1, 1], [], []>} : vector<16x200xbf16>, vector<200x256xbf16>, vector<16x256xf32> -> vector<16x256xf32>
    %158 = arith.maximumf %137, %157 : vector<16x256xf32>
    %159 = vector.extract_strided_slice %47 {offsets = [0, 16], sizes = [8, 240], strides = [1, 1]} : vector<8x256xf32> to vector<8x240xf32>
    %160 = vector.extract_strided_slice %47 {offsets = [0, 0], sizes = [8, 16], strides = [1, 1]} : vector<8x256xf32> to vector<8x16xf32>
    %161 = tpu.concatenate %159, %160 in 1 : vector<8x240xf32>, vector<8x16xf32> -> vector<8x256xf32>
    %162 = tpu.concatenate %47, %60, %63, %66, %122, %72, %75, %78, %81, %125, %87, %90, %93, %96, %128, %102 in 0 : vector<8x256xf32>, vector<8x256xf32>, vector<8x256xf32>, vector<8x256xf32>, vector<8x256xf32>, vector<8x256xf32>, vector<8x256xf32>, vector<8x256xf32>, vector<8x256xf32>, vector<8x256xf32>, vector<8x256xf32>, vector<8x256xf32>, vector<8x256xf32>, vector<8x256xf32>, vector<8x256xf32>, vector<8x256xf32> -> vector<128x256xf32>
    %163 = tpu.concatenate %105, %108, %111, %131, %143, %146, %149, %152, %161 in 0 : vector<8x256xf32>, vector<8x256xf32>, vector<8x256xf32>, vector<8x256xf32>, vector<8x256xf32>, vector<8x256xf32>, vector<8x256xf32>, vector<8x256xf32>, vector<8x256xf32> -> vector<72x256xf32>
    %164 = tpu.concatenate %162, %163 in 0 : vector<128x256xf32>, vector<72x256xf32> -> vector<200x256xf32>
    %165 = arith.truncf %164 : vector<200x256xf32> to vector<200x256xbf16>
    %cst_14 = arith.constant dense<0.000000e+00> : vector<16x256xf32>
    %166 = tpu.matmul %48, %165, %cst_14 {dimension_numbers = #tpu.dot_dimension_numbers<[1], [0], [0], [1], [0, 0, 1, 1], [], []>} : vector<16x200xbf16>, vector<200x256xbf16>, vector<16x256xf32> -> vector<16x256xf32>
    %167 = arith.maximumf %158, %166 : vector<16x256xf32>
    %c0_15 = arith.constant 0 : index
    %c0_16 = arith.constant 0 : index
    %168 = vector.load %arg4[%c0_15, %c0_16] : memref<16x1xf32, #tpu.memory_space<vmem>>, vector<16x1xf32>
    %169 = vector.broadcast %168 : vector<16x1xf32> to vector<16x256xf32>
    %170 = arith.addf %167, %169 : vector<16x256xf32>
    %cst_17 = arith.constant 0.000000e+00 : f32
    %171 = vector.broadcast %cst_17 : f32 to vector<16x256xf32>
    %172 = arith.maximumf %170, %171 : vector<16x256xf32>
    %173 = vector.extract_strided_slice %172 {offsets = [0, 0], sizes = [1, 128], strides = [1, 1]} : vector<16x256xf32> to vector<1x128xf32>
    %174 = vector.extract_strided_slice %172 {offsets = [0, 128], sizes = [1, 128], strides = [1, 1]} : vector<16x256xf32> to vector<1x128xf32>
    %175 = tpu.concatenate %173, %174 in 0 : vector<1x128xf32>, vector<1x128xf32> -> vector<2x128xf32>
    %176 = arith.truncf %175 : vector<2x128xf32> to vector<2x128xbf16>
    %c0_18 = arith.constant 0 : index
    %c0_19 = arith.constant 0 : index
    %c0_20 = arith.constant 0 : index
    %177 = vector.load %arg5[%c0_18, %c0_19, %c0_20] : memref<16x128x128xbf16, #tpu.memory_space<vmem>>, vector<1x128x128xbf16>
    %178 = vector.shape_cast %177 : vector<1x128x128xbf16> to vector<128x128xbf16>
    %cst_21 = arith.constant dense<0.000000e+00> : vector<2x128xf32>
    %179 = tpu.matmul %176, %178, %cst_21 {dimension_numbers = #tpu.dot_dimension_numbers<[1], [0], [0], [1], [0, 0, 1, 1], [], []>} : vector<2x128xbf16>, vector<128x128xbf16>, vector<2x128xf32> -> vector<2x128xf32>
    %180 = vector.extract_strided_slice %172 {offsets = [1, 0], sizes = [1, 128], strides = [1, 1]} : vector<16x256xf32> to vector<1x128xf32>
    %181 = vector.extract_strided_slice %172 {offsets = [1, 128], sizes = [1, 128], strides = [1, 1]} : vector<16x256xf32> to vector<1x128xf32>
    %182 = tpu.concatenate %180, %181 in 0 : vector<1x128xf32>, vector<1x128xf32> -> vector<2x128xf32>
    %183 = arith.truncf %182 : vector<2x128xf32> to vector<2x128xbf16>
    %c1 = arith.constant 1 : index
    %c0_22 = arith.constant 0 : index
    %c0_23 = arith.constant 0 : index
    %184 = vector.load %arg5[%c1, %c0_22, %c0_23] : memref<16x128x128xbf16, #tpu.memory_space<vmem>>, vector<1x128x128xbf16>
    %185 = vector.shape_cast %184 : vector<1x128x128xbf16> to vector<128x128xbf16>
    %cst_24 = arith.constant dense<0.000000e+00> : vector<2x128xf32>
    %186 = tpu.matmul %183, %185, %cst_24 {dimension_numbers = #tpu.dot_dimension_numbers<[1], [0], [0], [1], [0, 0, 1, 1], [], []>} : vector<2x128xbf16>, vector<128x128xbf16>, vector<2x128xf32> -> vector<2x128xf32>
    %187 = arith.addf %179, %186 : vector<2x128xf32>
    %188 = vector.extract_strided_slice %172 {offsets = [2, 0], sizes = [1, 128], strides = [1, 1]} : vector<16x256xf32> to vector<1x128xf32>
    %189 = vector.extract_strided_slice %172 {offsets = [2, 128], sizes = [1, 128], strides = [1, 1]} : vector<16x256xf32> to vector<1x128xf32>
    %190 = tpu.concatenate %188, %189 in 0 : vector<1x128xf32>, vector<1x128xf32> -> vector<2x128xf32>
    %191 = arith.truncf %190 : vector<2x128xf32> to vector<2x128xbf16>
    %c2 = arith.constant 2 : index
    %c0_25 = arith.constant 0 : index
    %c0_26 = arith.constant 0 : index
    %192 = vector.load %arg5[%c2, %c0_25, %c0_26] : memref<16x128x128xbf16, #tpu.memory_space<vmem>>, vector<1x128x128xbf16>
    %193 = vector.shape_cast %192 : vector<1x128x128xbf16> to vector<128x128xbf16>
    %cst_27 = arith.constant dense<0.000000e+00> : vector<2x128xf32>
    %194 = tpu.matmul %191, %193, %cst_27 {dimension_numbers = #tpu.dot_dimension_numbers<[1], [0], [0], [1], [0, 0, 1, 1], [], []>} : vector<2x128xbf16>, vector<128x128xbf16>, vector<2x128xf32> -> vector<2x128xf32>
    %195 = arith.addf %187, %194 : vector<2x128xf32>
    %196 = vector.extract_strided_slice %172 {offsets = [3, 0], sizes = [1, 128], strides = [1, 1]} : vector<16x256xf32> to vector<1x128xf32>
    %197 = vector.extract_strided_slice %172 {offsets = [3, 128], sizes = [1, 128], strides = [1, 1]} : vector<16x256xf32> to vector<1x128xf32>
    %198 = tpu.concatenate %196, %197 in 0 : vector<1x128xf32>, vector<1x128xf32> -> vector<2x128xf32>
    %199 = arith.truncf %198 : vector<2x128xf32> to vector<2x128xbf16>
    %c3 = arith.constant 3 : index
    %c0_28 = arith.constant 0 : index
    %c0_29 = arith.constant 0 : index
    %200 = vector.load %arg5[%c3, %c0_28, %c0_29] : memref<16x128x128xbf16, #tpu.memory_space<vmem>>, vector<1x128x128xbf16>
    %201 = vector.shape_cast %200 : vector<1x128x128xbf16> to vector<128x128xbf16>
    %cst_30 = arith.constant dense<0.000000e+00> : vector<2x128xf32>
    %202 = tpu.matmul %199, %201, %cst_30 {dimension_numbers = #tpu.dot_dimension_numbers<[1], [0], [0], [1], [0, 0, 1, 1], [], []>} : vector<2x128xbf16>, vector<128x128xbf16>, vector<2x128xf32> -> vector<2x128xf32>
    %203 = arith.addf %195, %202 : vector<2x128xf32>
    %204 = vector.extract_strided_slice %172 {offsets = [4, 0], sizes = [1, 128], strides = [1, 1]} : vector<16x256xf32> to vector<1x128xf32>
    %205 = vector.extract_strided_slice %172 {offsets = [4, 128], sizes = [1, 128], strides = [1, 1]} : vector<16x256xf32> to vector<1x128xf32>
    %206 = tpu.concatenate %204, %205 in 0 : vector<1x128xf32>, vector<1x128xf32> -> vector<2x128xf32>
    %207 = arith.truncf %206 : vector<2x128xf32> to vector<2x128xbf16>
    %c4 = arith.constant 4 : index
    %c0_31 = arith.constant 0 : index
    %c0_32 = arith.constant 0 : index
    %208 = vector.load %arg5[%c4, %c0_31, %c0_32] : memref<16x128x128xbf16, #tpu.memory_space<vmem>>, vector<1x128x128xbf16>
    %209 = vector.shape_cast %208 : vector<1x128x128xbf16> to vector<128x128xbf16>
    %cst_33 = arith.constant dense<0.000000e+00> : vector<2x128xf32>
    %210 = tpu.matmul %207, %209, %cst_33 {dimension_numbers = #tpu.dot_dimension_numbers<[1], [0], [0], [1], [0, 0, 1, 1], [], []>} : vector<2x128xbf16>, vector<128x128xbf16>, vector<2x128xf32> -> vector<2x128xf32>
    %211 = arith.addf %203, %210 : vector<2x128xf32>
    %212 = vector.extract_strided_slice %172 {offsets = [5, 0], sizes = [1, 128], strides = [1, 1]} : vector<16x256xf32> to vector<1x128xf32>
    %213 = vector.extract_strided_slice %172 {offsets = [5, 128], sizes = [1, 128], strides = [1, 1]} : vector<16x256xf32> to vector<1x128xf32>
    %214 = tpu.concatenate %212, %213 in 0 : vector<1x128xf32>, vector<1x128xf32> -> vector<2x128xf32>
    %215 = arith.truncf %214 : vector<2x128xf32> to vector<2x128xbf16>
    %c5 = arith.constant 5 : index
    %c0_34 = arith.constant 0 : index
    %c0_35 = arith.constant 0 : index
    %216 = vector.load %arg5[%c5, %c0_34, %c0_35] : memref<16x128x128xbf16, #tpu.memory_space<vmem>>, vector<1x128x128xbf16>
    %217 = vector.shape_cast %216 : vector<1x128x128xbf16> to vector<128x128xbf16>
    %cst_36 = arith.constant dense<0.000000e+00> : vector<2x128xf32>
    %218 = tpu.matmul %215, %217, %cst_36 {dimension_numbers = #tpu.dot_dimension_numbers<[1], [0], [0], [1], [0, 0, 1, 1], [], []>} : vector<2x128xbf16>, vector<128x128xbf16>, vector<2x128xf32> -> vector<2x128xf32>
    %219 = arith.addf %211, %218 : vector<2x128xf32>
    %220 = vector.extract_strided_slice %172 {offsets = [6, 0], sizes = [1, 128], strides = [1, 1]} : vector<16x256xf32> to vector<1x128xf32>
    %221 = vector.extract_strided_slice %172 {offsets = [6, 128], sizes = [1, 128], strides = [1, 1]} : vector<16x256xf32> to vector<1x128xf32>
    %222 = tpu.concatenate %220, %221 in 0 : vector<1x128xf32>, vector<1x128xf32> -> vector<2x128xf32>
    %223 = arith.truncf %222 : vector<2x128xf32> to vector<2x128xbf16>
    %c6 = arith.constant 6 : index
    %c0_37 = arith.constant 0 : index
    %c0_38 = arith.constant 0 : index
    %224 = vector.load %arg5[%c6, %c0_37, %c0_38] : memref<16x128x128xbf16, #tpu.memory_space<vmem>>, vector<1x128x128xbf16>
    %225 = vector.shape_cast %224 : vector<1x128x128xbf16> to vector<128x128xbf16>
    %cst_39 = arith.constant dense<0.000000e+00> : vector<2x128xf32>
    %226 = tpu.matmul %223, %225, %cst_39 {dimension_numbers = #tpu.dot_dimension_numbers<[1], [0], [0], [1], [0, 0, 1, 1], [], []>} : vector<2x128xbf16>, vector<128x128xbf16>, vector<2x128xf32> -> vector<2x128xf32>
    %227 = arith.addf %219, %226 : vector<2x128xf32>
    %228 = vector.extract_strided_slice %172 {offsets = [7, 0], sizes = [1, 128], strides = [1, 1]} : vector<16x256xf32> to vector<1x128xf32>
    %229 = vector.extract_strided_slice %172 {offsets = [7, 128], sizes = [1, 128], strides = [1, 1]} : vector<16x256xf32> to vector<1x128xf32>
    %230 = tpu.concatenate %228, %229 in 0 : vector<1x128xf32>, vector<1x128xf32> -> vector<2x128xf32>
    %231 = arith.truncf %230 : vector<2x128xf32> to vector<2x128xbf16>
    %c7 = arith.constant 7 : index
    %c0_40 = arith.constant 0 : index
    %c0_41 = arith.constant 0 : index
    %232 = vector.load %arg5[%c7, %c0_40, %c0_41] : memref<16x128x128xbf16, #tpu.memory_space<vmem>>, vector<1x128x128xbf16>
    %233 = vector.shape_cast %232 : vector<1x128x128xbf16> to vector<128x128xbf16>
    %cst_42 = arith.constant dense<0.000000e+00> : vector<2x128xf32>
    %234 = tpu.matmul %231, %233, %cst_42 {dimension_numbers = #tpu.dot_dimension_numbers<[1], [0], [0], [1], [0, 0, 1, 1], [], []>} : vector<2x128xbf16>, vector<128x128xbf16>, vector<2x128xf32> -> vector<2x128xf32>
    %235 = arith.addf %227, %234 : vector<2x128xf32>
    %236 = vector.extract_strided_slice %172 {offsets = [8, 0], sizes = [1, 128], strides = [1, 1]} : vector<16x256xf32> to vector<1x128xf32>
    %237 = vector.extract_strided_slice %172 {offsets = [8, 128], sizes = [1, 128], strides = [1, 1]} : vector<16x256xf32> to vector<1x128xf32>
    %238 = tpu.concatenate %236, %237 in 0 : vector<1x128xf32>, vector<1x128xf32> -> vector<2x128xf32>
    %239 = arith.truncf %238 : vector<2x128xf32> to vector<2x128xbf16>
    %c8 = arith.constant 8 : index
    %c0_43 = arith.constant 0 : index
    %c0_44 = arith.constant 0 : index
    %240 = vector.load %arg5[%c8, %c0_43, %c0_44] : memref<16x128x128xbf16, #tpu.memory_space<vmem>>, vector<1x128x128xbf16>
    %241 = vector.shape_cast %240 : vector<1x128x128xbf16> to vector<128x128xbf16>
    %cst_45 = arith.constant dense<0.000000e+00> : vector<2x128xf32>
    %242 = tpu.matmul %239, %241, %cst_45 {dimension_numbers = #tpu.dot_dimension_numbers<[1], [0], [0], [1], [0, 0, 1, 1], [], []>} : vector<2x128xbf16>, vector<128x128xbf16>, vector<2x128xf32> -> vector<2x128xf32>
    %243 = arith.addf %235, %242 : vector<2x128xf32>
    %244 = vector.extract_strided_slice %172 {offsets = [9, 0], sizes = [1, 128], strides = [1, 1]} : vector<16x256xf32> to vector<1x128xf32>
    %245 = vector.extract_strided_slice %172 {offsets = [9, 128], sizes = [1, 128], strides = [1, 1]} : vector<16x256xf32> to vector<1x128xf32>
    %246 = tpu.concatenate %244, %245 in 0 : vector<1x128xf32>, vector<1x128xf32> -> vector<2x128xf32>
    %247 = arith.truncf %246 : vector<2x128xf32> to vector<2x128xbf16>
    %c9 = arith.constant 9 : index
    %c0_46 = arith.constant 0 : index
    %c0_47 = arith.constant 0 : index
    %248 = vector.load %arg5[%c9, %c0_46, %c0_47] : memref<16x128x128xbf16, #tpu.memory_space<vmem>>, vector<1x128x128xbf16>
    %249 = vector.shape_cast %248 : vector<1x128x128xbf16> to vector<128x128xbf16>
    %cst_48 = arith.constant dense<0.000000e+00> : vector<2x128xf32>
    %250 = tpu.matmul %247, %249, %cst_48 {dimension_numbers = #tpu.dot_dimension_numbers<[1], [0], [0], [1], [0, 0, 1, 1], [], []>} : vector<2x128xbf16>, vector<128x128xbf16>, vector<2x128xf32> -> vector<2x128xf32>
    %251 = arith.addf %243, %250 : vector<2x128xf32>
    %252 = vector.extract_strided_slice %172 {offsets = [10, 0], sizes = [1, 128], strides = [1, 1]} : vector<16x256xf32> to vector<1x128xf32>
    %253 = vector.extract_strided_slice %172 {offsets = [10, 128], sizes = [1, 128], strides = [1, 1]} : vector<16x256xf32> to vector<1x128xf32>
    %254 = tpu.concatenate %252, %253 in 0 : vector<1x128xf32>, vector<1x128xf32> -> vector<2x128xf32>
    %255 = arith.truncf %254 : vector<2x128xf32> to vector<2x128xbf16>
    %c10 = arith.constant 10 : index
    %c0_49 = arith.constant 0 : index
    %c0_50 = arith.constant 0 : index
    %256 = vector.load %arg5[%c10, %c0_49, %c0_50] : memref<16x128x128xbf16, #tpu.memory_space<vmem>>, vector<1x128x128xbf16>
    %257 = vector.shape_cast %256 : vector<1x128x128xbf16> to vector<128x128xbf16>
    %cst_51 = arith.constant dense<0.000000e+00> : vector<2x128xf32>
    %258 = tpu.matmul %255, %257, %cst_51 {dimension_numbers = #tpu.dot_dimension_numbers<[1], [0], [0], [1], [0, 0, 1, 1], [], []>} : vector<2x128xbf16>, vector<128x128xbf16>, vector<2x128xf32> -> vector<2x128xf32>
    %259 = arith.addf %251, %258 : vector<2x128xf32>
    %260 = vector.extract_strided_slice %172 {offsets = [11, 0], sizes = [1, 128], strides = [1, 1]} : vector<16x256xf32> to vector<1x128xf32>
    %261 = vector.extract_strided_slice %172 {offsets = [11, 128], sizes = [1, 128], strides = [1, 1]} : vector<16x256xf32> to vector<1x128xf32>
    %262 = tpu.concatenate %260, %261 in 0 : vector<1x128xf32>, vector<1x128xf32> -> vector<2x128xf32>
    %263 = arith.truncf %262 : vector<2x128xf32> to vector<2x128xbf16>
    %c11 = arith.constant 11 : index
    %c0_52 = arith.constant 0 : index
    %c0_53 = arith.constant 0 : index
    %264 = vector.load %arg5[%c11, %c0_52, %c0_53] : memref<16x128x128xbf16, #tpu.memory_space<vmem>>, vector<1x128x128xbf16>
    %265 = vector.shape_cast %264 : vector<1x128x128xbf16> to vector<128x128xbf16>
    %cst_54 = arith.constant dense<0.000000e+00> : vector<2x128xf32>
    %266 = tpu.matmul %263, %265, %cst_54 {dimension_numbers = #tpu.dot_dimension_numbers<[1], [0], [0], [1], [0, 0, 1, 1], [], []>} : vector<2x128xbf16>, vector<128x128xbf16>, vector<2x128xf32> -> vector<2x128xf32>
    %267 = arith.addf %259, %266 : vector<2x128xf32>
    %268 = vector.extract_strided_slice %172 {offsets = [12, 0], sizes = [1, 128], strides = [1, 1]} : vector<16x256xf32> to vector<1x128xf32>
    %269 = vector.extract_strided_slice %172 {offsets = [12, 128], sizes = [1, 128], strides = [1, 1]} : vector<16x256xf32> to vector<1x128xf32>
    %270 = tpu.concatenate %268, %269 in 0 : vector<1x128xf32>, vector<1x128xf32> -> vector<2x128xf32>
    %271 = arith.truncf %270 : vector<2x128xf32> to vector<2x128xbf16>
    %c12 = arith.constant 12 : index
    %c0_55 = arith.constant 0 : index
    %c0_56 = arith.constant 0 : index
    %272 = vector.load %arg5[%c12, %c0_55, %c0_56] : memref<16x128x128xbf16, #tpu.memory_space<vmem>>, vector<1x128x128xbf16>
    %273 = vector.shape_cast %272 : vector<1x128x128xbf16> to vector<128x128xbf16>
    %cst_57 = arith.constant dense<0.000000e+00> : vector<2x128xf32>
    %274 = tpu.matmul %271, %273, %cst_57 {dimension_numbers = #tpu.dot_dimension_numbers<[1], [0], [0], [1], [0, 0, 1, 1], [], []>} : vector<2x128xbf16>, vector<128x128xbf16>, vector<2x128xf32> -> vector<2x128xf32>
    %275 = arith.addf %267, %274 : vector<2x128xf32>
    %276 = vector.extract_strided_slice %172 {offsets = [13, 0], sizes = [1, 128], strides = [1, 1]} : vector<16x256xf32> to vector<1x128xf32>
    %277 = vector.extract_strided_slice %172 {offsets = [13, 128], sizes = [1, 128], strides = [1, 1]} : vector<16x256xf32> to vector<1x128xf32>
    %278 = tpu.concatenate %276, %277 in 0 : vector<1x128xf32>, vector<1x128xf32> -> vector<2x128xf32>
    %279 = arith.truncf %278 : vector<2x128xf32> to vector<2x128xbf16>
    %c13 = arith.constant 13 : index
    %c0_58 = arith.constant 0 : index
    %c0_59 = arith.constant 0 : index
    %280 = vector.load %arg5[%c13, %c0_58, %c0_59] : memref<16x128x128xbf16, #tpu.memory_space<vmem>>, vector<1x128x128xbf16>
    %281 = vector.shape_cast %280 : vector<1x128x128xbf16> to vector<128x128xbf16>
    %cst_60 = arith.constant dense<0.000000e+00> : vector<2x128xf32>
    %282 = tpu.matmul %279, %281, %cst_60 {dimension_numbers = #tpu.dot_dimension_numbers<[1], [0], [0], [1], [0, 0, 1, 1], [], []>} : vector<2x128xbf16>, vector<128x128xbf16>, vector<2x128xf32> -> vector<2x128xf32>
    %283 = arith.addf %275, %282 : vector<2x128xf32>
    %284 = vector.extract_strided_slice %172 {offsets = [14, 0], sizes = [1, 128], strides = [1, 1]} : vector<16x256xf32> to vector<1x128xf32>
    %285 = vector.extract_strided_slice %172 {offsets = [14, 128], sizes = [1, 128], strides = [1, 1]} : vector<16x256xf32> to vector<1x128xf32>
    %286 = tpu.concatenate %284, %285 in 0 : vector<1x128xf32>, vector<1x128xf32> -> vector<2x128xf32>
    %287 = arith.truncf %286 : vector<2x128xf32> to vector<2x128xbf16>
    %c14 = arith.constant 14 : index
    %c0_61 = arith.constant 0 : index
    %c0_62 = arith.constant 0 : index
    %288 = vector.load %arg5[%c14, %c0_61, %c0_62] : memref<16x128x128xbf16, #tpu.memory_space<vmem>>, vector<1x128x128xbf16>
    %289 = vector.shape_cast %288 : vector<1x128x128xbf16> to vector<128x128xbf16>
    %cst_63 = arith.constant dense<0.000000e+00> : vector<2x128xf32>
    %290 = tpu.matmul %287, %289, %cst_63 {dimension_numbers = #tpu.dot_dimension_numbers<[1], [0], [0], [1], [0, 0, 1, 1], [], []>} : vector<2x128xbf16>, vector<128x128xbf16>, vector<2x128xf32> -> vector<2x128xf32>
    %291 = arith.addf %283, %290 : vector<2x128xf32>
    %292 = vector.extract_strided_slice %172 {offsets = [15, 0], sizes = [1, 128], strides = [1, 1]} : vector<16x256xf32> to vector<1x128xf32>
    %293 = vector.extract_strided_slice %172 {offsets = [15, 128], sizes = [1, 128], strides = [1, 1]} : vector<16x256xf32> to vector<1x128xf32>
    %294 = tpu.concatenate %292, %293 in 0 : vector<1x128xf32>, vector<1x128xf32> -> vector<2x128xf32>
    %295 = arith.truncf %294 : vector<2x128xf32> to vector<2x128xbf16>
    %c15 = arith.constant 15 : index
    %c0_64 = arith.constant 0 : index
    %c0_65 = arith.constant 0 : index
    %296 = vector.load %arg5[%c15, %c0_64, %c0_65] : memref<16x128x128xbf16, #tpu.memory_space<vmem>>, vector<1x128x128xbf16>
    %297 = vector.shape_cast %296 : vector<1x128x128xbf16> to vector<128x128xbf16>
    %cst_66 = arith.constant dense<0.000000e+00> : vector<2x128xf32>
    %298 = tpu.matmul %295, %297, %cst_66 {dimension_numbers = #tpu.dot_dimension_numbers<[1], [0], [0], [1], [0, 0, 1, 1], [], []>} : vector<2x128xbf16>, vector<128x128xbf16>, vector<2x128xf32> -> vector<2x128xf32>
    %299 = arith.addf %291, %298 : vector<2x128xf32>
    %c0_67 = arith.constant 0 : index
    %c0_68 = arith.constant 0 : index
    %300 = vector.load %arg6[%c0_67, %c0_68] : memref<1x128xf32, #tpu.memory_space<vmem>>, vector<1x128xf32>
    %301 = vector.broadcast %300 : vector<1x128xf32> to vector<2x128xf32>
    %302 = arith.addf %299, %301 : vector<2x128xf32>
    %cst_69 = arith.constant 0.000000e+00 : f32
    %303 = vector.broadcast %cst_69 : f32 to vector<2x128xf32>
    %304 = arith.maximumf %302, %303 : vector<2x128xf32>
    %305 = arith.truncf %304 : vector<2x128xf32> to vector<2x128xbf16>
    %c0_70 = arith.constant 0 : index
    %c0_71 = arith.constant 0 : index
    %306 = vector.load %arg7[%c0_70, %c0_71] : memref<128x128xbf16, #tpu.memory_space<vmem>>, vector<128x128xbf16>
    %cst_72 = arith.constant dense<0.000000e+00> : vector<2x128xf32>
    %307 = tpu.matmul %305, %306, %cst_72 {dimension_numbers = #tpu.dot_dimension_numbers<[1], [0], [0], [1], [0, 0, 1, 1], [], []>} : vector<2x128xbf16>, vector<128x128xbf16>, vector<2x128xf32> -> vector<2x128xf32>
    %c0_73 = arith.constant 0 : index
    %c0_74 = arith.constant 0 : index
    %308 = vector.load %arg8[%c0_73, %c0_74] : memref<1x128xf32, #tpu.memory_space<vmem>>, vector<1x128xf32>
    %309 = vector.broadcast %308 : vector<1x128xf32> to vector<2x128xf32>
    %310 = arith.addf %307, %309 : vector<2x128xf32>
    %cst_75 = arith.constant 0.000000e+00 : f32
    %311 = vector.broadcast %cst_75 : f32 to vector<2x128xf32>
    %312 = arith.maximumf %310, %311 : vector<2x128xf32>
    %313 = arith.truncf %312 : vector<2x128xf32> to vector<2x128xbf16>
    %c0_76 = arith.constant 0 : index
    %c0_77 = arith.constant 0 : index
    %314 = vector.load %arg9[%c0_76, %c0_77] : memref<128x128xbf16, #tpu.memory_space<vmem>>, vector<128x128xbf16>
    %cst_78 = arith.constant dense<0.000000e+00> : vector<2x128xf32>
    %315 = tpu.matmul %313, %314, %cst_78 {dimension_numbers = #tpu.dot_dimension_numbers<[1], [0], [0], [1], [0, 0, 1, 1], [], []>} : vector<2x128xbf16>, vector<128x128xbf16>, vector<2x128xf32> -> vector<2x128xf32>
    %c0_79 = arith.constant 0 : index
    %c0_80 = arith.constant 0 : index
    %316 = vector.load %arg10[%c0_79, %c0_80] : memref<1x128xf32, #tpu.memory_space<vmem>>, vector<1x128xf32>
    %317 = vector.broadcast %316 : vector<1x128xf32> to vector<2x128xf32>
    %318 = arith.addf %315, %317 : vector<2x128xf32>
    %319 = tpu.iota {dimensions = array<i32: 1>} : vector<2x128xi32>
    %c10_i32 = arith.constant 10 : i32
    %320 = vector.broadcast %c10_i32 : i32 to vector<2x128xi32>
    %321 = arith.cmpi slt, %319, %320 : vector<2x128xi32>
    %cst_81 = arith.constant -1.000000e+30 : f32
    %322 = vector.broadcast %cst_81 : f32 to vector<2x128xf32>
    %323 = arith.select %321, %318, %322 : vector<2x128xi1>, vector<2x128xf32>
    %cst_82 = arith.constant dense<0xFF800000> : vector<2xf32>
    %324 = vector.multi_reduction <maximumf>, %323, %cst_82 [1] : vector<2x128xf32> to vector<2xf32>
    %325 = vector.shape_cast %324 : vector<2xf32> to vector<2x1xf32>
    %326 = vector.broadcast %325 : vector<2x1xf32> to vector<2x128xf32>
    %327 = arith.subf %323, %326 : vector<2x128xf32>
    %328 = math.exp %327 : vector<2x128xf32>
    %cst_83 = arith.constant dense<0.000000e+00> : vector<2xf32>
    %329 = vector.multi_reduction <add>, %328, %cst_83 [1] : vector<2x128xf32> to vector<2xf32>
    %330 = vector.shape_cast %329 : vector<2xf32> to vector<2x1xf32>
    %331 = vector.broadcast %330 : vector<2x1xf32> to vector<2x128xf32>
    %332 = arith.divf %328, %331 : vector<2x128xf32>
    %c0_84 = arith.constant 0 : index
    %c0_85 = arith.constant 0 : index
    %333 = vector.load %arg11[%c0_84, %c0_85] : memref<2x128xf32, #tpu.memory_space<vmem>>, vector<2x128xf32>
    tpu.vector_store %arg11[%c0_84, %c0_85], %332 {strides = array<i32>} : memref<2x128xf32, #tpu.memory_space<vmem>>, vector<2x128xf32>,
    return
  }
}

</mosaic_0001>

<llo_original>
// kernel: net_forward.1
$region0: #{net_forward.1}
  #allocation0 [shape = 'u32[]', space=smem, size = 0x4, offset = 0x4, fixed_abs, tag = 'smem constant byte address 0x4 - core index']
  #allocation1 [shape = 'u32[144,128]{1,0:T(1,128)}', space=vmem, size = 0x12000, scoped, tag = 'internal scratch']
  %s0 = inlined_call_operand.vmem [shape: bf16[80,4096], index: 0, kind: input, shape index: {}]
  %s1 = inlined_call_operand.vmem [shape: bf16[8,80], index: 1, kind: input, shape index: {}]
  %s2 = inlined_call_operand.vmem [shape: f32[8,1], index: 2, kind: input, shape index: {}]
  %s3 = inlined_call_operand.vmem [shape: bf16[16,200], index: 3, kind: input, shape index: {}]
  %s4 = inlined_call_operand.vmem [shape: f32[16,1], index: 4, kind: input, shape index: {}]
  %s5 = inlined_call_operand.vmem [shape: bf16[16,128,128], index: 5, kind: input, shape index: {}]
  %s6 = inlined_call_operand.vmem [shape: f32[1,128], index: 6, kind: input, shape index: {}]
  %s7 = inlined_call_operand.vmem [shape: bf16[128,128], index: 7, kind: input, shape index: {}]
  %s8 = inlined_call_operand.vmem [shape: f32[1,128], index: 8, kind: input, shape index: {}]
  %s9 = inlined_call_operand.vmem [shape: bf16[128,128], index: 9, kind: input, shape index: {}]
  %s10 = inlined_call_operand.vmem [shape: f32[1,128], index: 10, kind: input, shape index: {}]
  %s11 = inlined_call_operand.hbm [shape: f32[2,128], index: 11, kind: output, shape index: {}]
  %s12 = sld [smem:[#allocation0]]
  $region54: #{net_forward.1} parent=0
    _
  %s14 = ssub.s32 1, %s12
  %s15 = scalar_select 0, %s14, %s12
  $region1: #{net_forward.1} parent=0
    #allocation2 [shape = 'u8[1024]{0}', space=vmem, size = 0x400, scoped, tag = 'output window, operand 0, single buffered']
    #allocation3 [shape = 's32[1]{0}', space=sflag, size = 0x4, scoped, tag = 'scoped memory for net_forward.1']
    %16 = vsyncpa [#allocation3], 0
    // Predicated region
    $region2: #{net_forward.1} parent=1 // pred_check
      _
    $region3: #{net_forward.1} parent=1 // pred_check_branch
      %18 = sbr.rel (0) target = $region5
    $region4: #{net_forward.1} parent=1 // pred_region
      _
    $region5: #{net_forward.1} parent=1 // pred_fallthru
      _
    // Predicated region
    $region6: #{net_forward.1} parent=1 // pred_check
      _
    $region7: #{net_forward.1} parent=1 // pred_check_branch
      %20 = sbr.rel (0) target = $region9
    $region8: #{net_forward.1} parent=1 // pred_region
      _
    $region9: #{net_forward.1} parent=1 // pred_fallthru
      _
    // Predicated region
    $region10: #{net_forward.1} parent=1 // pred_check
      _
    $region11: #{net_forward.1} parent=1 // pred_check_branch
      %22 = sbr.rel (0) target = $region13
    $region12: #{net_forward.1} parent=1 // pred_region
      _
    $region13: #{net_forward.1} parent=1 // pred_fallthru
      _
    // Predicated region
    $region14: #{net_forward.1} parent=1 // pred_check
      _
    $region15: #{net_forward.1} parent=1 // pred_check_branch
      %24 = sbr.rel (0) target = $region17
    $region16: #{net_forward.1} parent=1 // pred_region
      _
    $region17: #{net_forward.1} parent=1 // pred_fallthru
      _
    // Predicated region
    $region18: #{net_forward.1} parent=1 // pred_check
      _
    $region19: #{net_forward.1} parent=1 // pred_check_branch
      %26 = sbr.rel (0) target = $region21
    $region20: #{net_forward.1} parent=1 // pred_region
      _
    $region21: #{net_forward.1} parent=1 // pred_fallthru
      _
    // Predicated region
    $region22: #{net_forward.1} parent=1 // pred_check
      _
    $region23: #{net_forward.1} parent=1 // pred_check_branch
      %28 = sbr.rel (0) target = $region25
    $region24: #{net_forward.1} parent=1 // pred_region
      _
    $region25: #{net_forward.1} parent=1 // pred_fallthru
      _
    // Predicated region
    $region26: #{net_forward.1} parent=1 // pred_check
      _
    $region27: #{net_forward.1} parent=1 // pred_check_branch
      %30 = sbr.rel (0) target = $region29
    $region28: #{net_forward.1} parent=1 // pred_region
      _
    $region29: #{net_forward.1} parent=1 // pred_fallthru
      _
    // Predicated region
    $region30: #{net_forward.1} parent=1 // pred_check
      _
    $region31: #{net_forward.1} parent=1 // pred_check_branch
      %32 = sbr.rel (0) target = $region33
    $region32: #{net_forward.1} parent=1 // pred_region
      _
    $region33: #{net_forward.1} parent=1 // pred_fallthru
      _
    // Predicated region
    $region34: #{net_forward.1} parent=1 // pred_check
      _
    $region35: #{net_forward.1} parent=1 // pred_check_branch
      %34 = sbr.rel (0) target = $region37
    $region36: #{net_forward.1} parent=1 // pred_region
      _
    $region37: #{net_forward.1} parent=1 // pred_fallthru
      _
    // Predicated region
    $region38: #{net_forward.1} parent=1 // pred_check
      _
    $region39: #{net_forward.1} parent=1 // pred_check_branch
      %36 = sbr.rel (0) target = $region41
    $region40: #{net_forward.1} parent=1 // pred_region
      _
    $region41: #{net_forward.1} parent=1 // pred_fallthru
      _
    // Predicated region
    $region42: #{net_forward.1} parent=1 // pred_check
      _
    $region43: #{net_forward.1} parent=1 // pred_check_branch
      %38 = sbr.rel (0) target = $region45
    $region44: #{net_forward.1} parent=1 // pred_region
      _
    $region45: #{net_forward.1} parent=1 // pred_fallthru
      _
    %v40 = vld [vmem:[%s1] sm:$0xf]
    %v41 = vld [vmem:[%s0] sm:$0xff]
    %v42 = vld [vmem:[%s0 + $0x8] sm:$0xff]
    %v43 = vld [vmem:[%s0 + $0x10] sm:$0xff]
    %v44 = vld [vmem:[%s0 + $0x18] sm:$0xff]
    %v45 = vld [vmem:[%s0 + $0x20] sm:$0xff]
    %v46 = vld [vmem:[%s0 + $0x28] sm:$0xff]
    %v47 = vld [vmem:[%s0 + $0x30] sm:$0xff]
    %v48 = vld [vmem:[%s0 + $0x38] sm:$0xff]
    %v49 = vld [vmem:[%s0 + $0x40] sm:$0xff]
    %v50 = vld [vmem:[%s0 + $0x48] sm:$0xff]
    %v51 = vld [vmem:[%s0 + $0x50] sm:$0xff]
    %v52 = vld [vmem:[%s0 + $0x58] sm:$0xff]
    %v53 = vld [vmem:[%s0 + $0x60] sm:$0xff]
    %v54 = vld [vmem:[%s0 + $0x68] sm:$0xff]
    %v55 = vld [vmem:[%s0 + $0x70] sm:$0xff]
    %v56 = vld [vmem:[%s0 + $0x78] sm:$0xff]
    %v57 = vld [vmem:[%s0 + $0x80] sm:$0xff]
    %v58 = vld [vmem:[%s0 + $0x88] sm:$0xff]
    %v59 = vld [vmem:[%s0 + $0x90] sm:$0xff]
    %v60 = vld [vmem:[%s0 + $0x98] sm:$0xff]
    %v61 = vld [vmem:[%s0 + $0xa0] sm:$0xff]
    %v62 = vld [vmem:[%s0 + $0xa8] sm:$0xff]
    %v63 = vld [vmem:[%s0 + $0xb0] sm:$0xff]
    %v64 = vld [vmem:[%s0 + $0xb8] sm:$0xff]
    %v65 = vld [vmem:[%s0 + $0xc0] sm:$0xff]
    %v66 = vld [vmem:[%s0 + $0xc8] sm:$0xff]
    %v67 = vld [vmem:[%s0 + $0xd0] sm:$0xff]
    %v68 = vld [vmem:[%s0 + $0xd8] sm:$0xff]
    %v69 = vld [vmem:[%s0 + $0xe0] sm:$0xff]
    %v70 = vld [vmem:[%s0 + $0xe8] sm:$0xff]
    %v71 = vld [vmem:[%s0 + $0xf0] sm:$0xff]
    %v72 = vld [vmem:[%s0 + $0xf8] sm:$0xff]
    %v73 = vld [vmem:[%s0 + $0x100] sm:$0xff]
    %v74 = vld [vmem:[%s0 + $0x108] sm:$0xff]
    %v75 = vld [vmem:[%s0 + $0x110] sm:$0xff]
    %v76 = vld [vmem:[%s0 + $0x118] sm:$0xff]
    %v77 = vld [vmem:[%s0 + $0x120] sm:$0xff]
    %v78 = vld [vmem:[%s0 + $0x128] sm:$0xff]
    %v79 = vld [vmem:[%s0 + $0x130] sm:$0xff]
    %v80 = vld [vmem:[%s0 + $0x138] sm:$0xff]
    %v81 = vld [vmem:[%s0 + $0x140] sm:$0xff]
    %v82 = vld [vmem:[%s0 + $0x148] sm:$0xff]
    %v83 = vld [vmem:[%s0 + $0x150] sm:$0xff]
    %v84 = vld [vmem:[%s0 + $0x158] sm:$0xff]
    %v85 = vld [vmem:[%s0 + $0x160] sm:$0xff]
    %v86 = vld [vmem:[%s0 + $0x168] sm:$0xff]
    %v87 = vld [vmem:[%s0 + $0x170] sm:$0xff]
    %v88 = vld [vmem:[%s0 + $0x178] sm:$0xff]
    %v89 = vld [vmem:[%s0 + $0x180] sm:$0xff]
    %v90 = vld [vmem:[%s0 + $0x188] sm:$0xff]
    %v91 = vld [vmem:[%s0 + $0x190] sm:$0xff]
    %v92 = vld [vmem:[%s0 + $0x198] sm:$0xff]
    %v93 = vld [vmem:[%s0 + $0x1a0] sm:$0xff]
    %v94 = vld [vmem:[%s0 + $0x1a8] sm:$0xff]
    %v95 = vld [vmem:[%s0 + $0x1b0] sm:$0xff]
    %v96 = vld [vmem:[%s0 + $0x1b8] sm:$0xff]
    %v97 = vld [vmem:[%s0 + $0x1c0] sm:$0xff]
    %v98 = vld [vmem:[%s0 + $0x1c8] sm:$0xff]
    %v99 = vld [vmem:[%s0 + $0x1d0] sm:$0xff]
    %v100 = vld [vmem:[%s0 + $0x1d8] sm:$0xff]
    %v101 = vld [vmem:[%s0 + $0x1e0] sm:$0xff]
    %v102 = vld [vmem:[%s0 + $0x1e8] sm:$0xff]
    %v103 = vld [vmem:[%s0 + $0x1f0] sm:$0xff]
    %v104 = vld [vmem:[%s0 + $0x1f8] sm:$0xff]
    %v105 = vld [vmem:[%s0 + $0x200] sm:$0xff]
    %v106 = vld [vmem:[%s0 + $0x208] sm:$0xff]
    %v107 = vld [vmem:[%s0 + $0x210] sm:$0xff]
    %v108 = vld [vmem:[%s0 + $0x218] sm:$0xff]
    %v109 = vld [vmem:[%s0 + $0x220] sm:$0xff]
    %v110 = vld [vmem:[%s0 + $0x228] sm:$0xff]
    %v111 = vld [vmem:[%s0 + $0x230] sm:$0xff]
    %v112 = vld [vmem:[%s0 + $0x238] sm:$0xff]
    %v113 = vld [vmem:[%s0 + $0x240] sm:$0xff]
    %v114 = vld [vmem:[%s0 + $0x248] sm:$0xff]
    %v115 = vld [vmem:[%s0 + $0x250] sm:$0xff]
    %v116 = vld [vmem:[%s0 + $0x258] sm:$0xff]
    %v117 = vld [vmem:[%s0 + $0x260] sm:$0xff]
    %v118 = vld [vmem:[%s0 + $0x268] sm:$0xff]
    %v119 = vld [vmem:[%s0 + $0x270] sm:$0xff]
    %v120 = vld [vmem:[%s0 + $0x278] sm:$0xff]
    %v121 = vld [vmem:[%s0 + $0x280] sm:$0xff]
    %v122 = vld [vmem:[%s0 + $0x288] sm:$0xff]
    %v123 = vld [vmem:[%s0 + $0x290] sm:$0xff]
    %v124 = vld [vmem:[%s0 + $0x298] sm:$0xff]
    %v125 = vld [vmem:[%s0 + $0x2a0] sm:$0xff]
    %v126 = vld [vmem:[%s0 + $0x2a8] sm:$0xff]
    %v127 = vld [vmem:[%s0 + $0x2b0] sm:$0xff]
    %v128 = vld [vmem:[%s0 + $0x2b8] sm:$0xff]
    %v129 = vld [vmem:[%s0 + $0x2c0] sm:$0xff]
    %v130 = vld [vmem:[%s0 + $0x2c8] sm:$0xff]
    %v131 = vld [vmem:[%s0 + $0x2d0] sm:$0xff]
    %v132 = vld [vmem:[%s0 + $0x2d8] sm:$0xff]
    %v133 = vld [vmem:[%s0 + $0x2e0] sm:$0xff]
    %v134 = vld [vmem:[%s0 + $0x2e8] sm:$0xff]
    %v135 = vld [vmem:[%s0 + $0x2f0] sm:$0xff]
    %v136 = vld [vmem:[%s0 + $0x2f8] sm:$0xff]
    %v137 = vld [vmem:[%s0 + $0x300] sm:$0xff]
    %v138 = vld [vmem:[%s0 + $0x308] sm:$0xff]
    %v139 = vld [vmem:[%s0 + $0x310] sm:$0xff]
    %v140 = vld [vmem:[%s0 + $0x318] sm:$0xff]
    %v141 = vld [vmem:[%s0 + $0x320] sm:$0xff]
    %v142 = vld [vmem:[%s0 + $0x328] sm:$0xff]
    %v143 = vld [vmem:[%s0 + $0x330] sm:$0xff]
    %v144 = vld [vmem:[%s0 + $0x338] sm:$0xff]
    %v145 = vld [vmem:[%s0 + $0x340] sm:$0xff]
    %v146 = vld [vmem:[%s0 + $0x348] sm:$0xff]
    %v147 = vld [vmem:[%s0 + $0x350] sm:$0xff]
    %v148 = vld [vmem:[%s0 + $0x358] sm:$0xff]
    %v149 = vld [vmem:[%s0 + $0x360] sm:$0xff]
    %v150 = vld [vmem:[%s0 + $0x368] sm:$0xff]
    %v151 = vld [vmem:[%s0 + $0x370] sm:$0xff]
    %v152 = vld [vmem:[%s0 + $0x378] sm:$0xff]
    %v153 = vld [vmem:[%s0 + $0x380] sm:$0xff]
    %v154 = vld [vmem:[%s0 + $0x388] sm:$0xff]
    %v155 = vld [vmem:[%s0 + $0x390] sm:$0xff]
    %v156 = vld [vmem:[%s0 + $0x398] sm:$0xff]
    %v157 = vld [vmem:[%s0 + $0x3a0] sm:$0xff]
    %v158 = vld [vmem:[%s0 + $0x3a8] sm:$0xff]
    %v159 = vld [vmem:[%s0 + $0x3b0] sm:$0xff]
    %v160 = vld [vmem:[%s0 + $0x3b8] sm:$0xff]
    %v161 = vld [vmem:[%s0 + $0x3c0] sm:$0xff]
    %v162 = vld [vmem:[%s0 + $0x3c8] sm:$0xff]
    %v163 = vld [vmem:[%s0 + $0x3d0] sm:$0xff]
    %v164 = vld [vmem:[%s0 + $0x3d8] sm:$0xff]
    %v165 = vld [vmem:[%s0 + $0x3e0] sm:$0xff]
    %v166 = vld [vmem:[%s0 + $0x3e8] sm:$0xff]
    %v167 = vld [vmem:[%s0 + $0x3f0] sm:$0xff]
    %v168 = vld [vmem:[%s0 + $0x3f8] sm:$0xff]
    %v169 = vld [vmem:[%s0 + $0x400] sm:$0xff]
    %v170 = vld [vmem:[%s0 + $0x408] sm:$0xff]
    %v171 = vld [vmem:[%s0 + $0x410] sm:$0xff]
    %v172 = vld [vmem:[%s0 + $0x418] sm:$0xff]
    %v173 = vld [vmem:[%s0 + $0x420] sm:$0xff]
    %v174 = vld [vmem:[%s0 + $0x428] sm:$0xff]
    %v175 = vld [vmem:[%s0 + $0x430] sm:$0xff]
    %v176 = vld [vmem:[%s0 + $0x438] sm:$0xff]
    %v177 = vld [vmem:[%s0 + $0x440] sm:$0xff]
    %v178 = vld [vmem:[%s0 + $0x448] sm:$0xff]
    %v179 = vld [vmem:[%s0 + $0x450] sm:$0xff]
    %v180 = vld [vmem:[%s0 + $0x458] sm:$0xff]
    %v181 = vld [vmem:[%s0 + $0x460] sm:$0xff]
    %v182 = vld [vmem:[%s0 + $0x468] sm:$0xff]
    %v183 = vld [vmem:[%s0 + $0x470] sm:$0xff]
    %v184 = vld [vmem:[%s0 + $0x478] sm:$0xff]
    %v185 = vld [vmem:[%s0 + $0x480] sm:$0xff]
    %v186 = vld [vmem:[%s0 + $0x488] sm:$0xff]
    %v187 = vld [vmem:[%s0 + $0x490] sm:$0xff]
    %v188 = vld [vmem:[%s0 + $0x498] sm:$0xff]
    %v189 = vld [vmem:[%s0 + $0x4a0] sm:$0xff]
    %v190 = vld [vmem:[%s0 + $0x4a8] sm:$0xff]
    %v191 = vld [vmem:[%s0 + $0x4b0] sm:$0xff]
    %v192 = vld [vmem:[%s0 + $0x4b8] sm:$0xff]
    %v193 = vld [vmem:[%s0 + $0x4c0] sm:$0xff]
    %v194 = vld [vmem:[%s0 + $0x4c8] sm:$0xff]
    %v195 = vld [vmem:[%s0 + $0x4d0] sm:$0xff]
    %v196 = vld [vmem:[%s0 + $0x4d8] sm:$0xff]
    %v197 = vld [vmem:[%s0 + $0x4e0] sm:$0xff]
    %v198 = vld [vmem:[%s0 + $0x4e8] sm:$0xff]
    %v199 = vld [vmem:[%s0 + $0x4f0] sm:$0xff]
    %v200 = vld [vmem:[%s0 + $0x4f8] sm:$0xff]
    %v361 = vunpack.c.l.b16 %v41
    %v362 = vunpack.c.h.b16 %v41
    %v363 = vunpack.c.l.b16 %v42
    %v364 = vunpack.c.h.b16 %v42
    %v365 = vunpack.c.l.b16 %v43
    %v366 = vunpack.c.h.b16 %v43
    %v367 = vunpack.c.l.b16 %v44
    %v368 = vunpack.c.h.b16 %v44
    %v369 = vunpack.c.l.b16 %v45
    %v370 = vunpack.c.h.b16 %v45
    %v371 = vunpack.c.l.b16 %v46
    %v372 = vunpack.c.h.b16 %v46
    %v373 = vunpack.c.l.b16 %v47
    %v374 = vunpack.c.h.b16 %v47
    %v375 = vunpack.c.l.b16 %v48
    %v376 = vunpack.c.h.b16 %v48
    %v377 = vunpack.c.l.b16 %v49
    %v378 = vunpack.c.h.b16 %v49
    %v379 = vunpack.c.l.b16 %v50
    %v380 = vunpack.c.h.b16 %v50
    %v381 = vunpack.c.l.b16 %v51
    %v382 = vunpack.c.h.b16 %v51
    %v383 = vunpack.c.l.b16 %v52
    %v384 = vunpack.c.h.b16 %v52
    %v385 = vunpack.c.l.b16 %v53
    %v386 = vunpack.c.h.b16 %v53
    %v387 = vunpack.c.l.b16 %v54
    %v388 = vunpack.c.h.b16 %v54
    %v389 = vunpack.c.l.b16 %v55
    %v390 = vunpack.c.h.b16 %v55
    %v391 = vunpack.c.l.b16 %v56
    %v392 = vunpack.c.h.b16 %v56
    %v393 = vunpack.c.l.b16 %v57
    %v394 = vunpack.c.h.b16 %v57
    %v395 = vunpack.c.l.b16 %v58
    %v396 = vunpack.c.h.b16 %v58
    %v397 = vunpack.c.l.b16 %v59
    %v398 = vunpack.c.h.b16 %v59
    %v399 = vunpack.c.l.b16 %v60
    %v400 = vunpack.c.h.b16 %v60
    %v401 = vunpack.c.l.b16 %v61
    %v402 = vunpack.c.h.b16 %v61
    %v403 = vunpack.c.l.b16 %v62
    %v404 = vunpack.c.h.b16 %v62
    %v405 = vunpack.c.l.b16 %v63
    %v406 = vunpack.c.h.b16 %v63
    %v407 = vunpack.c.l.b16 %v64
    %v408 = vunpack.c.h.b16 %v64
    %v409 = vunpack.c.l.b16 %v65
    %v410 = vunpack.c.h.b16 %v65
    %v411 = vunpack.c.l.b16 %v66
    %v412 = vunpack.c.h.b16 %v66
    %v413 = vunpack.c.l.b16 %v67
    %v414 = vunpack.c.h.b16 %v67
    %v415 = vunpack.c.l.b16 %v68
    %v416 = vunpack.c.h.b16 %v68
    %v417 = vunpack.c.l.b16 %v69
    %v418 = vunpack.c.h.b16 %v69
    %v419 = vunpack.c.l.b16 %v70
    %v420 = vunpack.c.h.b16 %v70
    %v421 = vunpack.c.l.b16 %v71
    %v422 = vunpack.c.h.b16 %v71
    %v423 = vunpack.c.l.b16 %v72
    %v424 = vunpack.c.h.b16 %v72
    %v425 = vunpack.c.l.b16 %v73
    %v426 = vunpack.c.h.b16 %v73
    %v427 = vunpack.c.l.b16 %v74
    %v428 = vunpack.c.h.b16 %v74
    %v429 = vunpack.c.l.b16 %v75
    %v430 = vunpack.c.h.b16 %v75
    %v431 = vunpack.c.l.b16 %v76
    %v432 = vunpack.c.h.b16 %v76
    %v433 = vunpack.c.l.b16 %v77
    %v434 = vunpack.c.h.b16 %v77
    %v435 = vunpack.c.l.b16 %v78
    %v436 = vunpack.c.h.b16 %v78
    %v437 = vunpack.c.l.b16 %v79
    %v438 = vunpack.c.h.b16 %v79
    %v439 = vunpack.c.l.b16 %v80
    %v440 = vunpack.c.h.b16 %v80
    %v441 = vunpack.c.l.b16 %v81
    %v442 = vunpack.c.h.b16 %v81
    %v443 = vunpack.c.l.b16 %v82
    %v444 = vunpack.c.h.b16 %v82
    %v445 = vunpack.c.l.b16 %v83
    %v446 = vunpack.c.h.b16 %v83
    %v447 = vunpack.c.l.b16 %v84
    %v448 = vunpack.c.h.b16 %v84
    %v449 = vunpack.c.l.b16 %v85
    %v450 = vunpack.c.h.b16 %v85
    %v451 = vunpack.c.l.b16 %v86
    %v452 = vunpack.c.h.b16 %v86
    %v453 = vunpack.c.l.b16 %v87
    %v454 = vunpack.c.h.b16 %v87
    %v455 = vunpack.c.l.b16 %v88
    %v456 = vunpack.c.h.b16 %v88
    %v457 = vunpack.c.l.b16 %v89
    %v458 = vunpack.c.h.b16 %v89
    %v459 = vunpack.c.l.b16 %v90
    %v460 = vunpack.c.h.b16 %v90
    %v461 = vunpack.c.l.b16 %v91
    %v462 = vunpack.c.h.b16 %v91
    %v463 = vunpack.c.l.b16 %v92
    %v464 = vunpack.c.h.b16 %v92
    %v465 = vunpack.c.l.b16 %v93
    %v466 = vunpack.c.h.b16 %v93
    %v467 = vunpack.c.l.b16 %v94
    %v468 = vunpack.c.h.b16 %v94
    %v469 = vunpack.c.l.b16 %v95
    %v470 = vunpack.c.h.b16 %v95
    %v471 = vunpack.c.l.b16 %v96
    %v472 = vunpack.c.h.b16 %v96
    %v473 = vunpack.c.l.b16 %v97
    %v474 = vunpack.c.h.b16 %v97
    %v475 = vunpack.c.l.b16 %v98
    %v476 = vunpack.c.h.b16 %v98
    %v477 = vunpack.c.l.b16 %v99
    %v478 = vunpack.c.h.b16 %v99
    %v479 = vunpack.c.l.b16 %v100
    %v480 = vunpack.c.h.b16 %v100
    %v481 = vunpack.c.l.b16 %v101
    %v482 = vunpack.c.h.b16 %v101
    %v483 = vunpack.c.l.b16 %v102
    %v484 = vunpack.c.h.b16 %v102
    %v485 = vunpack.c.l.b16 %v103
    %v486 = vunpack.c.h.b16 %v103
    %v487 = vunpack.c.l.b16 %v104
    %v488 = vunpack.c.h.b16 %v104
    %v489 = vunpack.c.l.b16 %v105
    %v490 = vunpack.c.h.b16 %v105
    %v491 = vunpack.c.l.b16 %v106
    %v492 = vunpack.c.h.b16 %v106
    %v493 = vunpack.c.l.b16 %v107
    %v494 = vunpack.c.h.b16 %v107
    %v495 = vunpack.c.l.b16 %v108
    %v496 = vunpack.c.h.b16 %v108
    %v497 = vunpack.c.l.b16 %v109
    %v498 = vunpack.c.h.b16 %v109
    %v499 = vunpack.c.l.b16 %v110
    %v500 = vunpack.c.h.b16 %v110
    %v501 = vunpack.c.l.b16 %v111
    %v502 = vunpack.c.h.b16 %v111
    %v503 = vunpack.c.l.b16 %v112
    %v504 = vunpack.c.h.b16 %v112
    %v505 = vunpack.c.l.b16 %v113
    %v506 = vunpack.c.h.b16 %v113
    %v507 = vunpack.c.l.b16 %v114
    %v508 = vunpack.c.h.b16 %v114
    %v509 = vunpack.c.l.b16 %v115
    %v510 = vunpack.c.h.b16 %v115
    %v511 = vunpack.c.l.b16 %v116
    %v512 = vunpack.c.h.b16 %v116
    %v513 = vunpack.c.l.b16 %v117
    %v514 = vunpack.c.h.b16 %v117
    %v515 = vunpack.c.l.b16 %v118
    %v516 = vunpack.c.h.b16 %v118
    %v517 = vunpack.c.l.b16 %v119
    %v518 = vunpack.c.h.b16 %v119
    %v519 = vunpack.c.l.b16 %v120
    %v520 = vunpack.c.h.b16 %v120
    %v521 = vunpack.c.l.b16 %v121
    %v522 = vunpack.c.h.b16 %v121
    %v523 = vunpack.c.l.b16 %v122
    %v524 = vunpack.c.h.b16 %v122
    %v525 = vunpack.c.l.b16 %v123
    %v526 = vunpack.c.h.b16 %v123
    %v527 = vunpack.c.l.b16 %v124
    %v528 = vunpack.c.h.b16 %v124
    %v529 = vunpack.c.l.b16 %v125
    %v530 = vunpack.c.h.b16 %v125
    %v531 = vunpack.c.l.b16 %v126
    %v532 = vunpack.c.h.b16 %v126
    %v533 = vunpack.c.l.b16 %v127
    %v534 = vunpack.c.h.b16 %v127
    %v535 = vunpack.c.l.b16 %v128
    %v536 = vunpack.c.h.b16 %v128
    %v537 = vunpack.c.l.b16 %v129
    %v538 = vunpack.c.h.b16 %v129
    %v539 = vunpack.c.l.b16 %v130
    %v540 = vunpack.c.h.b16 %v130
    %v541 = vunpack.c.l.b16 %v131
    %v542 = vunpack.c.h.b16 %v131
    %v543 = vunpack.c.l.b16 %v132
    %v544 = vunpack.c.h.b16 %v132
    %v545 = vunpack.c.l.b16 %v133
    %v546 = vunpack.c.h.b16 %v133
    %v547 = vunpack.c.l.b16 %v134
    %v548 = vunpack.c.h.b16 %v134
    %v549 = vunpack.c.l.b16 %v135
    %v550 = vunpack.c.h.b16 %v135
    %v551 = vunpack.c.l.b16 %v136
    %v552 = vunpack.c.h.b16 %v136
    %v553 = vunpack.c.l.b16 %v137
    %v554 = vunpack.c.h.b16 %v137
    %v555 = vunpack.c.l.b16 %v138
    %v556 = vunpack.c.h.b16 %v138
    %v557 = vunpack.c.l.b16 %v139
    %v558 = vunpack.c.h.b16 %v139
    %v559 = vunpack.c.l.b16 %v140
    %v560 = vunpack.c.h.b16 %v140
    %v561 = vunpack.c.l.b16 %v141
    %v562 = vunpack.c.h.b16 %v141
    %v563 = vunpack.c.l.b16 %v142
    %v564 = vunpack.c.h.b16 %v142
    %v565 = vunpack.c.l.b16 %v143
    %v566 = vunpack.c.h.b16 %v143
    %v567 = vunpack.c.l.b16 %v144
    %v568 = vunpack.c.h.b16 %v144
    %v569 = vunpack.c.l.b16 %v145
    %v570 = vunpack.c.h.b16 %v145
    %v571 = vunpack.c.l.b16 %v146
    %v572 = vunpack.c.h.b16 %v146
    %v573 = vunpack.c.l.b16 %v147
    %v574 = vunpack.c.h.b16 %v147
    %v575 = vunpack.c.l.b16 %v148
    %v576 = vunpack.c.h.b16 %v148
    %v577 = vunpack.c.l.b16 %v149
    %v578 = vunpack.c.h.b16 %v149
    %v579 = vunpack.c.l.b16 %v150
    %v580 = vunpack.c.h.b16 %v150
    %v581 = vunpack.c.l.b16 %v151
    %v582 = vunpack.c.h.b16 %v151
    %v583 = vunpack.c.l.b16 %v152
    %v584 = vunpack.c.h.b16 %v152
    %v585 = vunpack.c.l.b16 %v153
    %v586 = vunpack.c.h.b16 %v153
    %v587 = vunpack.c.l.b16 %v154
    %v588 = vunpack.c.h.b16 %v154
    %v589 = vunpack.c.l.b16 %v155
    %v590 = vunpack.c.h.b16 %v155
    %v591 = vunpack.c.l.b16 %v156
    %v592 = vunpack.c.h.b16 %v156
    %v593 = vunpack.c.l.b16 %v157
    %v594 = vunpack.c.h.b16 %v157
    %v595 = vunpack.c.l.b16 %v158
    %v596 = vunpack.c.h.b16 %v158
    %v597 = vunpack.c.l.b16 %v159
    %v598 = vunpack.c.h.b16 %v159
    %v599 = vunpack.c.l.b16 %v160
    %v600 = vunpack.c.h.b16 %v160
    %v601 = vunpack.c.l.b16 %v161
    %v602 = vunpack.c.h.b16 %v161
    %v603 = vunpack.c.l.b16 %v162
    %v604 = vunpack.c.h.b16 %v162
    %v605 = vunpack.c.l.b16 %v163
    %v606 = vunpack.c.h.b16 %v163
    %v607 = vunpack.c.l.b16 %v164
    %v608 = vunpack.c.h.b16 %v164
    %v609 = vunpack.c.l.b16 %v165
    %v610 = vunpack.c.h.b16 %v165
    %v611 = vunpack.c.l.b16 %v166
    %v612 = vunpack.c.h.b16 %v166
    %v613 = vunpack.c.l.b16 %v167
    %v614 = vunpack.c.h.b16 %v167
    %v615 = vunpack.c.l.b16 %v168
    %v616 = vunpack.c.h.b16 %v168
    %v617 = vunpack.c.l.b16 %v169
    %v618 = vunpack.c.h.b16 %v169
    %v619 = vunpack.c.l.b16 %v170
    %v620 = vunpack.c.h.b16 %v170
    %v621 = vunpack.c.l.b16 %v171
    %v622 = vunpack.c.h.b16 %v171
    %v623 = vunpack.c.l.b16 %v172
    %v624 = vunpack.c.h.b16 %v172
    %v625 = vunpack.c.l.b16 %v173
    %v626 = vunpack.c.h.b16 %v173
    %v627 = vunpack.c.l.b16 %v174
    %v628 = vunpack.c.h.b16 %v174
    %v629 = vunpack.c.l.b16 %v175
    %v630 = vunpack.c.h.b16 %v175
    %v631 = vunpack.c.l.b16 %v176
    %v632 = vunpack.c.h.b16 %v176
    %v633 = vunpack.c.l.b16 %v177
    %v634 = vunpack.c.h.b16 %v177
    %v635 = vunpack.c.l.b16 %v178
    %v636 = vunpack.c.h.b16 %v178
    %v637 = vunpack.c.l.b16 %v179
    %v638 = vunpack.c.h.b16 %v179
    %v639 = vunpack.c.l.b16 %v180
    %v640 = vunpack.c.h.b16 %v180
    %v641 = vunpack.c.l.b16 %v181
    %v642 = vunpack.c.h.b16 %v181
    %v643 = vunpack.c.l.b16 %v182
    %v644 = vunpack.c.h.b16 %v182
    %v645 = vunpack.c.l.b16 %v183
    %v646 = vunpack.c.h.b16 %v183
    %v647 = vunpack.c.l.b16 %v184
    %v648 = vunpack.c.h.b16 %v184
    %v649 = vunpack.c.l.b16 %v185
    %v650 = vunpack.c.h.b16 %v185
    %v651 = vunpack.c.l.b16 %v186
    %v652 = vunpack.c.h.b16 %v186
    %v653 = vunpack.c.l.b16 %v187
    %v654 = vunpack.c.h.b16 %v187
    %v655 = vunpack.c.l.b16 %v188
    %v656 = vunpack.c.h.b16 %v188
    %v657 = vunpack.c.l.b16 %v189
    %v658 = vunpack.c.h.b16 %v189
    %v659 = vunpack.c.l.b16 %v190
    %v660 = vunpack.c.h.b16 %v190
    %v661 = vunpack.c.l.b16 %v191
    %v662 = vunpack.c.h.b16 %v191
    %v663 = vunpack.c.l.b16 %v192
    %v664 = vunpack.c.h.b16 %v192
    %v665 = vunpack.c.l.b16 %v193
    %v666 = vunpack.c.h.b16 %v193
    %v667 = vunpack.c.l.b16 %v194
    %v668 = vunpack.c.h.b16 %v194
    %v669 = vunpack.c.l.b16 %v195
    %v670 = vunpack.c.h.b16 %v195
    %v671 = vunpack.c.l.b16 %v196
    %v672 = vunpack.c.h.b16 %v196
    %v673 = vunpack.c.l.b16 %v197
    %v674 = vunpack.c.h.b16 %v197
    %v675 = vunpack.c.l.b16 %v198
    %v676 = vunpack.c.h.b16 %v198
    %v677 = vunpack.c.l.b16 %v199
    %v678 = vunpack.c.h.b16 %v199
    %v679 = vunpack.c.l.b16 %v200
    %v680 = vunpack.c.h.b16 %v200
    %v681 = vpack.c.b16 %v393, %v361
    %v682 = vpack.c.b16 %v394, %v362
    %v683 = vpack.c.b16 %v395, %v363
    %v684 = vpack.c.b16 %v396, %v364
    %v685 = vpack.c.b16 %v397, %v365
    %v686 = vpack.c.b16 %v398, %v366
    %v687 = vpack.c.b16 %v399, %v367
    %v688 = vpack.c.b16 %v400, %v368
    %v689 = vpack.c.b16 %v401, %v369
    %v690 = vpack.c.b16 %v402, %v370
    %v691 = vpack.c.b16 %v403, %v371
    %v692 = vpack.c.b16 %v404, %v372
    %v693 = vpack.c.b16 %v405, %v373
    %v694 = vpack.c.b16 %v406, %v374
    %v695 = vpack.c.b16 %v407, %v375
    %v696 = vpack.c.b16 %v408, %v376
    %v697 = vpack.c.b16 %v409, %v377
    %v698 = vpack.c.b16 %v410, %v378
    %v699 = vpack.c.b16 %v411, %v379
    %v700 = vpack.c.b16 %v412, %v380
    %v701 = vpack.c.b16 %v413, %v381
    %v702 = vpack.c.b16 %v414, %v382
    %v703 = vpack.c.b16 %v415, %v383
    %v704 = vpack.c.b16 %v416, %v384
    %v705 = vpack.c.b16 %v417, %v385
    %v706 = vpack.c.b16 %v418, %v386
    %v707 = vpack.c.b16 %v419, %v387
    %v708 = vpack.c.b16 %v420, %v388
    %v709 = vpack.c.b16 %v421, %v389
    %v710 = vpack.c.b16 %v422, %v390
    %v711 = vpack.c.b16 %v423, %v391
    %v712 = vpack.c.b16 %v424, %v392
    %v713 = vpack.c.b16 %v457, %v425
    %v714 = vpack.c.b16 %v458, %v426
    %v715 = vpack.c.b16 %v459, %v427
    %v716 = vpack.c.b16 %v460, %v428
    %v717 = vpack.c.b16 %v461, %v429
    %v718 = vpack.c.b16 %v462, %v430
    %v719 = vpack.c.b16 %v463, %v431
    %v720 = vpack.c.b16 %v464, %v432
    %v721 = vpack.c.b16 %v465, %v433
    %v722 = vpack.c.b16 %v466, %v434
    %v723 = vpack.c.b16 %v467, %v435
    %v724 = vpack.c.b16 %v468, %v436
    %v725 = vpack.c.b16 %v469, %v437
    %v726 = vpack.c.b16 %v470, %v438
    %v727 = vpack.c.b16 %v471, %v439
    %v728 = vpack.c.b16 %v472, %v440
    %v729 = vpack.c.b16 %v473, %v441
    %v730 = vpack.c.b16 %v474, %v442
    %v731 = vpack.c.b16 %v475, %v443
    %v732 = vpack.c.b16 %v476, %v444
    %v733 = vpack.c.b16 %v477, %v445
    %v734 = vpack.c.b16 %v478, %v446
    %v735 = vpack.c.b16 %v479, %v447
    %v736 = vpack.c.b16 %v480, %v448
    %v737 = vpack.c.b16 %v481, %v449
    %v738 = vpack.c.b16 %v482, %v450
    %v739 = vpack.c.b16 %v483, %v451
    %v740 = vpack.c.b16 %v484, %v452
    %v741 = vpack.c.b16 %v485, %v453
    %v742 = vpack.c.b16 %v486, %v454
    %v743 = vpack.c.b16 %v487, %v455
    %v744 = vpack.c.b16 %v488, %v456
    %v745 = vpack.c.b16 %v521, %v489
    %v746 = vpack.c.b16 %v522, %v490
    %v747 = vpack.c.b16 %v523, %v491
    %v748 = vpack.c.b16 %v524, %v492
    %v749 = vpack.c.b16 %v525, %v493
    %v750 = vpack.c.b16 %v526, %v494
    %v751 = vpack.c.b16 %v527, %v495
    %v752 = vpack.c.b16 %v528, %v496
    %v753 = vpack.c.b16 %v529, %v497
    %v754 = vpack.c.b16 %v530, %v498
    %v755 = vpack.c.b16 %v531, %v499
    %v756 = vpack.c.b16 %v532, %v500
    %v757 = vpack.c.b16 %v533, %v501
    %v758 = vpack.c.b16 %v534, %v502
    %v759 = vpack.c.b16 %v535, %v503
    %v760 = vpack.c.b16 %v536, %v504
    %v761 = vpack.c.b16 %v537, %v505
    %v762 = vpack.c.b16 %v538, %v506
    %v763 = vpack.c.b16 %v539, %v507
    %v764 = vpack.c.b16 %v540, %v508
    %v765 = vpack.c.b16 %v541, %v509
    %v766 = vpack.c.b16 %v542, %v510
    %v767 = vpack.c.b16 %v543, %v511
    %v768 = vpack.c.b16 %v544, %v512
    %v769 = vpack.c.b16 %v545, %v513
    %v770 = vpack.c.b16 %v546, %v514
    %v771 = vpack.c.b16 %v547, %v515
    %v772 = vpack.c.b16 %v548, %v516
    %v773 = vpack.c.b16 %v549, %v517
    %v774 = vpack.c.b16 %v550, %v518
    %v775 = vpack.c.b16 %v551, %v519
    %v776 = vpack.c.b16 %v552, %v520
    %v777 = vpack.c.b16 %v585, %v553
    %v778 = vpack.c.b16 %v586, %v554
    %v779 = vpack.c.b16 %v587, %v555
    %v780 = vpack.c.b16 %v588, %v556
    %v781 = vpack.c.b16 %v589, %v557
    %v782 = vpack.c.b16 %v590, %v558
    %v783 = vpack.c.b16 %v591, %v559
    %v784 = vpack.c.b16 %v592, %v560
    %v785 = vpack.c.b16 %v593, %v561
    %v786 = vpack.c.b16 %v594, %v562
    %v787 = vpack.c.b16 %v595, %v563
    %v788 = vpack.c.b16 %v596, %v564
    %v789 = vpack.c.b16 %v597, %v565
    %v790 = vpack.c.b16 %v598, %v566
    %v791 = vpack.c.b16 %v599, %v567
    %v792 = vpack.c.b16 %v600, %v568
    %v793 = vpack.c.b16 %v601, %v569
    %v794 = vpack.c.b16 %v602, %v570
    %v795 = vpack.c.b16 %v603, %v571
    %v796 = vpack.c.b16 %v604, %v572
    %v797 = vpack.c.b16 %v605, %v573
    %v798 = vpack.c.b16 %v606, %v574
    %v799 = vpack.c.b16 %v607, %v575
    %v800 = vpack.c.b16 %v608, %v576
    %v801 = vpack.c.b16 %v609, %v577
    %v802 = vpack.c.b16 %v610, %v578
    %v803 = vpack.c.b16 %v611, %v579
    %v804 = vpack.c.b16 %v612, %v580
    %v805 = vpack.c.b16 %v613, %v581
    %v806 = vpack.c.b16 %v614, %v582
    %v807 = vpack.c.b16 %v615, %v583
    %v808 = vpack.c.b16 %v616, %v584
    %v809 = vpack.c.b16 %v649, %v617
    %v810 = vpack.c.b16 %v650, %v618
    %v811 = vpack.c.b16 %v651, %v619
    %v812 = vpack.c.b16 %v652, %v620
    %v813 = vpack.c.b16 %v653, %v621
    %v814 = vpack.c.b16 %v654, %v622
    %v815 = vpack.c.b16 %v655, %v623
    %v816 = vpack.c.b16 %v656, %v624
    %v817 = vpack.c.b16 %v657, %v625
    %v818 = vpack.c.b16 %v658, %v626
    %v819 = vpack.c.b16 %v659, %v627
    %v820 = vpack.c.b16 %v660, %v628
    %v821 = vpack.c.b16 %v661, %v629
    %v822 = vpack.c.b16 %v662, %v630
    %v823 = vpack.c.b16 %v663, %v631
    %v824 = vpack.c.b16 %v664, %v632
    %v825 = vpack.c.b16 %v665, %v633
    %v826 = vpack.c.b16 %v666, %v634
    %v827 = vpack.c.b16 %v667, %v635
    %v828 = vpack.c.b16 %v668, %v636
    %v829 = vpack.c.b16 %v669, %v637
    %v830 = vpack.c.b16 %v670, %v638
    %v831 = vpack.c.b16 %v671, %v639
    %v832 = vpack.c.b16 %v672, %v640
    %v833 = vpack.c.b16 %v673, %v641
    %v834 = vpack.c.b16 %v674, %v642
    %v835 = vpack.c.b16 %v675, %v643
    %v836 = vpack.c.b16 %v676, %v644
    %v837 = vpack.c.b16 %v677, %v645
    %v838 = vpack.c.b16 %v678, %v646
    %v839 = vpack.c.b16 %v679, %v647
    %v840 = vpack.c.b16 %v680, %v648
    %vm1001 = vcmask 654336
    %v1003 = vsel %vm1001, %v40, 0
    %1005 = vmatprep.subr.bf16.mxu0 0
    %1006 = vmatpush1.bf16.msra.mxu0 0
    %1007 = vmatprep.subr.bf16.mxu0 0
    %1008 = vmatpush1.bf16.msra.mxu0 0
    %1009 = vmatprep.subr.bf16.mxu0 0
    %1010 = vmatpush1.bf16.msra.mxu0 0
    %1011 = vmatprep.subr.bf16.mxu0 %v810
    %1012 = vmatpush1.bf16.msra.mxu0 %v809
    %1013 = vmatprep.subr.bf16.mxu0 %v778
    %1014 = vmatpush1.bf16.msra.mxu0 %v777
    %1015 = vmatprep.subr.bf16.mxu0 %v746
    %1016 = vmatpush1.bf16.msra.mxu0 %v745
    %1017 = vmatprep.subr.bf16.mxu0 %v714
    %1018 = vmatpush1.bf16.msra.mxu0 %v713
    %1019 = vmatprep.subr.bf16.mxu0 %v682
    %1020 = vmatpush1.bf16.msra.mxu0 %v681
    %1021 = vmatprep.subr.bf16.mxu0 0
    %1022 = vmatpush2.bf16.msra.mxu0 0
    %1023 = vmatprep.subr.bf16.mxu0 0
    %1024 = vmatpush2.bf16.msra.mxu0 0
    %1025 = vmatprep.subr.bf16.mxu0 0
    %1026 = vmatpush2.bf16.msra.mxu0 0
    %1027 = vmatprep.subr.bf16.mxu0 0
    %1028 = vmatpush2.bf16.msra.mxu0 0
    %1029 = vmatprep.subr.bf16.mxu0 0
    %1030 = vmatpush2.bf16.msra.mxu0 0
    %1031 = vmatprep.subr.bf16.mxu0 0
    %1032 = vmatpush2.bf16.msra.mxu0 0
    %1033 = vmatprep.subr.bf16.mxu0 0
    %1034 = vmatpush2.bf16.msra.mxu0 0
    %1035 = vmatprep.subr.bf16.mxu0 0
    %1036 = vmatpush2.bf16.msra.mxu0 0
    %1037 = vmatprep.mubr.bf16.mxu0 0
    %1038 = vmatmul.mubr.bf16.gmra.mxu0 %v1003
    %v1039 = vpop.f32.mrf.mxu0
    %v1040 = vadd.f32 0.0, %v1039
    %v1041 = vpop.f32.mrf.mxu0
    %v1042 = vadd.f32 0.0, %v1041
    %v1043 = vpop.f32.mrf.mxu0
    %v1044 = vpop.f32.mrf.mxu0
    %1045 = vdwg.mxu0
    %1046 = vmatprep.subr.bf16.mxu0 0
    %1047 = vmatpush1.bf16.msra.mxu0 0
    %1048 = vmatprep.subr.bf16.mxu0 0
    %1049 = vmatpush1.bf16.msra.mxu0 0
    %1050 = vmatprep.subr.bf16.mxu0 0
    %1051 = vmatpush1.bf16.msra.mxu0 0
    %1052 = vmatprep.subr.bf16.mxu0 %v812
    %1053 = vmatpush1.bf16.msra.mxu0 %v811
    %1054 = vmatprep.subr.bf16.mxu0 %v780
    %1055 = vmatpush1.bf16.msra.mxu0 %v779
    %1056 = vmatprep.subr.bf16.mxu0 %v748
    %1057 = vmatpush1.bf16.msra.mxu0 %v747
    %1058 = vmatprep.subr.bf16.mxu0 %v716
    %1059 = vmatpush1.bf16.msra.mxu0 %v715
    %1060 = vmatprep.subr.bf16.mxu0 %v684
    %1061 = vmatpush1.bf16.msra.mxu0 %v683
    %1062 = vmatprep.subr.bf16.mxu0 0
    %1063 = vmatpush2.bf16.msra.mxu0 0
    %1064 = vmatprep.subr.bf16.mxu0 0
    %1065 = vmatpush2.bf16.msra.mxu0 0
    %1066 = vmatprep.subr.bf16.mxu0 0
    %1067 = vmatpush2.bf16.msra.mxu0 0
    %1068 = vmatprep.subr.bf16.mxu0 0
    %1069 = vmatpush2.bf16.msra.mxu0 0
    %1070 = vmatprep.subr.bf16.mxu0 0
    %1071 = vmatpush2.bf16.msra.mxu0 0
    %1072 = vmatprep.subr.bf16.mxu0 0
    %1073 = vmatpush2.bf16.msra.mxu0 0
    %1074 = vmatprep.subr.bf16.mxu0 0
    %1075 = vmatpush2.bf16.msra.mxu0 0
    %1076 = vmatprep.subr.bf16.mxu0 0
    %1077 = vmatpush2.bf16.msra.mxu0 0
    %1078 = vmatprep.mubr.bf16.mxu0 0
    %1079 = vmatmul.mubr.bf16.gmra.mxu0 %v1003
    %v1080 = vpop.f32.mrf.mxu0
    %v1081 = vadd.f32 0.0, %v1080
    %v1082 = vpop.f32.mrf.mxu0
    %v1083 = vadd.f32 0.0, %v1082
    %v1084 = vpop.f32.mrf.mxu0
    %v1085 = vpop.f32.mrf.mxu0
    %1086 = vdwg.mxu0
    %1087 = vmatprep.subr.bf16.mxu0 0
    %1088 = vmatpush1.bf16.msra.mxu0 0
    %1089 = vmatprep.subr.bf16.mxu0 0
    %1090 = vmatpush1.bf16.msra.mxu0 0
    %1091 = vmatprep.subr.bf16.mxu0 0
    %1092 = vmatpush1.bf16.msra.mxu0 0
    %1093 = vmatprep.subr.bf16.mxu0 %v814
    %1094 = vmatpush1.bf16.msra.mxu0 %v813
    %1095 = vmatprep.subr.bf16.mxu0 %v782
    %1096 = vmatpush1.bf16.msra.mxu0 %v781
    %1097 = vmatprep.subr.bf16.mxu0 %v750
    %1098 = vmatpush1.bf16.msra.mxu0 %v749
    %1099 = vmatprep.subr.bf16.mxu0 %v718
    %1100 = vmatpush1.bf16.msra.mxu0 %v717
    %1101 = vmatprep.subr.bf16.mxu0 %v686
    %1102 = vmatpush1.bf16.msra.mxu0 %v685
    %1103 = vmatprep.subr.bf16.mxu0 0
    %1104 = vmatpush2.bf16.msra.mxu0 0
    %1105 = vmatprep.subr.bf16.mxu0 0
    %1106 = vmatpush2.bf16.msra.mxu0 0
    %1107 = vmatprep.subr.bf16.mxu0 0
    %1108 = vmatpush2.bf16.msra.mxu0 0
    %1109 = vmatprep.subr.bf16.mxu0 0
    %1110 = vmatpush2.bf16.msra.mxu0 0
    %1111 = vmatprep.subr.bf16.mxu0 0
    %1112 = vmatpush2.bf16.msra.mxu0 0
    %1113 = vmatprep.subr.bf16.mxu0 0
    %1114 = vmatpush2.bf16.msra.mxu0 0
    %1115 = vmatprep.subr.bf16.mxu0 0
    %1116 = vmatpush2.bf16.msra.mxu0 0
    %1117 = vmatprep.subr.bf16.mxu0 0
    %1118 = vmatpush2.bf16.msra.mxu0 0
    %1119 = vmatprep.mubr.bf16.mxu0 0
    %1120 = vmatmul.mubr.bf16.gmra.mxu0 %v1003
    %v1121 = vpop.f32.mrf.mxu0
    %v1122 = vadd.f32 0.0, %v1121
    %v1123 = vpop.f32.mrf.mxu0
    %v1124 = vadd.f32 0.0, %v1123
    %v1125 = vpop.f32.mrf.mxu0
    %v1126 = vpop.f32.mrf.mxu0
    %1127 = vdwg.mxu0
    %1128 = vmatprep.subr.bf16.mxu0 0
    %1129 = vmatpush1.bf16.msra.mxu0 0
    %1130 = vmatprep.subr.bf16.mxu0 0
    %1131 = vmatpush1.bf16.msra.mxu0 0
    %1132 = vmatprep.subr.bf16.mxu0 0
    %1133 = vmatpush1.bf16.msra.mxu0 0
    %1134 = vmatprep.subr.bf16.mxu0 %v816
    %1135 = vmatpush1.bf16.msra.mxu0 %v815
    %1136 = vmatprep.subr.bf16.mxu0 %v784
    %1137 = vmatpush1.bf16.msra.mxu0 %v783
    %1138 = vmatprep.subr.bf16.mxu0 %v752
    %1139 = vmatpush1.bf16.msra.mxu0 %v751
    %1140 = vmatprep.subr.bf16.mxu0 %v720
    %1141 = vmatpush1.bf16.msra.mxu0 %v719
    %1142 = vmatprep.subr.bf16.mxu0 %v688
    %1143 = vmatpush1.bf16.msra.mxu0 %v687
    %1144 = vmatprep.subr.bf16.mxu0 0
    %1145 = vmatpush2.bf16.msra.mxu0 0
    %1146 = vmatprep.subr.bf16.mxu0 0
    %1147 = vmatpush2.bf16.msra.mxu0 0
    %1148 = vmatprep.subr.bf16.mxu0 0
    %1149 = vmatpush2.bf16.msra.mxu0 0
    %1150 = vmatprep.subr.bf16.mxu0 0
    %1151 = vmatpush2.bf16.msra.mxu0 0
    %1152 = vmatprep.subr.bf16.mxu0 0
    %1153 = vmatpush2.bf16.msra.mxu0 0
    %1154 = vmatprep.subr.bf16.mxu0 0
    %1155 = vmatpush2.bf16.msra.mxu0 0
    %1156 = vmatprep.subr.bf16.mxu0 0
    %1157 = vmatpush2.bf16.msra.mxu0 0
    %1158 = vmatprep.subr.bf16.mxu0 0
    %1159 = vmatpush2.bf16.msra.mxu0 0
    %1160 = vmatprep.mubr.bf16.mxu0 0
    %1161 = vmatmul.mubr.bf16.gmra.mxu0 %v1003
    %v1162 = vpop.f32.mrf.mxu0
    %v1163 = vadd.f32 0.0, %v1162
    %v1164 = vpop.f32.mrf.mxu0
    %v1165 = vadd.f32 0.0, %v1164
    %v1166 = vpop.f32.mrf.mxu0
    %v1167 = vpop.f32.mrf.mxu0
    %1168 = vdwg.mxu0
    %1169 = vmatprep.subr.bf16.mxu0 0
    %1170 = vmatpush1.bf16.msra.mxu0 0
    %1171 = vmatprep.subr.bf16.mxu0 0
    %1172 = vmatpush1.bf16.msra.mxu0 0
    %1173 = vmatprep.subr.bf16.mxu0 0
    %1174 = vmatpush1.bf16.msra.mxu0 0
    %1175 = vmatprep.subr.bf16.mxu0 %v818
    %1176 = vmatpush1.bf16.msra.mxu0 %v817
    %1177 = vmatprep.subr.bf16.mxu0 %v786
    %1178 = vmatpush1.bf16.msra.mxu0 %v785
    %1179 = vmatprep.subr.bf16.mxu0 %v754
    %1180 = vmatpush1.bf16.msra.mxu0 %v753
    %1181 = vmatprep.subr.bf16.mxu0 %v722
    %1182 = vmatpush1.bf16.msra.mxu0 %v721
    %1183 = vmatprep.subr.bf16.mxu0 %v690
    %1184 = vmatpush1.bf16.msra.mxu0 %v689
    %1185 = vmatprep.subr.bf16.mxu0 0
    %1186 = vmatpush2.bf16.msra.mxu0 0
    %1187 = vmatprep.subr.bf16.mxu0 0
    %1188 = vmatpush2.bf16.msra.mxu0 0
    %1189 = vmatprep.subr.bf16.mxu0 0
    %1190 = vmatpush2.bf16.msra.mxu0 0
    %1191 = vmatprep.subr.bf16.mxu0 0
    %1192 = vmatpush2.bf16.msra.mxu0 0
    %1193 = vmatprep.subr.bf16.mxu0 0
    %1194 = vmatpush2.bf16.msra.mxu0 0
    %1195 = vmatprep.subr.bf16.mxu0 0
    %1196 = vmatpush2.bf16.msra.mxu0 0
    %1197 = vmatprep.subr.bf16.mxu0 0
    %1198 = vmatpush2.bf16.msra.mxu0 0
    %1199 = vmatprep.subr.bf16.mxu0 0
    %1200 = vmatpush2.bf16.msra.mxu0 0
    %1201 = vmatprep.mubr.bf16.mxu0 0
    %1202 = vmatmul.mubr.bf16.gmra.mxu0 %v1003
    %v1203 = vpop.f32.mrf.mxu0
    %v1204 = vadd.f32 0.0, %v1203
    %v1205 = vpop.f32.mrf.mxu0
    %v1206 = vadd.f32 0.0, %v1205
    %v1207 = vpop.f32.mrf.mxu0
    %v1208 = vpop.f32.mrf.mxu0
    %1209 = vdwg.mxu0
    %1210 = vmatprep.subr.bf16.mxu0 0
    %1211 = vmatpush1.bf16.msra.mxu0 0
    %1212 = vmatprep.subr.bf16.mxu0 0
    %1213 = vmatpush1.bf16.msra.mxu0 0
    %1214 = vmatprep.subr.bf16.mxu0 0
    %1215 = vmatpush1.bf16.msra.mxu0 0
    %1216 = vmatprep.subr.bf16.mxu0 %v820
    %1217 = vmatpush1.bf16.msra.mxu0 %v819
    %1218 = vmatprep.subr.bf16.mxu0 %v788
    %1219 = vmatpush1.bf16.msra.mxu0 %v787
    %1220 = vmatprep.subr.bf16.mxu0 %v756
    %1221 = vmatpush1.bf16.msra.mxu0 %v755
    %1222 = vmatprep.subr.bf16.mxu0 %v724
    %1223 = vmatpush1.bf16.msra.mxu0 %v723
    %1224 = vmatprep.subr.bf16.mxu0 %v692
    %1225 = vmatpush1.bf16.msra.mxu0 %v691
    %1226 = vmatprep.subr.bf16.mxu0 0
    %1227 = vmatpush2.bf16.msra.mxu0 0
    %1228 = vmatprep.subr.bf16.mxu0 0
    %1229 = vmatpush2.bf16.msra.mxu0 0
    %1230 = vmatprep.subr.bf16.mxu0 0
    %1231 = vmatpush2.bf16.msra.mxu0 0
    %1232 = vmatprep.subr.bf16.mxu0 0
    %1233 = vmatpush2.bf16.msra.mxu0 0
    %1234 = vmatprep.subr.bf16.mxu0 0
    %1235 = vmatpush2.bf16.msra.mxu0 0
    %1236 = vmatprep.subr.bf16.mxu0 0
    %1237 = vmatpush2.bf16.msra.mxu0 0
    %1238 = vmatprep.subr.bf16.mxu0 0
    %1239 = vmatpush2.bf16.msra.mxu0 0
    %1240 = vmatprep.subr.bf16.mxu0 0
    %1241 = vmatpush2.bf16.msra.mxu0 0
    %1242 = vmatprep.mubr.bf16.mxu0 0
    %1243 = vmatmul.mubr.bf16.gmra.mxu0 %v1003
    %v1244 = vpop.f32.mrf.mxu0
    %v1245 = vadd.f32 0.0, %v1244
    %v1246 = vpop.f32.mrf.mxu0
    %v1247 = vadd.f32 0.0, %v1246
    %v1248 = vpop.f32.mrf.mxu0
    %v1249 = vpop.f32.mrf.mxu0
    %1250 = vdwg.mxu0
    %1251 = vmatprep.subr.bf16.mxu0 0
    %1252 = vmatpush1.bf16.msra.mxu0 0
    %1253 = vmatprep.subr.bf16.mxu0 0
    %1254 = vmatpush1.bf16.msra.mxu0 0
    %1255 = vmatprep.subr.bf16.mxu0 0
    %1256 = vmatpush1.bf16.msra.mxu0 0
    %1257 = vmatprep.subr.bf16.mxu0 %v822
    %1258 = vmatpush1.bf16.msra.mxu0 %v821
    %1259 = vmatprep.subr.bf16.mxu0 %v790
    %1260 = vmatpush1.bf16.msra.mxu0 %v789
    %1261 = vmatprep.subr.bf16.mxu0 %v758
    %1262 = vmatpush1.bf16.msra.mxu0 %v757
    %1263 = vmatprep.subr.bf16.mxu0 %v726
    %1264 = vmatpush1.bf16.msra.mxu0 %v725
    %1265 = vmatprep.subr.bf16.mxu0 %v694
    %1266 = vmatpush1.bf16.msra.mxu0 %v693
    %1267 = vmatprep.subr.bf16.mxu0 0
    %1268 = vmatpush2.bf16.msra.mxu0 0
    %1269 = vmatprep.subr.bf16.mxu0 0
    %1270 = vmatpush2.bf16.msra.mxu0 0
    %1271 = vmatprep.subr.bf16.mxu0 0
    %1272 = vmatpush2.bf16.msra.mxu0 0
    %1273 = vmatprep.subr.bf16.mxu0 0
    %1274 = vmatpush2.bf16.msra.mxu0 0
    %1275 = vmatprep.subr.bf16.mxu0 0
    %1276 = vmatpush2.bf16.msra.mxu0 0
    %1277 = vmatprep.subr.bf16.mxu0 0
    %1278 = vmatpush2.bf16.msra.mxu0 0
    %1279 = vmatprep.subr.bf16.mxu0 0
    %1280 = vmatpush2.bf16.msra.mxu0 0
    %1281 = vmatprep.subr.bf16.mxu0 0
    %1282 = vmatpush2.bf16.msra.mxu0 0
    %1283 = vmatprep.mubr.bf16.mxu0 0
    %1284 = vmatmul.mubr.bf16.gmra.mxu0 %v1003
    %v1285 = vpop.f32.mrf.mxu0
    %v1286 = vadd.f32 0.0, %v1285
    %v1287 = vpop.f32.mrf.mxu0
    %v1288 = vadd.f32 0.0, %v1287
    %v1289 = vpop.f32.mrf.mxu0
    %v1290 = vpop.f32.mrf.mxu0
    %1291 = vdwg.mxu0
    %1292 = vmatprep.subr.bf16.mxu0 0
    %1293 = vmatpush1.bf16.msra.mxu0 0
    %1294 = vmatprep.subr.bf16.mxu0 0
    %1295 = vmatpush1.bf16.msra.mxu0 0
    %1296 = vmatprep.subr.bf16.mxu0 0
    %1297 = vmatpush1.bf16.msra.mxu0 0
    %1298 = vmatprep.subr.bf16.mxu0 %v824
    %1299 = vmatpush1.bf16.msra.mxu0 %v823
    %1300 = vmatprep.subr.bf16.mxu0 %v792
    %1301 = vmatpush1.bf16.msra.mxu0 %v791
    %1302 = vmatprep.subr.bf16.mxu0 %v760
    %1303 = vmatpush1.bf16.msra.mxu0 %v759
    %1304 = vmatprep.subr.bf16.mxu0 %v728
    %1305 = vmatpush1.bf16.msra.mxu0 %v727
    %1306 = vmatprep.subr.bf16.mxu0 %v696
    %1307 = vmatpush1.bf16.msra.mxu0 %v695
    %1308 = vmatprep.subr.bf16.mxu0 0
    %1309 = vmatpush2.bf16.msra.mxu0 0
    %1310 = vmatprep.subr.bf16.mxu0 0
    %1311 = vmatpush2.bf16.msra.mxu0 0
    %1312 = vmatprep.subr.bf16.mxu0 0
    %1313 = vmatpush2.bf16.msra.mxu0 0
    %1314 = vmatprep.subr.bf16.mxu0 0
    %1315 = vmatpush2.bf16.msra.mxu0 0
    %1316 = vmatprep.subr.bf16.mxu0 0
    %1317 = vmatpush2.bf16.msra.mxu0 0
    %1318 = vmatprep.subr.bf16.mxu0 0
    %1319 = vmatpush2.bf16.msra.mxu0 0
    %1320 = vmatprep.subr.bf16.mxu0 0
    %1321 = vmatpush2.bf16.msra.mxu0 0
    %1322 = vmatprep.subr.bf16.mxu0 0
    %1323 = vmatpush2.bf16.msra.mxu0 0
    %1324 = vmatprep.mubr.bf16.mxu0 0
    %1325 = vmatmul.mubr.bf16.gmra.mxu0 %v1003
    %v1326 = vpop.f32.mrf.mxu0
    %v1327 = vadd.f32 0.0, %v1326
    %v1328 = vpop.f32.mrf.mxu0
    %v1329 = vadd.f32 0.0, %v1328
    %v1330 = vpop.f32.mrf.mxu0
    %v1331 = vpop.f32.mrf.mxu0
    %1332 = vdwg.mxu0
    %1333 = vmatprep.subr.bf16.mxu0 0
    %1334 = vmatpush1.bf16.msra.mxu0 0
    %1335 = vmatprep.subr.bf16.mxu0 0
    %1336 = vmatpush1.bf16.msra.mxu0 0
    %1337 = vmatprep.subr.bf16.mxu0 0
    %1338 = vmatpush1.bf16.msra.mxu0 0
    %1339 = vmatprep.subr.bf16.mxu0 %v826
    %1340 = vmatpush1.bf16.msra.mxu0 %v825
    %1341 = vmatprep.subr.bf16.mxu0 %v794
    %1342 = vmatpush1.bf16.msra.mxu0 %v793
    %1343 = vmatprep.subr.bf16.mxu0 %v762
    %1344 = vmatpush1.bf16.msra.mxu0 %v761
    %1345 = vmatprep.subr.bf16.mxu0 %v730
    %1346 = vmatpush1.bf16.msra.mxu0 %v729
    %1347 = vmatprep.subr.bf16.mxu0 %v698
    %1348 = vmatpush1.bf16.msra.mxu0 %v697
    %1349 = vmatprep.subr.bf16.mxu0 0
    %1350 = vmatpush2.bf16.msra.mxu0 0
    %1351 = vmatprep.subr.bf16.mxu0 0
    %1352 = vmatpush2.bf16.msra.mxu0 0
    %1353 = vmatprep.subr.bf16.mxu0 0
    %1354 = vmatpush2.bf16.msra.mxu0 0
    %1355 = vmatprep.subr.bf16.mxu0 0
    %1356 = vmatpush2.bf16.msra.mxu0 0
    %1357 = vmatprep.subr.bf16.mxu0 0
    %1358 = vmatpush2.bf16.msra.mxu0 0
    %1359 = vmatprep.subr.bf16.mxu0 0
    %1360 = vmatpush2.bf16.msra.mxu0 0
    %1361 = vmatprep.subr.bf16.mxu0 0
    %1362 = vmatpush2.bf16.msra.mxu0 0
    %1363 = vmatprep.subr.bf16.mxu0 0
    %1364 = vmatpush2.bf16.msra.mxu0 0
    %1365 = vmatprep.mubr.bf16.mxu0 0
    %1366 = vmatmul.mubr.bf16.gmra.mxu0 %v1003
    %v1367 = vpop.f32.mrf.mxu0
    %v1368 = vadd.f32 0.0, %v1367
    %v1369 = vpop.f32.mrf.mxu0
    %v1370 = vadd.f32 0.0, %v1369
    %v1371 = vpop.f32.mrf.mxu0
    %v1372 = vpop.f32.mrf.mxu0
    %1373 = vdwg.mxu0
    %1374 = vmatprep.subr.bf16.mxu0 0
    %1375 = vmatpush1.bf16.msra.mxu0 0
    %1376 = vmatprep.subr.bf16.mxu0 0
    %1377 = vmatpush1.bf16.msra.mxu0 0
    %1378 = vmatprep.subr.bf16.mxu0 0
    %1379 = vmatpush1.bf16.msra.mxu0 0
    %1380 = vmatprep.subr.bf16.mxu0 %v828
    %1381 = vmatpush1.bf16.msra.mxu0 %v827
    %1382 = vmatprep.subr.bf16.mxu0 %v796
    %1383 = vmatpush1.bf16.msra.mxu0 %v795
    %1384 = vmatprep.subr.bf16.mxu0 %v764
    %1385 = vmatpush1.bf16.msra.mxu0 %v763
    %1386 = vmatprep.subr.bf16.mxu0 %v732
    %1387 = vmatpush1.bf16.msra.mxu0 %v731
    %1388 = vmatprep.subr.bf16.mxu0 %v700
    %1389 = vmatpush1.bf16.msra.mxu0 %v699
    %1390 = vmatprep.subr.bf16.mxu0 0
    %1391 = vmatpush2.bf16.msra.mxu0 0
    %1392 = vmatprep.subr.bf16.mxu0 0
    %1393 = vmatpush2.bf16.msra.mxu0 0
    %1394 = vmatprep.subr.bf16.mxu0 0
    %1395 = vmatpush2.bf16.msra.mxu0 0
    %1396 = vmatprep.subr.bf16.mxu0 0
    %1397 = vmatpush2.bf16.msra.mxu0 0
    %1398 = vmatprep.subr.bf16.mxu0 0
    %1399 = vmatpush2.bf16.msra.mxu0 0
    %1400 = vmatprep.subr.bf16.mxu0 0
    %1401 = vmatpush2.bf16.msra.mxu0 0
    %1402 = vmatprep.subr.bf16.mxu0 0
    %1403 = vmatpush2.bf16.msra.mxu0 0
    %1404 = vmatprep.subr.bf16.mxu0 0
    %1405 = vmatpush2.bf16.msra.mxu0 0
    %1406 = vmatprep.mubr.bf16.mxu0 0
    %1407 = vmatmul.mubr.bf16.gmra.mxu0 %v1003
    %v1408 = vpop.f32.mrf.mxu0
    %v1409 = vadd.f32 0.0, %v1408
    %v1410 = vpop.f32.mrf.mxu0
    %v1411 = vadd.f32 0.0, %v1410
    %v1412 = vpop.f32.mrf.mxu0
    %v1413 = vpop.f32.mrf.mxu0
    %1414 = vdwg.mxu0
    %1415 = vmatprep.subr.bf16.mxu0 0
    %1416 = vmatpush1.bf16.msra.mxu0 0
    %1417 = vmatprep.subr.bf16.mxu0 0
    %1418 = vmatpush1.bf16.msra.mxu0 0
    %1419 = vmatprep.subr.bf16.mxu0 0
    %1420 = vmatpush1.bf16.msra.mxu0 0
    %1421 = vmatprep.subr.bf16.mxu0 %v830
    %1422 = vmatpush1.bf16.msra.mxu0 %v829
    %1423 = vmatprep.subr.bf16.mxu0 %v798
    %1424 = vmatpush1.bf16.msra.mxu0 %v797
    %1425 = vmatprep.subr.bf16.mxu0 %v766
    %1426 = vmatpush1.bf16.msra.mxu0 %v765
    %1427 = vmatprep.subr.bf16.mxu0 %v734
    %1428 = vmatpush1.bf16.msra.mxu0 %v733
    %1429 = vmatprep.subr.bf16.mxu0 %v702
    %1430 = vmatpush1.bf16.msra.mxu0 %v701
    %1431 = vmatprep.subr.bf16.mxu0 0
    %1432 = vmatpush2.bf16.msra.mxu0 0
    %1433 = vmatprep.subr.bf16.mxu0 0
    %1434 = vmatpush2.bf16.msra.mxu0 0
    %1435 = vmatprep.subr.bf16.mxu0 0
    %1436 = vmatpush2.bf16.msra.mxu0 0
    %1437 = vmatprep.subr.bf16.mxu0 0
    %1438 = vmatpush2.bf16.msra.mxu0 0
    %1439 = vmatprep.subr.bf16.mxu0 0
    %1440 = vmatpush2.bf16.msra.mxu0 0
    %1441 = vmatprep.subr.bf16.mxu0 0
    %1442 = vmatpush2.bf16.msra.mxu0 0
    %1443 = vmatprep.subr.bf16.mxu0 0
    %1444 = vmatpush2.bf16.msra.mxu0 0
    %1445 = vmatprep.subr.bf16.mxu0 0
    %1446 = vmatpush2.bf16.msra.mxu0 0
    %1447 = vmatprep.mubr.bf16.mxu0 0
    %1448 = vmatmul.mubr.bf16.gmra.mxu0 %v1003
    %v1449 = vpop.f32.mrf.mxu0
    %v1450 = vadd.f32 0.0, %v1449
    %v1451 = vpop.f32.mrf.mxu0
    %v1452 = vadd.f32 0.0, %v1451
    %v1453 = vpop.f32.mrf.mxu0
    %v1454 = vpop.f32.mrf.mxu0
    %1455 = vdwg.mxu0
    %1456 = vmatprep.subr.bf16.mxu0 0
    %1457 = vmatpush1.bf16.msra.mxu0 0
    %1458 = vmatprep.subr.bf16.mxu0 0
    %1459 = vmatpush1.bf16.msra.mxu0 0
    %1460 = vmatprep.subr.bf16.mxu0 0
    %1461 = vmatpush1.bf16.msra.mxu0 0
    %1462 = vmatprep.subr.bf16.mxu0 %v832
    %1463 = vmatpush1.bf16.msra.mxu0 %v831
    %1464 = vmatprep.subr.bf16.mxu0 %v800
    %1465 = vmatpush1.bf16.msra.mxu0 %v799
    %1466 = vmatprep.subr.bf16.mxu0 %v768
    %1467 = vmatpush1.bf16.msra.mxu0 %v767
    %1468 = vmatprep.subr.bf16.mxu0 %v736
    %1469 = vmatpush1.bf16.msra.mxu0 %v735
    %1470 = vmatprep.subr.bf16.mxu0 %v704
    %1471 = vmatpush1.bf16.msra.mxu0 %v703
    %1472 = vmatprep.subr.bf16.mxu0 0
    %1473 = vmatpush2.bf16.msra.mxu0 0
    %1474 = vmatprep.subr.bf16.mxu0 0
    %1475 = vmatpush2.bf16.msra.mxu0 0
    %1476 = vmatprep.subr.bf16.mxu0 0
    %1477 = vmatpush2.bf16.msra.mxu0 0
    %1478 = vmatprep.subr.bf16.mxu0 0
    %1479 = vmatpush2.bf16.msra.mxu0 0
    %1480 = vmatprep.subr.bf16.mxu0 0
    %1481 = vmatpush2.bf16.msra.mxu0 0
    %1482 = vmatprep.subr.bf16.mxu0 0
    %1483 = vmatpush2.bf16.msra.mxu0 0
    %1484 = vmatprep.subr.bf16.mxu0 0
    %1485 = vmatpush2.bf16.msra.mxu0 0
    %1486 = vmatprep.subr.bf16.mxu0 0
    %1487 = vmatpush2.bf16.msra.mxu0 0
    %1488 = vmatprep.mubr.bf16.mxu0 0
    %1489 = vmatmul.mubr.bf16.gmra.mxu0 %v1003
    %v1490 = vpop.f32.mrf.mxu0
    %v1491 = vadd.f32 0.0, %v1490
    %v1492 = vpop.f32.mrf.mxu0
    %v1493 = vadd.f32 0.0, %v1492
    %v1494 = vpop.f32.mrf.mxu0
    %v1495 = vpop.f32.mrf.mxu0
    %1496 = vdwg.mxu0
    %1497 = vmatprep.subr.bf16.mxu0 0
    %1498 = vmatpush1.bf16.msra.mxu0 0
    %1499 = vmatprep.subr.bf16.mxu0 0
    %1500 = vmatpush1.bf16.msra.mxu0 0
    %1501 = vmatprep.subr.bf16.mxu0 0
    %1502 = vmatpush1.bf16.msra.mxu0 0
    %1503 = vmatprep.subr.bf16.mxu0 %v834
    %1504 = vmatpush1.bf16.msra.mxu0 %v833
    %1505 = vmatprep.subr.bf16.mxu0 %v802
    %1506 = vmatpush1.bf16.msra.mxu0 %v801
    %1507 = vmatprep.subr.bf16.mxu0 %v770
    %1508 = vmatpush1.bf16.msra.mxu0 %v769
    %1509 = vmatprep.subr.bf16.mxu0 %v738
    %1510 = vmatpush1.bf16.msra.mxu0 %v737
    %1511 = vmatprep.subr.bf16.mxu0 %v706
    %1512 = vmatpush1.bf16.msra.mxu0 %v705
    %1513 = vmatprep.subr.bf16.mxu0 0
    %1514 = vmatpush2.bf16.msra.mxu0 0
    %1515 = vmatprep.subr.bf16.mxu0 0
    %1516 = vmatpush2.bf16.msra.mxu0 0
    %1517 = vmatprep.subr.bf16.mxu0 0
    %1518 = vmatpush2.bf16.msra.mxu0 0
    %1519 = vmatprep.subr.bf16.mxu0 0
    %1520 = vmatpush2.bf16.msra.mxu0 0
    %1521 = vmatprep.subr.bf16.mxu0 0
    %1522 = vmatpush2.bf16.msra.mxu0 0
    %1523 = vmatprep.subr.bf16.mxu0 0
    %1524 = vmatpush2.bf16.msra.mxu0 0
    %1525 = vmatprep.subr.bf16.mxu0 0
    %1526 = vmatpush2.bf16.msra.mxu0 0
    %1527 = vmatprep.subr.bf16.mxu0 0
    %1528 = vmatpush2.bf16.msra.mxu0 0
    %1529 = vmatprep.mubr.bf16.mxu0 0
    %1530 = vmatmul.mubr.bf16.gmra.mxu0 %v1003
    %v1531 = vpop.f32.mrf.mxu0
    %v1532 = vadd.f32 0.0, %v1531
    %v1533 = vpop.f32.mrf.mxu0
    %v1534 = vadd.f32 0.0, %v1533
    %v1535 = vpop.f32.mrf.mxu0
    %v1536 = vpop.f32.mrf.mxu0
    %1537 = vdwg.mxu0
    %1538 = vmatprep.subr.bf16.mxu0 0
    %1539 = vmatpush1.bf16.msra.mxu0 0
    %1540 = vmatprep.subr.bf16.mxu0 0
    %1541 = vmatpush1.bf16.msra.mxu0 0
    %1542 = vmatprep.subr.bf16.mxu0 0
    %1543 = vmatpush1.bf16.msra.mxu0 0
    %1544 = vmatprep.subr.bf16.mxu0 %v836
    %1545 = vmatpush1.bf16.msra.mxu0 %v835
    %1546 = vmatprep.subr.bf16.mxu0 %v804
    %1547 = vmatpush1.bf16.msra.mxu0 %v803
    %1548 = vmatprep.subr.bf16.mxu0 %v772
    %1549 = vmatpush1.bf16.msra.mxu0 %v771
    %1550 = vmatprep.subr.bf16.mxu0 %v740
    %1551 = vmatpush1.bf16.msra.mxu0 %v739
    %1552 = vmatprep.subr.bf16.mxu0 %v708
    %1553 = vmatpush1.bf16.msra.mxu0 %v707
    %1554 = vmatprep.subr.bf16.mxu0 0
    %1555 = vmatpush2.bf16.msra.mxu0 0
    %1556 = vmatprep.subr.bf16.mxu0 0
    %1557 = vmatpush2.bf16.msra.mxu0 0
    %1558 = vmatprep.subr.bf16.mxu0 0
    %1559 = vmatpush2.bf16.msra.mxu0 0
    %1560 = vmatprep.subr.bf16.mxu0 0
    %1561 = vmatpush2.bf16.msra.mxu0 0
    %1562 = vmatprep.subr.bf16.mxu0 0
    %1563 = vmatpush2.bf16.msra.mxu0 0
    %1564 = vmatprep.subr.bf16.mxu0 0
    %1565 = vmatpush2.bf16.msra.mxu0 0
    %1566 = vmatprep.subr.bf16.mxu0 0
    %1567 = vmatpush2.bf16.msra.mxu0 0
    %1568 = vmatprep.subr.bf16.mxu0 0
    %1569 = vmatpush2.bf16.msra.mxu0 0
    %1570 = vmatprep.mubr.bf16.mxu0 0
    %1571 = vmatmul.mubr.bf16.gmra.mxu0 %v1003
    %v1572 = vpop.f32.mrf.mxu0
    %v1573 = vadd.f32 0.0, %v1572
    %v1574 = vpop.f32.mrf.mxu0
    %v1575 = vadd.f32 0.0, %v1574
    %v1576 = vpop.f32.mrf.mxu0
    %v1577 = vpop.f32.mrf.mxu0
    %1578 = vdwg.mxu0
    %1579 = vmatprep.subr.bf16.mxu0 0
    %1580 = vmatpush1.bf16.msra.mxu0 0
    %1581 = vmatprep.subr.bf16.mxu0 0
    %1582 = vmatpush1.bf16.msra.mxu0 0
    %1583 = vmatprep.subr.bf16.mxu0 0
    %1584 = vmatpush1.bf16.msra.mxu0 0
    %1585 = vmatprep.subr.bf16.mxu0 %v838
    %1586 = vmatpush1.bf16.msra.mxu0 %v837
    %1587 = vmatprep.subr.bf16.mxu0 %v806
    %1588 = vmatpush1.bf16.msra.mxu0 %v805
    %1589 = vmatprep.subr.bf16.mxu0 %v774
    %1590 = vmatpush1.bf16.msra.mxu0 %v773
    %1591 = vmatprep.subr.bf16.mxu0 %v742
    %1592 = vmatpush1.bf16.msra.mxu0 %v741
    %1593 = vmatprep.subr.bf16.mxu0 %v710
    %1594 = vmatpush1.bf16.msra.mxu0 %v709
    %1595 = vmatprep.subr.bf16.mxu0 0
    %1596 = vmatpush2.bf16.msra.mxu0 0
    %1597 = vmatprep.subr.bf16.mxu0 0
    %1598 = vmatpush2.bf16.msra.mxu0 0
    %1599 = vmatprep.subr.bf16.mxu0 0
    %1600 = vmatpush2.bf16.msra.mxu0 0
    %1601 = vmatprep.subr.bf16.mxu0 0
    %1602 = vmatpush2.bf16.msra.mxu0 0
    %1603 = vmatprep.subr.bf16.mxu0 0
    %1604 = vmatpush2.bf16.msra.mxu0 0
    %1605 = vmatprep.subr.bf16.mxu0 0
    %1606 = vmatpush2.bf16.msra.mxu0 0
    %1607 = vmatprep.subr.bf16.mxu0 0
    %1608 = vmatpush2.bf16.msra.mxu0 0
    %1609 = vmatprep.subr.bf16.mxu0 0
    %1610 = vmatpush2.bf16.msra.mxu0 0
    %1611 = vmatprep.mubr.bf16.mxu0 0
    %1612 = vmatmul.mubr.bf16.gmra.mxu0 %v1003
    %v1613 = vpop.f32.mrf.mxu0
    %v1614 = vadd.f32 0.0, %v1613
    %v1615 = vpop.f32.mrf.mxu0
    %v1616 = vadd.f32 0.0, %v1615
    %v1617 = vpop.f32.mrf.mxu0
    %v1618 = vpop.f32.mrf.mxu0
    %1619 = vdwg.mxu0
    %1620 = vmatprep.subr.bf16.mxu0 0
    %1621 = vmatpush1.bf16.msra.mxu0 0
    %1622 = vmatprep.subr.bf16.mxu0 0
    %1623 = vmatpush1.bf16.msra.mxu0 0
    %1624 = vmatprep.subr.bf16.mxu0 0
    %1625 = vmatpush1.bf16.msra.mxu0 0
    %1626 = vmatprep.subr.bf16.mxu0 %v840
    %1627 = vmatpush1.bf16.msra.mxu0 %v839
    %1628 = vmatprep.subr.bf16.mxu0 %v808
    %1629 = vmatpush1.bf16.msra.mxu0 %v807
    %1630 = vmatprep.subr.bf16.mxu0 %v776
    %1631 = vmatpush1.bf16.msra.mxu0 %v775
    %1632 = vmatprep.subr.bf16.mxu0 %v744
    %1633 = vmatpush1.bf16.msra.mxu0 %v743
    %1634 = vmatprep.subr.bf16.mxu0 %v712
    %1635 = vmatpush1.bf16.msra.mxu0 %v711
    %1636 = vmatprep.subr.bf16.mxu0 0
    %1637 = vmatpush2.bf16.msra.mxu0 0
    %1638 = vmatprep.subr.bf16.mxu0 0
    %1639 = vmatpush2.bf16.msra.mxu0 0
    %1640 = vmatprep.subr.bf16.mxu0 0
    %1641 = vmatpush2.bf16.msra.mxu0 0
    %1642 = vmatprep.subr.bf16.mxu0 0
    %1643 = vmatpush2.bf16.msra.mxu0 0
    %1644 = vmatprep.subr.bf16.mxu0 0
    %1645 = vmatpush2.bf16.msra.mxu0 0
    %1646 = vmatprep.subr.bf16.mxu0 0
    %1647 = vmatpush2.bf16.msra.mxu0 0
    %1648 = vmatprep.subr.bf16.mxu0 0
    %1649 = vmatpush2.bf16.msra.mxu0 0
    %1650 = vmatprep.subr.bf16.mxu0 0
    %1651 = vmatpush2.bf16.msra.mxu0 0
    %1652 = vmatprep.mubr.bf16.mxu0 0
    %1653 = vmatmul.mubr.bf16.gmra.mxu0 %v1003
    %v1654 = vpop.f32.mrf.mxu0
    %v1655 = vadd.f32 0.0, %v1654
    %v1656 = vpop.f32.mrf.mxu0
    %v1657 = vadd.f32 0.0, %v1656
    %v1658 = vpop.f32.mrf.mxu0
    %v1659 = vpop.f32.mrf.mxu0
    %1660 = vdwg.mxu0
    %v1661 = vld [vmem:[%s2] sm:$0xff]
    %v1662 = vmax.f32 %v1040, %v1081
    %v1663 = vmax.f32 %v1042, %v1083
    %v1664 = vmax.f32 %v1662, %v1122
    %v1665 = vmax.f32 %v1663, %v1124
    %v1666 = vmax.f32 %v1664, %v1163
    %v1667 = vmax.f32 %v1665, %v1165
    %1669 = vset.pattern.permute.xlu0 0
    %1670 = vperm.xlu0 %1669, %v1661
    %v1671 = vpop.permute.xlu0 %1670
    %v1673 = vadd.f32 %v1666, %v1671
    %v1674 = vadd.f32 %v1667, %v1671
    %v1675 = vmax.f32 %v1673, 0.0
    %v1676 = vmax.f32 %v1674, 0.0
    %v1677 = vmax.f32 %v1204, %v1245
    %v1678 = vmax.f32 %v1206, %v1247
    %v1679 = vmax.f32 %v1677, %v1286
    %v1680 = vmax.f32 %v1678, %v1288
    %v1681 = vmax.f32 %v1679, %v1327
    %v1682 = vmax.f32 %v1680, %v1329
    %v1683 = vadd.f32 %v1681, %v1671
    %v1684 = vadd.f32 %v1682, %v1671
    %v1685 = vmax.f32 %v1683, 0.0
    %v1686 = vmax.f32 %v1684, 0.0
    %v1687 = vmax.f32 %v1368, %v1409
    %v1688 = vmax.f32 %v1370, %v1411
    %v1689 = vmax.f32 %v1687, %v1450
    %v1690 = vmax.f32 %v1688, %v1452
    %v1691 = vmax.f32 %v1689, %v1491
    %v1692 = vmax.f32 %v1690, %v1493
    %v1693 = vadd.f32 %v1691, %v1671
    %v1694 = vadd.f32 %v1692, %v1671
    %v1695 = vmax.f32 %v1693, 0.0
    %v1696 = vmax.f32 %v1694, 0.0
    %v1697 = vmax.f32 %v1532, %v1573
    %v1698 = vmax.f32 %v1534, %v1575
    %v1699 = vmax.f32 %v1697, %v1614
    %v1700 = vmax.f32 %v1698, %v1616
    %v1701 = vmax.f32 %v1699, %v1655
    %v1702 = vmax.f32 %v1700, %v1657
    %v1703 = vadd.f32 %v1701, %v1671
    %v1704 = vadd.f32 %v1702, %v1671
    %v1705 = vmax.f32 %v1703, 0.0
    %v1706 = vmax.f32 %v1704, 0.0
    %v1707 = vld [vmem:[%s3] sm:$0xff]
    %v1708 = vld [vmem:[%s3 + $0x8] sm:$0xff]
    %1711 = vrot.lane.b32.xlu0 %v1675, 127
    %v1712 = vpop.permute.xlu0 %1711
    %1713 = vrot.lane.b32.xlu0 %v1676, 127
    %v1714 = vpop.permute.xlu0 %1713
    %vm1715 = vcmask 1039360
    %v1716 = vsel %vm1715, %v1712, %v1714
    %v1720 = vsel %vm1715, %v1714, %v1712
    %1723 = vrot.lane.b32.xlu0 %v1685, 127
    %v1724 = vpop.permute.xlu0 %1723
    %1725 = vrot.lane.b32.xlu0 %v1686, 127
    %v1726 = vpop.permute.xlu0 %1725
    %v1727 = vsel %vm1715, %v1724, %v1726
    %v1731 = vsel %vm1715, %v1726, %v1724
    %1732 = vrot.lane.b32.xlu0 %v1675, 126
    %v1733 = vpop.permute.xlu0 %1732
    %1734 = vrot.lane.b32.xlu0 %v1676, 126
    %v1735 = vpop.permute.xlu0 %1734
    %vm1736 = vcmask 1031168
    %v1737 = vsel %vm1736, %v1733, %v1735
    %v1741 = vsel %vm1736, %v1735, %v1733
    %1744 = vrot.lane.b32.xlu0 %v1695, 127
    %v1745 = vpop.permute.xlu0 %1744
    %1746 = vrot.lane.b32.xlu0 %v1696, 127
    %v1747 = vpop.permute.xlu0 %1746
    %v1748 = vsel %vm1715, %v1745, %v1747
    %v1752 = vsel %vm1715, %v1747, %v1745
    %1755 = vrot.lane.b32.xlu0 %v1705, 127
    %v1756 = vpop.permute.xlu0 %1755
    %1757 = vrot.lane.b32.xlu0 %v1706, 127
    %v1758 = vpop.permute.xlu0 %1757
    %v1759 = vsel %vm1715, %v1756, %v1758
    %v1763 = vsel %vm1715, %v1758, %v1756
    %1764 = vrot.lane.b32.xlu0 %v1695, 126
    %v1765 = vpop.permute.xlu0 %1764
    %1766 = vrot.lane.b32.xlu0 %v1696, 126
    %v1767 = vpop.permute.xlu0 %1766
    %v1768 = vsel %vm1736, %v1765, %v1767
    %v1772 = vsel %vm1736, %v1767, %v1765
    %1773 = vrot.lane.b32.xlu0 %v1675, 121
    %v1774 = vpop.permute.xlu0 %1773
    %1775 = vrot.lane.b32.xlu0 %v1676, 121
    %v1776 = vpop.permute.xlu0 %1775
    %vm1777 = vcmask 990208
    %v1778 = vsel %vm1777, %v1774, %v1776
    %v1782 = vsel %vm1777, %v1776, %v1774
    %1783 = vrot.lane.b32.xlu0 %v1685, 121
    %v1784 = vpop.permute.xlu0 %1783
    %1785 = vrot.lane.b32.xlu0 %v1686, 121
    %v1786 = vpop.permute.xlu0 %1785
    %v1787 = vsel %vm1777, %v1784, %v1786
    %v1791 = vsel %vm1777, %v1786, %v1784
    %1792 = vrot.lane.b32.xlu0 %v1675, 120
    %v1793 = vpop.permute.xlu0 %1792
    %1794 = vrot.lane.b32.xlu0 %v1676, 120
    %v1795 = vpop.permute.xlu0 %1794
    %vm1796 = vcmask 982016
    %v1797 = vsel %vm1796, %v1793, %v1795
    %v1801 = vsel %vm1796, %v1795, %v1793
    %1802 = vrot.lane.b32.xlu0 %v1685, 120
    %v1803 = vpop.permute.xlu0 %1802
    %1804 = vrot.lane.b32.xlu0 %v1686, 120
    %v1805 = vpop.permute.xlu0 %1804
    %v1806 = vsel %vm1796, %v1803, %v1805
    %v1810 = vsel %vm1796, %v1805, %v1803
    %1811 = vrot.lane.b32.xlu0 %v1675, 119
    %v1812 = vpop.permute.xlu0 %1811
    %1813 = vrot.lane.b32.xlu0 %v1676, 119
    %v1814 = vpop.permute.xlu0 %1813
    %vm1815 = vcmask 973824
    %v1816 = vsel %vm1815, %v1812, %v1814
    %v1820 = vsel %vm1815, %v1814, %v1812
    %1821 = vrot.lane.b32.xlu0 %v1695, 121
    %v1822 = vpop.permute.xlu0 %1821
    %1823 = vrot.lane.b32.xlu0 %v1696, 121
    %v1824 = vpop.permute.xlu0 %1823
    %v1825 = vsel %vm1777, %v1822, %v1824
    %v1829 = vsel %vm1777, %v1824, %v1822
    %1830 = vrot.lane.b32.xlu0 %v1705, 121
    %v1831 = vpop.permute.xlu0 %1830
    %1832 = vrot.lane.b32.xlu0 %v1706, 121
    %v1833 = vpop.permute.xlu0 %1832
    %v1834 = vsel %vm1777, %v1831, %v1833
    %v1838 = vsel %vm1777, %v1833, %v1831
    %1839 = vrot.lane.b32.xlu0 %v1695, 120
    %v1840 = vpop.permute.xlu0 %1839
    %1841 = vrot.lane.b32.xlu0 %v1696, 120
    %v1842 = vpop.permute.xlu0 %1841
    %v1843 = vsel %vm1796, %v1840, %v1842
    %v1847 = vsel %vm1796, %v1842, %v1840
    %1848 = vrot.lane.b32.xlu0 %v1705, 120
    %v1849 = vpop.permute.xlu0 %1848
    %1850 = vrot.lane.b32.xlu0 %v1706, 120
    %v1851 = vpop.permute.xlu0 %1850
    %v1852 = vsel %vm1796, %v1849, %v1851
    %v1856 = vsel %vm1796, %v1851, %v1849
    %1857 = vrot.lane.b32.xlu0 %v1695, 119
    %v1858 = vpop.permute.xlu0 %1857
    %1859 = vrot.lane.b32.xlu0 %v1696, 119
    %v1860 = vpop.permute.xlu0 %1859
    %v1861 = vsel %vm1815, %v1858, %v1860
    %v1865 = vsel %vm1815, %v1860, %v1858
    %1866 = vrot.lane.b32.xlu0 %v1675, 114
    %v1867 = vpop.permute.xlu0 %1866
    %1868 = vrot.lane.b32.xlu0 %v1676, 114
    %v1869 = vpop.permute.xlu0 %1868
    %vm1870 = vcmask 932864
    %v1871 = vsel %vm1870, %v1867, %v1869
    %v1875 = vsel %vm1870, %v1869, %v1867
    %1876 = vrot.lane.b32.xlu0 %v1685, 114
    %v1877 = vpop.permute.xlu0 %1876
    %1878 = vrot.lane.b32.xlu0 %v1686, 114
    %v1879 = vpop.permute.xlu0 %1878
    %v1880 = vsel %vm1870, %v1877, %v1879
    %v1884 = vsel %vm1870, %v1879, %v1877
    %1885 = vrot.lane.b32.xlu0 %v1675, 113
    %v1886 = vpop.permute.xlu0 %1885
    %1887 = vrot.lane.b32.xlu0 %v1676, 113
    %v1888 = vpop.permute.xlu0 %1887
    %vm1889 = vcmask 924672
    %v1890 = vsel %vm1889, %v1886, %v1888
    %v1894 = vsel %vm1889, %v1888, %v1886
    %1895 = vrot.lane.b32.xlu0 %v1685, 113
    %v1896 = vpop.permute.xlu0 %1895
    %1897 = vrot.lane.b32.xlu0 %v1686, 113
    %v1898 = vpop.permute.xlu0 %1897
    %v1899 = vsel %vm1889, %v1896, %v1898
    %v1903 = vsel %vm1889, %v1898, %v1896
    %1904 = vrot.lane.b32.xlu0 %v1675, 112
    %v1905 = vpop.permute.xlu0 %1904
    %1906 = vrot.lane.b32.xlu0 %v1676, 112
    %v1907 = vpop.permute.xlu0 %1906
    %vm1908 = vcmask 916480
    %v1909 = vsel %vm1908, %v1905, %v1907
    %v1913 = vsel %vm1908, %v1907, %v1905
    %v1914 = vpack.c.bf16 %v1685, %v1675
    %v1915 = vpack.c.bf16 %v1686, %v1676
    %v1916 = vpack.c.bf16 %v1727, %v1716
    %v1917 = vpack.c.bf16 %v1731, %v1720
    %v1918 = vpack.c.bf16 %v1695, %v1737
    %v1919 = vpack.c.bf16 %v1696, %v1741
    %v1920 = vpack.c.bf16 %v1748, %v1705
    %v1921 = vpack.c.bf16 %v1752, %v1706
    %v1922 = vpack.c.bf16 %v1768, %v1759
    %v1923 = vpack.c.bf16 %v1772, %v1763
    %v1924 = vpack.c.bf16 %v1787, %v1778
    %v1925 = vpack.c.bf16 %v1791, %v1782
    %v1926 = vpack.c.bf16 %v1806, %v1797
    %v1927 = vpack.c.bf16 %v1810, %v1801
    %v1928 = vpack.c.bf16 %v1825, %v1816
    %v1929 = vpack.c.bf16 %v1829, %v1820
    %v1930 = vpack.c.bf16 %v1843, %v1834
    %v1931 = vpack.c.bf16 %v1847, %v1838
    %v1932 = vpack.c.bf16 %v1861, %v1852
    %v1933 = vpack.c.bf16 %v1865, %v1856
    %v1934 = vpack.c.bf16 %v1880, %v1871
    %v1935 = vpack.c.bf16 %v1884, %v1875
    %v1936 = vpack.c.bf16 %v1899, %v1890
    %v1937 = vpack.c.bf16 %v1903, %v1894
    %v1938 = vpack.c.bf16 %v1909, %v1909
    %v1939 = vpack.c.bf16 %v1913, %v1913
    %v1942 = vunpack.c.l.b16 %v1707
    %v1943 = vunpack.c.h.b16 %v1707
    %v1944 = vunpack.c.l.b16 %v1708
    %v1945 = vunpack.c.h.b16 %v1708
    %v1946 = vpack.c.b16 %v1944, %v1942
    %v1947 = vpack.c.b16 %v1945, %v1943
    %vm1949 = vcmask 588800
    %v1951 = vsel %vm1949, %v1947, 0
    %vm1953 = vcmask 1043456
    %v1955 = vsel %vm1953, %v1938, 0
    %v1958 = vsel %vm1953, %v1939, 0
    %1960 = vmatprep.subr.bf16.mxu0 %v1929
    %1961 = vmatpush1.bf16.msra.mxu0 %v1928
    %1962 = vmatprep.subr.bf16.mxu0 %v1927
    %1963 = vmatpush1.bf16.msra.mxu0 %v1926
    %1964 = vmatprep.subr.bf16.mxu0 %v1925
    %1965 = vmatpush1.bf16.msra.mxu0 %v1924
    %1966 = vmatprep.subr.bf16.mxu0 %v1923
    %1967 = vmatpush1.bf16.msra.mxu0 %v1922
    %1968 = vmatprep.subr.bf16.mxu0 %v1921
    %1969 = vmatpush1.bf16.msra.mxu0 %v1920
    %1970 = vmatprep.subr.bf16.mxu0 %v1919
    %1971 = vmatpush1.bf16.msra.mxu0 %v1918
    %1972 = vmatprep.subr.bf16.mxu0 %v1917
    %1973 = vmatpush1.bf16.msra.mxu0 %v1916
    %1974 = vmatprep.subr.bf16.mxu0 %v1915
    %1975 = vmatpush1.bf16.msra.mxu0 %v1914
    %1976 = vmatprep.subr.bf16.mxu0 0
    %1977 = vmatpush2.bf16.msra.mxu0 0
    %1978 = vmatprep.subr.bf16.mxu0 0
    %1979 = vmatpush2.bf16.msra.mxu0 0
    %1980 = vmatprep.subr.bf16.mxu0 0
    %1981 = vmatpush2.bf16.msra.mxu0 0
    %1982 = vmatprep.subr.bf16.mxu0 %v1958
    %1983 = vmatpush2.bf16.msra.mxu0 %v1955
    %1984 = vmatprep.subr.bf16.mxu0 %v1937
    %1985 = vmatpush2.bf16.msra.mxu0 %v1936
    %1986 = vmatprep.subr.bf16.mxu0 %v1935
    %1987 = vmatpush2.bf16.msra.mxu0 %v1934
    %1988 = vmatprep.subr.bf16.mxu0 %v1933
    %1989 = vmatpush2.bf16.msra.mxu0 %v1932
    %1990 = vmatprep.subr.bf16.mxu0 %v1931
    %1991 = vmatpush2.bf16.msra.mxu0 %v1930
    %1992 = vmatprep.mubr.bf16.mxu0 %v1951
    %1993 = vmatmul.mubr.bf16.gmra.mxu0 %v1946
    %v1994 = vpop.f32.mrf.mxu0
    %v1995 = vadd.f32 0.0, %v1994
    %v1996 = vpop.f32.mrf.mxu0
    %v1997 = vadd.f32 0.0, %v1996
    %v1998 = vpop.f32.mrf.mxu0
    %v1999 = vadd.f32 0.0, %v1998
    %v2000 = vpop.f32.mrf.mxu0
    %v2001 = vadd.f32 0.0, %v2000
    %2002 = vdwg.mxu0
    %2003 = vrot.lane.b32.xlu0 %v1685, 126
    %v2004 = vpop.permute.xlu0 %2003
    %2005 = vrot.lane.b32.xlu0 %v1686, 126
    %v2006 = vpop.permute.xlu0 %2005
    %v2007 = vsel %vm1736, %v2004, %v2006
    %v2011 = vsel %vm1736, %v2006, %v2004
    %2012 = vrot.lane.b32.xlu0 %v1705, 126
    %v2013 = vpop.permute.xlu0 %2012
    %2014 = vrot.lane.b32.xlu0 %v1706, 126
    %v2015 = vpop.permute.xlu0 %2014
    %v2016 = vsel %vm1736, %v2013, %v2015
    %v2020 = vsel %vm1736, %v2015, %v2013
    %2021 = vrot.lane.b32.xlu0 %v1685, 119
    %v2022 = vpop.permute.xlu0 %2021
    %2023 = vrot.lane.b32.xlu0 %v1686, 119
    %v2024 = vpop.permute.xlu0 %2023
    %v2025 = vsel %vm1815, %v2022, %v2024
    %v2029 = vsel %vm1815, %v2024, %v2022
    %2030 = vrot.lane.b32.xlu0 %v1705, 119
    %v2031 = vpop.permute.xlu0 %2030
    %2032 = vrot.lane.b32.xlu0 %v1706, 119
    %v2033 = vpop.permute.xlu0 %2032
    %v2034 = vsel %vm1815, %v2031, %v2033
    %v2038 = vsel %vm1815, %v2033, %v2031
    %2039 = vrot.lane.b32.xlu0 %v1685, 112
    %v2040 = vpop.permute.xlu0 %2039
    %2041 = vrot.lane.b32.xlu0 %v1686, 112
    %v2042 = vpop.permute.xlu0 %2041
    %v2043 = vsel %vm1908, %v2040, %v2042
    %v2047 = vsel %vm1908, %v2042, %v2040
    %v2048 = vpack.c.bf16 %v1716, %v1685
    %v2049 = vpack.c.bf16 %v1720, %v1686
    %v2050 = vpack.c.bf16 %v1737, %v1727
    %v2051 = vpack.c.bf16 %v1741, %v1731
    %v2052 = vpack.c.bf16 %v1705, %v2007
    %v2053 = vpack.c.bf16 %v1706, %v2011
    %v2054 = vpack.c.bf16 %v1759, %v1748
    %v2055 = vpack.c.bf16 %v1763, %v1752
    %v2056 = vpack.c.bf16 %v2016, %v1768
    %v2057 = vpack.c.bf16 %v2020, %v1772
    %v2058 = vpack.c.bf16 %v1797, %v1787
    %v2059 = vpack.c.bf16 %v1801, %v1791
    %v2060 = vpack.c.bf16 %v1816, %v1806
    %v2061 = vpack.c.bf16 %v1820, %v1810
    %v2062 = vpack.c.bf16 %v1834, %v2025
    %v2063 = vpack.c.bf16 %v1838, %v2029
    %v2064 = vpack.c.bf16 %v1852, %v1843
    %v2065 = vpack.c.bf16 %v1856, %v1847
    %v2066 = vpack.c.bf16 %v2034, %v1861
    %v2067 = vpack.c.bf16 %v2038, %v1865
    %v2068 = vpack.c.bf16 %v1890, %v1880
    %v2069 = vpack.c.bf16 %v1894, %v1884
    %v2070 = vpack.c.bf16 %v1909, %v1899
    %v2071 = vpack.c.bf16 %v1913, %v1903
    %v2072 = vpack.c.bf16 %v2043, %v2043
    %v2073 = vpack.c.bf16 %v2047, %v2047
    %v2075 = vsel %vm1953, %v2072, 0
    %v2078 = vsel %vm1953, %v2073, 0
    %2080 = vmatprep.subr.bf16.mxu0 %v2063
    %2081 = vmatpush1.bf16.msra.mxu0 %v2062
    %2082 = vmatprep.subr.bf16.mxu0 %v2061
    %2083 = vmatpush1.bf16.msra.mxu0 %v2060
    %2084 = vmatprep.subr.bf16.mxu0 %v2059
    %2085 = vmatpush1.bf16.msra.mxu0 %v2058
    %2086 = vmatprep.subr.bf16.mxu0 %v2057
    %2087 = vmatpush1.bf16.msra.mxu0 %v2056
    %2088 = vmatprep.subr.bf16.mxu0 %v2055
    %2089 = vmatpush1.bf16.msra.mxu0 %v2054
    %2090 = vmatprep.subr.bf16.mxu0 %v2053
    %2091 = vmatpush1.bf16.msra.mxu0 %v2052
    %2092 = vmatprep.subr.bf16.mxu0 %v2051
    %2093 = vmatpush1.bf16.msra.mxu0 %v2050
    %2094 = vmatprep.subr.bf16.mxu0 %v2049
    %2095 = vmatpush1.bf16.msra.mxu0 %v2048
    %2096 = vmatprep.subr.bf16.mxu0 0
    %2097 = vmatpush2.bf16.msra.mxu0 0
    %2098 = vmatprep.subr.bf16.mxu0 0
    %2099 = vmatpush2.bf16.msra.mxu0 0
    %2100 = vmatprep.subr.bf16.mxu0 0
    %2101 = vmatpush2.bf16.msra.mxu0 0
    %2102 = vmatprep.subr.bf16.mxu0 %v2078
    %2103 = vmatpush2.bf16.msra.mxu0 %v2075
    %2104 = vmatprep.subr.bf16.mxu0 %v2071
    %2105 = vmatpush2.bf16.msra.mxu0 %v2070
    %2106 = vmatprep.subr.bf16.mxu0 %v2069
    %2107 = vmatpush2.bf16.msra.mxu0 %v2068
    %2108 = vmatprep.subr.bf16.mxu0 %v2067
    %2109 = vmatpush2.bf16.msra.mxu0 %v2066
    %2110 = vmatprep.subr.bf16.mxu0 %v2065
    %2111 = vmatpush2.bf16.msra.mxu0 %v2064
    %2112 = vmatprep.mubr.bf16.mxu0 %v1951
    %2113 = vmatmul.mubr.bf16.gmra.mxu0 %v1946
    %v2114 = vpop.f32.mrf.mxu0
    %v2115 = vadd.f32 0.0, %v2114
    %v2116 = vpop.f32.mrf.mxu0
    %v2117 = vadd.f32 0.0, %v2116
    %v2118 = vpop.f32.mrf.mxu0
    %v2119 = vadd.f32 0.0, %v2118
    %v2120 = vpop.f32.mrf.mxu0
    %v2121 = vadd.f32 0.0, %v2120
    %2122 = vdwg.mxu0
    %v2123 = vmax.f32 %v1995, %v2115
    %v2124 = vmax.f32 %v1997, %v2117
    %v2125 = vmax.f32 %v1999, %v2119
    %v2126 = vmax.f32 %v2001, %v2121
    %2127 = vrot.lane.b32.xlu0 %v1695, 114
    %v2128 = vpop.permute.xlu0 %2127
    %2129 = vrot.lane.b32.xlu0 %v1696, 114
    %v2130 = vpop.permute.xlu0 %2129
    %v2131 = vsel %vm1870, %v2128, %v2130
    %v2135 = vsel %vm1870, %v2130, %v2128
    %2136 = vrot.lane.b32.xlu0 %v1705, 114
    %v2137 = vpop.permute.xlu0 %2136
    %2138 = vrot.lane.b32.xlu0 %v1706, 114
    %v2139 = vpop.permute.xlu0 %2138
    %v2140 = vsel %vm1870, %v2137, %v2139
    %v2144 = vsel %vm1870, %v2139, %v2137
    %2145 = vrot.lane.b32.xlu0 %v1695, 113
    %v2146 = vpop.permute.xlu0 %2145
    %2147 = vrot.lane.b32.xlu0 %v1696, 113
    %v2148 = vpop.permute.xlu0 %2147
    %v2149 = vsel %vm1889, %v2146, %v2148
    %v2153 = vsel %vm1889, %v2148, %v2146
    %2154 = vrot.lane.b32.xlu0 %v1705, 113
    %v2155 = vpop.permute.xlu0 %2154
    %2156 = vrot.lane.b32.xlu0 %v1706, 113
    %v2157 = vpop.permute.xlu0 %2156
    %v2158 = vsel %vm1889, %v2155, %v2157
    %v2162 = vsel %vm1889, %v2157, %v2155
    %2163 = vrot.lane.b32.xlu0 %v1695, 112
    %v2164 = vpop.permute.xlu0 %2163
    %2165 = vrot.lane.b32.xlu0 %v1696, 112
    %v2166 = vpop.permute.xlu0 %2165
    %v2167 = vsel %vm1908, %v2164, %v2166
    %v2171 = vsel %vm1908, %v2166, %v2164
    %v2172 = vpack.c.bf16 %v1705, %v1695
    %v2173 = vpack.c.bf16 %v1706, %v1696
    %v2174 = vpack.c.bf16 %v1778, %v1768
    %v2175 = vpack.c.bf16 %v1782, %v1772
    %v2176 = vpack.c.bf16 %v1834, %v1825
    %v2177 = vpack.c.bf16 %v1838, %v1829
    %v2178 = vpack.c.bf16 %v1871, %v1861
    %v2179 = vpack.c.bf16 %v1875, %v1865
    %v2180 = vpack.c.bf16 %v2140, %v2131
    %v2181 = vpack.c.bf16 %v2144, %v2135
    %v2182 = vpack.c.bf16 %v2158, %v2149
    %v2183 = vpack.c.bf16 %v2162, %v2153
    %v2184 = vpack.c.bf16 %v2167, %v2167
    %v2185 = vpack.c.bf16 %v2171, %v2171
    %v2187 = vsel %vm1953, %v2184, 0
    %v2190 = vsel %vm1953, %v2185, 0
    %2192 = vmatprep.subr.bf16.mxu0 %v2179
    %2193 = vmatpush1.bf16.msra.mxu0 %v2178
    %2194 = vmatprep.subr.bf16.mxu0 %v2065
    %2195 = vmatpush1.bf16.msra.mxu0 %v2064
    %2196 = vmatprep.subr.bf16.mxu0 %v2177
    %2197 = vmatpush1.bf16.msra.mxu0 %v2176
    %2198 = vmatprep.subr.bf16.mxu0 %v2061
    %2199 = vmatpush1.bf16.msra.mxu0 %v2060
    %2200 = vmatprep.subr.bf16.mxu0 %v2059
    %2201 = vmatpush1.bf16.msra.mxu0 %v2058
    %2202 = vmatprep.subr.bf16.mxu0 %v2175
    %2203 = vmatpush1.bf16.msra.mxu0 %v2174
    %2204 = vmatprep.subr.bf16.mxu0 %v2055
    %2205 = vmatpush1.bf16.msra.mxu0 %v2054
    %2206 = vmatprep.subr.bf16.mxu0 %v2173
    %2207 = vmatpush1.bf16.msra.mxu0 %v2172
    %2208 = vmatprep.subr.bf16.mxu0 0
    %2209 = vmatpush2.bf16.msra.mxu0 0
    %2210 = vmatprep.subr.bf16.mxu0 0
    %2211 = vmatpush2.bf16.msra.mxu0 0
    %2212 = vmatprep.subr.bf16.mxu0 0
    %2213 = vmatpush2.bf16.msra.mxu0 0
    %2214 = vmatprep.subr.bf16.mxu0 %v2190
    %2215 = vmatpush2.bf16.msra.mxu0 %v2187
    %2216 = vmatprep.subr.bf16.mxu0 %v2183
    %2217 = vmatpush2.bf16.msra.mxu0 %v2182
    %2218 = vmatprep.subr.bf16.mxu0 %v2181
    %2219 = vmatpush2.bf16.msra.mxu0 %v2180
    %2220 = vmatprep.subr.bf16.mxu0 %v2071
    %2221 = vmatpush2.bf16.msra.mxu0 %v2070
    %2222 = vmatprep.subr.bf16.mxu0 %v2069
    %2223 = vmatpush2.bf16.msra.mxu0 %v2068
    %2224 = vmatprep.mubr.bf16.mxu0 %v1951
    %2225 = vmatmul.mubr.bf16.gmra.mxu0 %v1946
    %v2226 = vpop.f32.mrf.mxu0
    %v2227 = vadd.f32 0.0, %v2226
    %v2228 = vpop.f32.mrf.mxu0
    %v2229 = vadd.f32 0.0, %v2228
    %v2230 = vpop.f32.mrf.mxu0
    %v2231 = vadd.f32 0.0, %v2230
    %v2232 = vpop.f32.mrf.mxu0
    %v2233 = vadd.f32 0.0, %v2232
    %2234 = vdwg.mxu0
    %v2235 = vmax.f32 %v2123, %v2227
    %v2236 = vmax.f32 %v2124, %v2229
    %v2237 = vmax.f32 %v2125, %v2231
    %v2238 = vmax.f32 %v2126, %v2233
    %2239 = vrot.lane.b32.xlu0 %v1705, 112
    %v2240 = vpop.permute.xlu0 %2239
    %2241 = vrot.lane.b32.xlu0 %v1706, 112
    %v2242 = vpop.permute.xlu0 %2241
    %v2243 = vsel %vm1908, %v2240, %v2242
    %v2247 = vsel %vm1908, %v2242, %v2240
    %v2248 = vpack.c.bf16 %v1787, %v2016
    %v2249 = vpack.c.bf16 %v1791, %v2020
    %v2250 = vpack.c.bf16 %v2025, %v1816
    %v2251 = vpack.c.bf16 %v2029, %v1820
    %v2252 = vpack.c.bf16 %v1880, %v2034
    %v2253 = vpack.c.bf16 %v1884, %v2038
    %v2254 = vpack.c.bf16 %v2043, %v1909
    %v2255 = vpack.c.bf16 %v2047, %v1913
    %v2256 = vpack.c.bf16 %v2149, %v2140
    %v2257 = vpack.c.bf16 %v2153, %v2144
    %v2258 = vpack.c.bf16 %v2167, %v2158
    %v2259 = vpack.c.bf16 %v2171, %v2162
    %v2260 = vpack.c.bf16 %v2243, %v2243
    %v2261 = vpack.c.bf16 %v2247, %v2247
    %v2263 = vsel %vm1953, %v2260, 0
    %v2266 = vsel %vm1953, %v2261, 0
    %2268 = vmatprep.subr.bf16.mxu0 %v2253
    %2269 = vmatpush1.bf16.msra.mxu0 %v2252
    %2270 = vmatprep.subr.bf16.mxu0 %v1933
    %2271 = vmatpush1.bf16.msra.mxu0 %v1932
    %2272 = vmatprep.subr.bf16.mxu0 %v1931
    %2273 = vmatpush1.bf16.msra.mxu0 %v1930
    %2274 = vmatprep.subr.bf16.mxu0 %v2251
    %2275 = vmatpush1.bf16.msra.mxu0 %v2250
    %2276 = vmatprep.subr.bf16.mxu0 %v1927
    %2277 = vmatpush1.bf16.msra.mxu0 %v1926
    %2278 = vmatprep.subr.bf16.mxu0 %v2249
    %2279 = vmatpush1.bf16.msra.mxu0 %v2248
    %2280 = vmatprep.subr.bf16.mxu0 %v1923
    %2281 = vmatpush1.bf16.msra.mxu0 %v1922
    %2282 = vmatprep.subr.bf16.mxu0 %v1921
    %2283 = vmatpush1.bf16.msra.mxu0 %v1920
    %2284 = vmatprep.subr.bf16.mxu0 0
    %2285 = vmatpush2.bf16.msra.mxu0 0
    %2286 = vmatprep.subr.bf16.mxu0 0
    %2287 = vmatpush2.bf16.msra.mxu0 0
    %2288 = vmatprep.subr.bf16.mxu0 0
    %2289 = vmatpush2.bf16.msra.mxu0 0
    %2290 = vmatprep.subr.bf16.mxu0 %v2266
    %2291 = vmatpush2.bf16.msra.mxu0 %v2263
    %2292 = vmatprep.subr.bf16.mxu0 %v2259
    %2293 = vmatpush2.bf16.msra.mxu0 %v2258
    %2294 = vmatprep.subr.bf16.mxu0 %v2257
    %2295 = vmatpush2.bf16.msra.mxu0 %v2256
    %2296 = vmatprep.subr.bf16.mxu0 %v2255
    %2297 = vmatpush2.bf16.msra.mxu0 %v2254
    %2298 = vmatprep.subr.bf16.mxu0 %v1937
    %2299 = vmatpush2.bf16.msra.mxu0 %v1936
    %2300 = vmatprep.mubr.bf16.mxu0 %v1951
    %2301 = vmatmul.mubr.bf16.gmra.mxu0 %v1946
    %v2302 = vpop.f32.mrf.mxu0
    %v2303 = vadd.f32 0.0, %v2302
    %v2304 = vpop.f32.mrf.mxu0
    %v2305 = vadd.f32 0.0, %v2304
    %v2306 = vpop.f32.mrf.mxu0
    %v2307 = vadd.f32 0.0, %v2306
    %v2308 = vpop.f32.mrf.mxu0
    %v2309 = vadd.f32 0.0, %v2308
    %2310 = vdwg.mxu0
    %v2311 = vmax.f32 %v2235, %v2303
    %v2312 = vmax.f32 %v2236, %v2305
    %v2313 = vmax.f32 %v2237, %v2307
    %v2314 = vmax.f32 %v2238, %v2309
    %v2315 = vld [vmem:[%s4] sm:$0xff]
    %v2316 = vld [vmem:[%s4 + $0x8] sm:$0xff]
    %2318 = vset.pattern.permute.xlu0 0
    %2319 = vperm.xlu0 %2318, %v2315
    %v2320 = vpop.permute.xlu0 %2319
    %2323 = vset.pattern.permute.xlu0 0
    %2324 = vperm.xlu0 %2323, %v2316
    %v2325 = vpop.permute.xlu0 %2324
    %v2327 = vadd.f32 %v2311, %v2320
    %v2328 = vadd.f32 %v2312, %v2320
    %v2329 = vadd.f32 %v2313, %v2325
    %v2330 = vadd.f32 %v2314, %v2325
    %v2331 = vmax.f32 %v2327, 0.0
    %v2332 = vmax.f32 %v2328, 0.0
    %v2333 = vmax.f32 %v2329, 0.0
    %v2334 = vmax.f32 %v2330, 0.0
    %v2336 = vrot.slane %v2332, 7
    %vm2338 = vcmask 1040384
    %v2339 = vsel %vm2338, %v2331, %v2336
    %v2340 = vpack.c.bf16 %v2339, %v2339
    %v2341 = vld [vmem:[%s5] sm:$0xf]
    %v2342 = vld [vmem:[%s5 + $0x4] sm:$0xf]
    %v2343 = vld [vmem:[%s5 + $0x8] sm:$0xf]
    %v2344 = vld [vmem:[%s5 + $0xc] sm:$0xf]
    %v2345 = vld [vmem:[%s5 + $0x10] sm:$0xf]
    %v2346 = vld [vmem:[%s5 + $0x14] sm:$0xf]
    %v2347 = vld [vmem:[%s5 + $0x18] sm:$0xf]
    %v2348 = vld [vmem:[%s5 + $0x1c] sm:$0xf]
    %v2349 = vld [vmem:[%s5 + $0x20] sm:$0xf]
    %v2350 = vld [vmem:[%s5 + $0x24] sm:$0xf]
    %v2351 = vld [vmem:[%s5 + $0x28] sm:$0xf]
    %v2352 = vld [vmem:[%s5 + $0x2c] sm:$0xf]
    %v2353 = vld [vmem:[%s5 + $0x30] sm:$0xf]
    %v2354 = vld [vmem:[%s5 + $0x34] sm:$0xf]
    %v2355 = vld [vmem:[%s5 + $0x38] sm:$0xf]
    %v2356 = vld [vmem:[%s5 + $0x3c] sm:$0xf]
    %v2358 = vrot.slane %v2331, 1
    %v2360 = vsel %vm2338, %v2358, %v2332
    %v2361 = vpack.c.bf16 %v2360, %v2360
    %s2362 = scalar_lea.vmem %s5, 64
    %v2363 = vld [vmem:[%s2362] sm:$0xf]
    %v2364 = vld [vmem:[%s2362 + $0x4] sm:$0xf]
    %v2365 = vld [vmem:[%s2362 + $0x8] sm:$0xf]
    %v2366 = vld [vmem:[%s2362 + $0xc] sm:$0xf]
    %v2367 = vld [vmem:[%s2362 + $0x10] sm:$0xf]
    %v2368 = vld [vmem:[%s2362 + $0x14] sm:$0xf]
    %v2369 = vld [vmem:[%s2362 + $0x18] sm:$0xf]
    %v2370 = vld [vmem:[%s2362 + $0x1c] sm:$0xf]
    %v2371 = vld [vmem:[%s2362 + $0x20] sm:$0xf]
    %v2372 = vld [vmem:[%s2362 + $0x24] sm:$0xf]
    %v2373 = vld [vmem:[%s2362 + $0x28] sm:$0xf]
    %v2374 = vld [vmem:[%s2362 + $0x2c] sm:$0xf]
    %v2375 = vld [vmem:[%s2362 + $0x30] sm:$0xf]
    %v2376 = vld [vmem:[%s2362 + $0x34] sm:$0xf]
    %v2377 = vld [vmem:[%s2362 + $0x38] sm:$0xf]
    %v2378 = vld [vmem:[%s2362 + $0x3c] sm:$0xf]
    %v2395 = vunpack.c.l.b16 %v2363
    %v2396 = vunpack.c.l.b16 %v2364
    %v2397 = vunpack.c.l.b16 %v2365
    %v2398 = vunpack.c.l.b16 %v2366
    %v2399 = vunpack.c.l.b16 %v2367
    %v2400 = vunpack.c.l.b16 %v2368
    %v2401 = vunpack.c.l.b16 %v2369
    %v2402 = vunpack.c.l.b16 %v2370
    %v2403 = vunpack.c.l.b16 %v2371
    %v2404 = vunpack.c.l.b16 %v2372
    %v2405 = vunpack.c.l.b16 %v2373
    %v2406 = vunpack.c.l.b16 %v2374
    %v2407 = vunpack.c.l.b16 %v2375
    %v2408 = vunpack.c.l.b16 %v2376
    %v2409 = vunpack.c.l.b16 %v2377
    %v2410 = vunpack.c.l.b16 %v2378
    %v2411 = vpack.c.b16 %v2396, %v2395
    %v2412 = vpack.c.b16 %v2398, %v2397
    %v2413 = vpack.c.b16 %v2400, %v2399
    %v2414 = vpack.c.b16 %v2402, %v2401
    %v2415 = vpack.c.b16 %v2404, %v2403
    %v2416 = vpack.c.b16 %v2406, %v2405
    %v2417 = vpack.c.b16 %v2408, %v2407
    %v2418 = vpack.c.b16 %v2410, %v2409
    %2427 = vmatprep.subr.bf16.mxu0 0
    %2428 = vmatpush1.bf16.msra.mxu0 %v2418
    %2429 = vmatprep.subr.bf16.mxu0 0
    %2430 = vmatpush1.bf16.msra.mxu0 %v2417
    %2431 = vmatprep.subr.bf16.mxu0 0
    %2432 = vmatpush1.bf16.msra.mxu0 %v2416
    %2433 = vmatprep.subr.bf16.mxu0 0
    %2434 = vmatpush1.bf16.msra.mxu0 %v2415
    %2435 = vmatprep.subr.bf16.mxu0 0
    %2436 = vmatpush1.bf16.msra.mxu0 %v2414
    %2437 = vmatprep.subr.bf16.mxu0 0
    %2438 = vmatpush1.bf16.msra.mxu0 %v2413
    %2439 = vmatprep.subr.bf16.mxu0 0
    %2440 = vmatpush1.bf16.msra.mxu0 %v2412
    %2441 = vmatprep.subr.bf16.mxu0 0
    %2442 = vmatpush1.bf16.msra.mxu0 %v2411
    %2443 = vmatprep.subr.bf16.mxu0 0
    %2444 = vmatpush2.bf16.msra.mxu0 0
    %2445 = vmatprep.subr.bf16.mxu0 0
    %2446 = vmatpush2.bf16.msra.mxu0 0
    %2447 = vmatprep.subr.bf16.mxu0 0
    %2448 = vmatpush2.bf16.msra.mxu0 0
    %2449 = vmatprep.subr.bf16.mxu0 0
    %2450 = vmatpush2.bf16.msra.mxu0 0
    %2451 = vmatprep.subr.bf16.mxu0 0
    %2452 = vmatpush2.bf16.msra.mxu0 0
    %2453 = vmatprep.subr.bf16.mxu0 0
    %2454 = vmatpush2.bf16.msra.mxu0 0
    %2455 = vmatprep.subr.bf16.mxu0 0
    %2456 = vmatpush2.bf16.msra.mxu0 0
    %2457 = vmatprep.subr.bf16.mxu0 0
    %2458 = vmatpush2.bf16.msra.mxu0 0
    %2459 = vmatprep.mubr.bf16.mxu0 0
    %2460 = vmatmul.mubr.bf16.gmra.mxu0 %v2361
    %v2461 = vpop.f32.mrf.mxu0
    %v2462 = vadd.f32 0.0, %v2461
    %v2463 = vpop.f32.mrf.mxu0
    %v2464 = vpop.f32.mrf.mxu0
    %v2465 = vpop.f32.mrf.mxu0
    %2466 = vdwg.mxu0
    %v2483 = vunpack.c.l.b16 %v2341
    %v2484 = vunpack.c.l.b16 %v2342
    %v2485 = vunpack.c.l.b16 %v2343
    %v2486 = vunpack.c.l.b16 %v2344
    %v2487 = vunpack.c.l.b16 %v2345
    %v2488 = vunpack.c.l.b16 %v2346
    %v2489 = vunpack.c.l.b16 %v2347
    %v2490 = vunpack.c.l.b16 %v2348
    %v2491 = vunpack.c.l.b16 %v2349
    %v2492 = vunpack.c.l.b16 %v2350
    %v2493 = vunpack.c.l.b16 %v2351
    %v2494 = vunpack.c.l.b16 %v2352
    %v2495 = vunpack.c.l.b16 %v2353
    %v2496 = vunpack.c.l.b16 %v2354
    %v2497 = vunpack.c.l.b16 %v2355
    %v2498 = vunpack.c.l.b16 %v2356
    %v2499 = vpack.c.b16 %v2484, %v2483
    %v2500 = vpack.c.b16 %v2486, %v2485
    %v2501 = vpack.c.b16 %v2488, %v2487
    %v2502 = vpack.c.b16 %v2490, %v2489
    %v2503 = vpack.c.b16 %v2492, %v2491
    %v2504 = vpack.c.b16 %v2494, %v2493
    %v2505 = vpack.c.b16 %v2496, %v2495
    %v2506 = vpack.c.b16 %v2498, %v2497
    %2515 = vmatprep.subr.bf16.mxu0 0
    %2516 = vmatpush1.bf16.msra.mxu0 %v2506
    %2517 = vmatprep.subr.bf16.mxu0 0
    %2518 = vmatpush1.bf16.msra.mxu0 %v2505
    %2519 = vmatprep.subr.bf16.mxu0 0
    %2520 = vmatpush1.bf16.msra.mxu0 %v2504
    %2521 = vmatprep.subr.bf16.mxu0 0
    %2522 = vmatpush1.bf16.msra.mxu0 %v2503
    %2523 = vmatprep.subr.bf16.mxu0 0
    %2524 = vmatpush1.bf16.msra.mxu0 %v2502
    %2525 = vmatprep.subr.bf16.mxu0 0
    %2526 = vmatpush1.bf16.msra.mxu0 %v2501
    %2527 = vmatprep.subr.bf16.mxu0 0
    %2528 = vmatpush1.bf16.msra.mxu0 %v2500
    %2529 = vmatprep.subr.bf16.mxu0 0
    %2530 = vmatpush1.bf16.msra.mxu0 %v2499
    %2531 = vmatprep.subr.bf16.mxu0 0
    %2532 = vmatpush2.bf16.msra.mxu0 0
    %2533 = vmatprep.subr.bf16.mxu0 0
    %2534 = vmatpush2.bf16.msra.mxu0 0
    %2535 = vmatprep.subr.bf16.mxu0 0
    %2536 = vmatpush2.bf16.msra.mxu0 0
    %2537 = vmatprep.subr.bf16.mxu0 0
    %2538 = vmatpush2.bf16.msra.mxu0 0
    %2539 = vmatprep.subr.bf16.mxu0 0
    %2540 = vmatpush2.bf16.msra.mxu0 0
    %2541 = vmatprep.subr.bf16.mxu0 0
    %2542 = vmatpush2.bf16.msra.mxu0 0
    %2543 = vmatprep.subr.bf16.mxu0 0
    %2544 = vmatpush2.bf16.msra.mxu0 0
    %2545 = vmatprep.subr.bf16.mxu0 0
    %2546 = vmatpush2.bf16.msra.mxu0 0
    %2547 = vmatprep.mubr.bf16.mxu0 0
    %2548 = vmatmul.mubr.bf16.gmra.mxu0 %v2340
    %v2549 = vpop.f32.mrf.mxu0
    %v2550 = vadd.f32 %v2462, %v2549
    %v2551 = vpop.f32.mrf.mxu0
    %v2552 = vpop.f32.mrf.mxu0
    %v2553 = vpop.f32.mrf.mxu0
    %2554 = vdwg.mxu0
    %v2555 = vrot.slane %v2331, 2
    %v2557 = vrot.slane %v2332, 1
    %v2559 = vsel %vm2338, %v2555, %v2557
    %v2560 = vpack.c.bf16 %v2559, %v2559
    %s2561 = scalar_lea.vmem %s5, 128
    %v2562 = vld [vmem:[%s2561] sm:$0xf]
    %v2563 = vld [vmem:[%s2561 + $0x4] sm:$0xf]
    %v2564 = vld [vmem:[%s2561 + $0x8] sm:$0xf]
    %v2565 = vld [vmem:[%s2561 + $0xc] sm:$0xf]
    %v2566 = vld [vmem:[%s2561 + $0x10] sm:$0xf]
    %v2567 = vld [vmem:[%s2561 + $0x14] sm:$0xf]
    %v2568 = vld [vmem:[%s2561 + $0x18] sm:$0xf]
    %v2569 = vld [vmem:[%s2561 + $0x1c] sm:$0xf]
    %v2570 = vld [vmem:[%s2561 + $0x20] sm:$0xf]
    %v2571 = vld [vmem:[%s2561 + $0x24] sm:$0xf]
    %v2572 = vld [vmem:[%s2561 + $0x28] sm:$0xf]
    %v2573 = vld [vmem:[%s2561 + $0x2c] sm:$0xf]
    %v2574 = vld [vmem:[%s2561 + $0x30] sm:$0xf]
    %v2575 = vld [vmem:[%s2561 + $0x34] sm:$0xf]
    %v2576 = vld [vmem:[%s2561 + $0x38] sm:$0xf]
    %v2577 = vld [vmem:[%s2561 + $0x3c] sm:$0xf]
    %v2594 = vunpack.c.l.b16 %v2562
    %v2595 = vunpack.c.l.b16 %v2563
    %v2596 = vunpack.c.l.b16 %v2564
    %v2597 = vunpack.c.l.b16 %v2565
    %v2598 = vunpack.c.l.b16 %v2566
    %v2599 = vunpack.c.l.b16 %v2567
    %v2600 = vunpack.c.l.b16 %v2568
    %v2601 = vunpack.c.l.b16 %v2569
    %v2602 = vunpack.c.l.b16 %v2570
    %v2603 = vunpack.c.l.b16 %v2571
    %v2604 = vunpack.c.l.b16 %v2572
    %v2605 = vunpack.c.l.b16 %v2573
    %v2606 = vunpack.c.l.b16 %v2574
    %v2607 = vunpack.c.l.b16 %v2575
    %v2608 = vunpack.c.l.b16 %v2576
    %v2609 = vunpack.c.l.b16 %v2577
    %v2610 = vpack.c.b16 %v2595, %v2594
    %v2611 = vpack.c.b16 %v2597, %v2596
    %v2612 = vpack.c.b16 %v2599, %v2598
    %v2613 = vpack.c.b16 %v2601, %v2600
    %v2614 = vpack.c.b16 %v2603, %v2602
    %v2615 = vpack.c.b16 %v2605, %v2604
    %v2616 = vpack.c.b16 %v2607, %v2606
    %v2617 = vpack.c.b16 %v2609, %v2608
    %2626 = vmatprep.subr.bf16.mxu0 0
    %2627 = vmatpush1.bf16.msra.mxu0 %v2617
    %2628 = vmatprep.subr.bf16.mxu0 0
    %2629 = vmatpush1.bf16.msra.mxu0 %v2616
    %2630 = vmatprep.subr.bf16.mxu0 0
    %2631 = vmatpush1.bf16.msra.mxu0 %v2615
    %2632 = vmatprep.subr.bf16.mxu0 0
    %2633 = vmatpush1.bf16.msra.mxu0 %v2614
    %2634 = vmatprep.subr.bf16.mxu0 0
    %2635 = vmatpush1.bf16.msra.mxu0 %v2613
    %2636 = vmatprep.subr.bf16.mxu0 0
    %2637 = vmatpush1.bf16.msra.mxu0 %v2612
    %2638 = vmatprep.subr.bf16.mxu0 0
    %2639 = vmatpush1.bf16.msra.mxu0 %v2611
    %2640 = vmatprep.subr.bf16.mxu0 0
    %2641 = vmatpush1.bf16.msra.mxu0 %v2610
    %2642 = vmatprep.subr.bf16.mxu0 0
    %2643 = vmatpush2.bf16.msra.mxu0 0
    %2644 = vmatprep.subr.bf16.mxu0 0
    %2645 = vmatpush2.bf16.msra.mxu0 0
    %2646 = vmatprep.subr.bf16.mxu0 0
    %2647 = vmatpush2.bf16.msra.mxu0 0
    %2648 = vmatprep.subr.bf16.mxu0 0
    %2649 = vmatpush2.bf16.msra.mxu0 0
    %2650 = vmatprep.subr.bf16.mxu0 0
    %2651 = vmatpush2.bf16.msra.mxu0 0
    %2652 = vmatprep.subr.bf16.mxu0 0
    %2653 = vmatpush2.bf16.msra.mxu0 0
    %2654 = vmatprep.subr.bf16.mxu0 0
    %2655 = vmatpush2.bf16.msra.mxu0 0
    %2656 = vmatprep.subr.bf16.mxu0 0
    %2657 = vmatpush2.bf16.msra.mxu0 0
    %2658 = vmatprep.mubr.bf16.mxu0 0
    %2659 = vmatmul.mubr.bf16.gmra.mxu0 %v2560
    %v2660 = vpop.f32.mrf.mxu0
    %v2661 = vadd.f32 0.0, %v2660
    %v2662 = vpop.f32.mrf.mxu0
    %v2663 = vpop.f32.mrf.mxu0
    %v2664 = vpop.f32.mrf.mxu0
    %2665 = vdwg.mxu0
    %v2666 = vadd.f32 %v2550, %v2661
    %v2667 = vrot.slane %v2331, 3
    %v2669 = vrot.slane %v2332, 2
    %v2671 = vsel %vm2338, %v2667, %v2669
    %v2672 = vpack.c.bf16 %v2671, %v2671
    %s2673 = scalar_lea.vmem %s5, 192
    %v2674 = vld [vmem:[%s2673] sm:$0xf]
    %v2675 = vld [vmem:[%s2673 + $0x4] sm:$0xf]
    %v2676 = vld [vmem:[%s2673 + $0x8] sm:$0xf]
    %v2677 = vld [vmem:[%s2673 + $0xc] sm:$0xf]
    %v2678 = vld [vmem:[%s2673 + $0x10] sm:$0xf]
    %v2679 = vld [vmem:[%s2673 + $0x14] sm:$0xf]
    %v2680 = vld [vmem:[%s2673 + $0x18] sm:$0xf]
    %v2681 = vld [vmem:[%s2673 + $0x1c] sm:$0xf]
    %v2682 = vld [vmem:[%s2673 + $0x20] sm:$0xf]
    %v2683 = vld [vmem:[%s2673 + $0x24] sm:$0xf]
    %v2684 = vld [vmem:[%s2673 + $0x28] sm:$0xf]
    %v2685 = vld [vmem:[%s2673 + $0x2c] sm:$0xf]
    %v2686 = vld [vmem:[%s2673 + $0x30] sm:$0xf]
    %v2687 = vld [vmem:[%s2673 + $0x34] sm:$0xf]
    %v2688 = vld [vmem:[%s2673 + $0x38] sm:$0xf]
    %v2689 = vld [vmem:[%s2673 + $0x3c] sm:$0xf]
    %v2706 = vunpack.c.l.b16 %v2674
    %v2707 = vunpack.c.l.b16 %v2675
    %v2708 = vunpack.c.l.b16 %v2676
    %v2709 = vunpack.c.l.b16 %v2677
    %v2710 = vunpack.c.l.b16 %v2678
    %v2711 = vunpack.c.l.b16 %v2679
    %v2712 = vunpack.c.l.b16 %v2680
    %v2713 = vunpack.c.l.b16 %v2681
    %v2714 = vunpack.c.l.b16 %v2682
    %v2715 = vunpack.c.l.b16 %v2683
    %v2716 = vunpack.c.l.b16 %v2684
    %v2717 = vunpack.c.l.b16 %v2685
    %v2718 = vunpack.c.l.b16 %v2686
    %v2719 = vunpack.c.l.b16 %v2687
    %v2720 = vunpack.c.l.b16 %v2688
    %v2721 = vunpack.c.l.b16 %v2689
    %v2722 = vpack.c.b16 %v2707, %v2706
    %v2723 = vpack.c.b16 %v2709, %v2708
    %v2724 = vpack.c.b16 %v2711, %v2710
    %v2725 = vpack.c.b16 %v2713, %v2712
    %v2726 = vpack.c.b16 %v2715, %v2714
    %v2727 = vpack.c.b16 %v2717, %v2716
    %v2728 = vpack.c.b16 %v2719, %v2718
    %v2729 = vpack.c.b16 %v2721, %v2720
    %2738 = vmatprep.subr.bf16.mxu0 0
    %2739 = vmatpush1.bf16.msra.mxu0 %v2729
    %2740 = vmatprep.subr.bf16.mxu0 0
    %2741 = vmatpush1.bf16.msra.mxu0 %v2728
    %2742 = vmatprep.subr.bf16.mxu0 0
    %2743 = vmatpush1.bf16.msra.mxu0 %v2727
    %2744 = vmatprep.subr.bf16.mxu0 0
    %2745 = vmatpush1.bf16.msra.mxu0 %v2726
    %2746 = vmatprep.subr.bf16.mxu0 0
    %2747 = vmatpush1.bf16.msra.mxu0 %v2725
    %2748 = vmatprep.subr.bf16.mxu0 0
    %2749 = vmatpush1.bf16.msra.mxu0 %v2724
    %2750 = vmatprep.subr.bf16.mxu0 0
    %2751 = vmatpush1.bf16.msra.mxu0 %v2723
    %2752 = vmatprep.subr.bf16.mxu0 0
    %2753 = vmatpush1.bf16.msra.mxu0 %v2722
    %2754 = vmatprep.subr.bf16.mxu0 0
    %2755 = vmatpush2.bf16.msra.mxu0 0
    %2756 = vmatprep.subr.bf16.mxu0 0
    %2757 = vmatpush2.bf16.msra.mxu0 0
    %2758 = vmatprep.subr.bf16.mxu0 0
    %2759 = vmatpush2.bf16.msra.mxu0 0
    %2760 = vmatprep.subr.bf16.mxu0 0
    %2761 = vmatpush2.bf16.msra.mxu0 0
    %2762 = vmatprep.subr.bf16.mxu0 0
    %2763 = vmatpush2.bf16.msra.mxu0 0
    %2764 = vmatprep.subr.bf16.mxu0 0
    %2765 = vmatpush2.bf16.msra.mxu0 0
    %2766 = vmatprep.subr.bf16.mxu0 0
    %2767 = vmatpush2.bf16.msra.mxu0 0
    %2768 = vmatprep.subr.bf16.mxu0 0
    %2769 = vmatpush2.bf16.msra.mxu0 0
    %2770 = vmatprep.mubr.bf16.mxu0 0
    %2771 = vmatmul.mubr.bf16.gmra.mxu0 %v2672
    %v2772 = vpop.f32.mrf.mxu0
    %v2773 = vadd.f32 0.0, %v2772
    %v2774 = vpop.f32.mrf.mxu0
    %v2775 = vpop.f32.mrf.mxu0
    %v2776 = vpop.f32.mrf.mxu0
    %2777 = vdwg.mxu0
    %v2778 = vadd.f32 %v2666, %v2773
    %v2779 = vrot.slane %v2331, 4
    %v2781 = vrot.slane %v2332, 3
    %v2783 = vsel %vm2338, %v2779, %v2781
    %v2784 = vpack.c.bf16 %v2783, %v2783
    %s2785 = scalar_lea.vmem %s5, 256
    %v2786 = vld [vmem:[%s2785] sm:$0xf]
    %v2787 = vld [vmem:[%s2785 + $0x4] sm:$0xf]
    %v2788 = vld [vmem:[%s2785 + $0x8] sm:$0xf]
    %v2789 = vld [vmem:[%s2785 + $0xc] sm:$0xf]
    %v2790 = vld [vmem:[%s2785 + $0x10] sm:$0xf]
    %v2791 = vld [vmem:[%s2785 + $0x14] sm:$0xf]
    %v2792 = vld [vmem:[%s2785 + $0x18] sm:$0xf]
    %v2793 = vld [vmem:[%s2785 + $0x1c] sm:$0xf]
    %v2794 = vld [vmem:[%s2785 + $0x20] sm:$0xf]
    %v2795 = vld [vmem:[%s2785 + $0x24] sm:$0xf]
    %v2796 = vld [vmem:[%s2785 + $0x28] sm:$0xf]
    %v2797 = vld [vmem:[%s2785 + $0x2c] sm:$0xf]
    %v2798 = vld [vmem:[%s2785 + $0x30] sm:$0xf]
    %v2799 = vld [vmem:[%s2785 + $0x34] sm:$0xf]
    %v2800 = vld [vmem:[%s2785 + $0x38] sm:$0xf]
    %v2801 = vld [vmem:[%s2785 + $0x3c] sm:$0xf]
    %v2818 = vunpack.c.l.b16 %v2786
    %v2819 = vunpack.c.l.b16 %v2787
    %v2820 = vunpack.c.l.b16 %v2788
    %v2821 = vunpack.c.l.b16 %v2789
    %v2822 = vunpack.c.l.b16 %v2790
    %v2823 = vunpack.c.l.b16 %v2791
    %v2824 = vunpack.c.l.b16 %v2792
    %v2825 = vunpack.c.l.b16 %v2793
    %v2826 = vunpack.c.l.b16 %v2794
    %v2827 = vunpack.c.l.b16 %v2795
    %v2828 = vunpack.c.l.b16 %v2796
    %v2829 = vunpack.c.l.b16 %v2797
    %v2830 = vunpack.c.l.b16 %v2798
    %v2831 = vunpack.c.l.b16 %v2799
    %v2832 = vunpack.c.l.b16 %v2800
    %v2833 = vunpack.c.l.b16 %v2801
    %v2834 = vpack.c.b16 %v2819, %v2818
    %v2835 = vpack.c.b16 %v2821, %v2820
    %v2836 = vpack.c.b16 %v2823, %v2822
    %v2837 = vpack.c.b16 %v2825, %v2824
    %v2838 = vpack.c.b16 %v2827, %v2826
    %v2839 = vpack.c.b16 %v2829, %v2828
    %v2840 = vpack.c.b16 %v2831, %v2830
    %v2841 = vpack.c.b16 %v2833, %v2832
    %2850 = vmatprep.subr.bf16.mxu0 0
    %2851 = vmatpush1.bf16.msra.mxu0 %v2841
    %2852 = vmatprep.subr.bf16.mxu0 0
    %2853 = vmatpush1.bf16.msra.mxu0 %v2840
    %2854 = vmatprep.subr.bf16.mxu0 0
    %2855 = vmatpush1.bf16.msra.mxu0 %v2839
    %2856 = vmatprep.subr.bf16.mxu0 0
    %2857 = vmatpush1.bf16.msra.mxu0 %v2838
    %2858 = vmatprep.subr.bf16.mxu0 0
    %2859 = vmatpush1.bf16.msra.mxu0 %v2837
    %2860 = vmatprep.subr.bf16.mxu0 0
    %2861 = vmatpush1.bf16.msra.mxu0 %v2836
    %2862 = vmatprep.subr.bf16.mxu0 0
    %2863 = vmatpush1.bf16.msra.mxu0 %v2835
    %2864 = vmatprep.subr.bf16.mxu0 0
    %2865 = vmatpush1.bf16.msra.mxu0 %v2834
    %2866 = vmatprep.subr.bf16.mxu0 0
    %2867 = vmatpush2.bf16.msra.mxu0 0
    %2868 = vmatprep.subr.bf16.mxu0 0
    %2869 = vmatpush2.bf16.msra.mxu0 0
    %2870 = vmatprep.subr.bf16.mxu0 0
    %2871 = vmatpush2.bf16.msra.mxu0 0
    %2872 = vmatprep.subr.bf16.mxu0 0
    %2873 = vmatpush2.bf16.msra.mxu0 0
    %2874 = vmatprep.subr.bf16.mxu0 0
    %2875 = vmatpush2.bf16.msra.mxu0 0
    %2876 = vmatprep.subr.bf16.mxu0 0
    %2877 = vmatpush2.bf16.msra.mxu0 0
    %2878 = vmatprep.subr.bf16.mxu0 0
    %2879 = vmatpush2.bf16.msra.mxu0 0
    %2880 = vmatprep.subr.bf16.mxu0 0
    %2881 = vmatpush2.bf16.msra.mxu0 0
    %2882 = vmatprep.mubr.bf16.mxu0 0
    %2883 = vmatmul.mubr.bf16.gmra.mxu0 %v2784
    %v2884 = vpop.f32.mrf.mxu0
    %v2885 = vadd.f32 0.0, %v2884
    %v2886 = vpop.f32.mrf.mxu0
    %v2887 = vpop.f32.mrf.mxu0
    %v2888 = vpop.f32.mrf.mxu0
    %2889 = vdwg.mxu0
    %v2890 = vadd.f32 %v2778, %v2885
    %v2891 = vrot.slane %v2331, 5
    %v2893 = vrot.slane %v2332, 4
    %v2895 = vsel %vm2338, %v2891, %v2893
    %v2896 = vpack.c.bf16 %v2895, %v2895
    %s2897 = scalar_lea.vmem %s5, 320
    %v2898 = vld [vmem:[%s2897] sm:$0xf]
    %v2899 = vld [vmem:[%s2897 + $0x4] sm:$0xf]
    %v2900 = vld [vmem:[%s2897 + $0x8] sm:$0xf]
    %v2901 = vld [vmem:[%s2897 + $0xc] sm:$0xf]
    %v2902 = vld [vmem:[%s2897 + $0x10] sm:$0xf]
    %v2903 = vld [vmem:[%s2897 + $0x14] sm:$0xf]
    %v2904 = vld [vmem:[%s2897 + $0x18] sm:$0xf]
    %v2905 = vld [vmem:[%s2897 + $0x1c] sm:$0xf]
    %v2906 = vld [vmem:[%s2897 + $0x20] sm:$0xf]
    %v2907 = vld [vmem:[%s2897 + $0x24] sm:$0xf]
    %v2908 = vld [vmem:[%s2897 + $0x28] sm:$0xf]
    %v2909 = vld [vmem:[%s2897 + $0x2c] sm:$0xf]
    %v2910 = vld [vmem:[%s2897 + $0x30] sm:$0xf]
    %v2911 = vld [vmem:[%s2897 + $0x34] sm:$0xf]
    %v2912 = vld [vmem:[%s2897 + $0x38] sm:$0xf]
    %v2913 = vld [vmem:[%s2897 + $0x3c] sm:$0xf]
    %v2930 = vunpack.c.l.b16 %v2898
    %v2931 = vunpack.c.l.b16 %v2899
    %v2932 = vunpack.c.l.b16 %v2900
    %v2933 = vunpack.c.l.b16 %v2901
    %v2934 = vunpack.c.l.b16 %v2902
    %v2935 = vunpack.c.l.b16 %v2903
    %v2936 = vunpack.c.l.b16 %v2904
    %v2937 = vunpack.c.l.b16 %v2905
    %v2938 = vunpack.c.l.b16 %v2906
    %v2939 = vunpack.c.l.b16 %v2907
    %v2940 = vunpack.c.l.b16 %v2908
    %v2941 = vunpack.c.l.b16 %v2909
    %v2942 = vunpack.c.l.b16 %v2910
    %v2943 = vunpack.c.l.b16 %v2911
    %v2944 = vunpack.c.l.b16 %v2912
    %v2945 = vunpack.c.l.b16 %v2913
    %v2946 = vpack.c.b16 %v2931, %v2930
    %v2947 = vpack.c.b16 %v2933, %v2932
    %v2948 = vpack.c.b16 %v2935, %v2934
    %v2949 = vpack.c.b16 %v2937, %v2936
    %v2950 = vpack.c.b16 %v2939, %v2938
    %v2951 = vpack.c.b16 %v2941, %v2940
    %v2952 = vpack.c.b16 %v2943, %v2942
    %v2953 = vpack.c.b16 %v2945, %v2944
    %2962 = vmatprep.subr.bf16.mxu0 0
    %2963 = vmatpush1.bf16.msra.mxu0 %v2953
    %2964 = vmatprep.subr.bf16.mxu0 0
    %2965 = vmatpush1.bf16.msra.mxu0 %v2952
    %2966 = vmatprep.subr.bf16.mxu0 0
    %2967 = vmatpush1.bf16.msra.mxu0 %v2951
    %2968 = vmatprep.subr.bf16.mxu0 0
    %2969 = vmatpush1.bf16.msra.mxu0 %v2950
    %2970 = vmatprep.subr.bf16.mxu0 0
    %2971 = vmatpush1.bf16.msra.mxu0 %v2949
    %2972 = vmatprep.subr.bf16.mxu0 0
    %2973 = vmatpush1.bf16.msra.mxu0 %v2948
    %2974 = vmatprep.subr.bf16.mxu0 0
    %2975 = vmatpush1.bf16.msra.mxu0 %v2947
    %2976 = vmatprep.subr.bf16.mxu0 0
    %2977 = vmatpush1.bf16.msra.mxu0 %v2946
    %2978 = vmatprep.subr.bf16.mxu0 0
    %2979 = vmatpush2.bf16.msra.mxu0 0
    %2980 = vmatprep.subr.bf16.mxu0 0
    %2981 = vmatpush2.bf16.msra.mxu0 0
    %2982 = vmatprep.subr.bf16.mxu0 0
    %2983 = vmatpush2.bf16.msra.mxu0 0
    %2984 = vmatprep.subr.bf16.mxu0 0
    %2985 = vmatpush2.bf16.msra.mxu0 0
    %2986 = vmatprep.subr.bf16.mxu0 0
    %2987 = vmatpush2.bf16.msra.mxu0 0
    %2988 = vmatprep.subr.bf16.mxu0 0
    %2989 = vmatpush2.bf16.msra.mxu0 0
    %2990 = vmatprep.subr.bf16.mxu0 0
    %2991 = vmatpush2.bf16.msra.mxu0 0
    %2992 = vmatprep.subr.bf16.mxu0 0
    %2993 = vmatpush2.bf16.msra.mxu0 0
    %2994 = vmatprep.mubr.bf16.mxu0 0
    %2995 = vmatmul.mubr.bf16.gmra.mxu0 %v2896
    %v2996 = vpop.f32.mrf.mxu0
    %v2997 = vadd.f32 0.0, %v2996
    %v2998 = vpop.f32.mrf.mxu0
    %v2999 = vpop.f32.mrf.mxu0
    %v3000 = vpop.f32.mrf.mxu0
    %3001 = vdwg.mxu0
    %v3002 = vadd.f32 %v2890, %v2997
    %v3003 = vrot.slane %v2331, 6
    %v3005 = vrot.slane %v2332, 5
    %v3007 = vsel %vm2338, %v3003, %v3005
    %v3008 = vpack.c.bf16 %v3007, %v3007
    %s3009 = scalar_lea.vmem %s5, 384
    %v3010 = vld [vmem:[%s3009] sm:$0xf]
    %v3011 = vld [vmem:[%s3009 + $0x4] sm:$0xf]
    %v3012 = vld [vmem:[%s3009 + $0x8] sm:$0xf]
    %v3013 = vld [vmem:[%s3009 + $0xc] sm:$0xf]
    %v3014 = vld [vmem:[%s3009 + $0x10] sm:$0xf]
    %v3015 = vld [vmem:[%s3009 + $0x14] sm:$0xf]
    %v3016 = vld [vmem:[%s3009 + $0x18] sm:$0xf]
    %v3017 = vld [vmem:[%s3009 + $0x1c] sm:$0xf]
    %v3018 = vld [vmem:[%s3009 + $0x20] sm:$0xf]
    %v3019 = vld [vmem:[%s3009 + $0x24] sm:$0xf]
    %v3020 = vld [vmem:[%s3009 + $0x28] sm:$0xf]
    %v3021 = vld [vmem:[%s3009 + $0x2c] sm:$0xf]
    %v3022 = vld [vmem:[%s3009 + $0x30] sm:$0xf]
    %v3023 = vld [vmem:[%s3009 + $0x34] sm:$0xf]
    %v3024 = vld [vmem:[%s3009 + $0x38] sm:$0xf]
    %v3025 = vld [vmem:[%s3009 + $0x3c] sm:$0xf]
    %v3042 = vunpack.c.l.b16 %v3010
    %v3043 = vunpack.c.l.b16 %v3011
    %v3044 = vunpack.c.l.b16 %v3012
    %v3045 = vunpack.c.l.b16 %v3013
    %v3046 = vunpack.c.l.b16 %v3014
    %v3047 = vunpack.c.l.b16 %v3015
    %v3048 = vunpack.c.l.b16 %v3016
    %v3049 = vunpack.c.l.b16 %v3017
    %v3050 = vunpack.c.l.b16 %v3018
    %v3051 = vunpack.c.l.b16 %v3019
    %v3052 = vunpack.c.l.b16 %v3020
    %v3053 = vunpack.c.l.b16 %v3021
    %v3054 = vunpack.c.l.b16 %v3022
    %v3055 = vunpack.c.l.b16 %v3023
    %v3056 = vunpack.c.l.b16 %v3024
    %v3057 = vunpack.c.l.b16 %v3025
    %v3058 = vpack.c.b16 %v3043, %v3042
    %v3059 = vpack.c.b16 %v3045, %v3044
    %v3060 = vpack.c.b16 %v3047, %v3046
    %v3061 = vpack.c.b16 %v3049, %v3048
    %v3062 = vpack.c.b16 %v3051, %v3050
    %v3063 = vpack.c.b16 %v3053, %v3052
    %v3064 = vpack.c.b16 %v3055, %v3054
    %v3065 = vpack.c.b16 %v3057, %v3056
    %3074 = vmatprep.subr.bf16.mxu0 0
    %3075 = vmatpush1.bf16.msra.mxu0 %v3065
    %3076 = vmatprep.subr.bf16.mxu0 0
    %3077 = vmatpush1.bf16.msra.mxu0 %v3064
    %3078 = vmatprep.subr.bf16.mxu0 0
    %3079 = vmatpush1.bf16.msra.mxu0 %v3063
    %3080 = vmatprep.subr.bf16.mxu0 0
    %3081 = vmatpush1.bf16.msra.mxu0 %v3062
    %3082 = vmatprep.subr.bf16.mxu0 0
    %3083 = vmatpush1.bf16.msra.mxu0 %v3061
    %3084 = vmatprep.subr.bf16.mxu0 0
    %3085 = vmatpush1.bf16.msra.mxu0 %v3060
    %3086 = vmatprep.subr.bf16.mxu0 0
    %3087 = vmatpush1.bf16.msra.mxu0 %v3059
    %3088 = vmatprep.subr.bf16.mxu0 0
    %3089 = vmatpush1.bf16.msra.mxu0 %v3058
    %3090 = vmatprep.subr.bf16.mxu0 0
    %3091 = vmatpush2.bf16.msra.mxu0 0
    %3092 = vmatprep.subr.bf16.mxu0 0
    %3093 = vmatpush2.bf16.msra.mxu0 0
    %3094 = vmatprep.subr.bf16.mxu0 0
    %3095 = vmatpush2.bf16.msra.mxu0 0
    %3096 = vmatprep.subr.bf16.mxu0 0
    %3097 = vmatpush2.bf16.msra.mxu0 0
    %3098 = vmatprep.subr.bf16.mxu0 0
    %3099 = vmatpush2.bf16.msra.mxu0 0
    %3100 = vmatprep.subr.bf16.mxu0 0
    %3101 = vmatpush2.bf16.msra.mxu0 0
    %3102 = vmatprep.subr.bf16.mxu0 0
    %3103 = vmatpush2.bf16.msra.mxu0 0
    %3104 = vmatprep.subr.bf16.mxu0 0
    %3105 = vmatpush2.bf16.msra.mxu0 0
    %3106 = vmatprep.mubr.bf16.mxu0 0
    %3107 = vmatmul.mubr.bf16.gmra.mxu0 %v3008
    %v3108 = vpop.f32.mrf.mxu0
    %v3109 = vadd.f32 0.0, %v3108
    %v3110 = vpop.f32.mrf.mxu0
    %v3111 = vpop.f32.mrf.mxu0
    %v3112 = vpop.f32.mrf.mxu0
    %3113 = vdwg.mxu0
    %v3114 = vadd.f32 %v3002, %v3109
    %v3115 = vrot.slane %v2331, 7
    %v3117 = vrot.slane %v2332, 6
    %v3119 = vsel %vm2338, %v3115, %v3117
    %v3120 = vpack.c.bf16 %v3119, %v3119
    %s3121 = scalar_lea.vmem %s5, 448
    %v3122 = vld [vmem:[%s3121] sm:$0xf]
    %v3123 = vld [vmem:[%s3121 + $0x4] sm:$0xf]
    %v3124 = vld [vmem:[%s3121 + $0x8] sm:$0xf]
    %v3125 = vld [vmem:[%s3121 + $0xc] sm:$0xf]
    %v3126 = vld [vmem:[%s3121 + $0x10] sm:$0xf]
    %v3127 = vld [vmem:[%s3121 + $0x14] sm:$0xf]
    %v3128 = vld [vmem:[%s3121 + $0x18] sm:$0xf]
    %v3129 = vld [vmem:[%s3121 + $0x1c] sm:$0xf]
    %v3130 = vld [vmem:[%s3121 + $0x20] sm:$0xf]
    %v3131 = vld [vmem:[%s3121 + $0x24] sm:$0xf]
    %v3132 = vld [vmem:[%s3121 + $0x28] sm:$0xf]
    %v3133 = vld [vmem:[%s3121 + $0x2c] sm:$0xf]
    %v3134 = vld [vmem:[%s3121 + $0x30] sm:$0xf]
    %v3135 = vld [vmem:[%s3121 + $0x34] sm:$0xf]
    %v3136 = vld [vmem:[%s3121 + $0x38] sm:$0xf]
    %v3137 = vld [vmem:[%s3121 + $0x3c] sm:$0xf]
    %v3154 = vunpack.c.l.b16 %v3122
    %v3155 = vunpack.c.l.b16 %v3123
    %v3156 = vunpack.c.l.b16 %v3124
    %v3157 = vunpack.c.l.b16 %v3125
    %v3158 = vunpack.c.l.b16 %v3126
    %v3159 = vunpack.c.l.b16 %v3127
    %v3160 = vunpack.c.l.b16 %v3128
    %v3161 = vunpack.c.l.b16 %v3129
    %v3162 = vunpack.c.l.b16 %v3130
    %v3163 = vunpack.c.l.b16 %v3131
    %v3164 = vunpack.c.l.b16 %v3132
    %v3165 = vunpack.c.l.b16 %v3133
    %v3166 = vunpack.c.l.b16 %v3134
    %v3167 = vunpack.c.l.b16 %v3135
    %v3168 = vunpack.c.l.b16 %v3136
    %v3169 = vunpack.c.l.b16 %v3137
    %v3170 = vpack.c.b16 %v3155, %v3154
    %v3171 = vpack.c.b16 %v3157, %v3156
    %v3172 = vpack.c.b16 %v3159, %v3158
    %v3173 = vpack.c.b16 %v3161, %v3160
    %v3174 = vpack.c.b16 %v3163, %v3162
    %v3175 = vpack.c.b16 %v3165, %v3164
    %v3176 = vpack.c.b16 %v3167, %v3166
    %v3177 = vpack.c.b16 %v3169, %v3168
    %3186 = vmatprep.subr.bf16.mxu0 0
    %3187 = vmatpush1.bf16.msra.mxu0 %v3177
    %3188 = vmatprep.subr.bf16.mxu0 0
    %3189 = vmatpush1.bf16.msra.mxu0 %v3176
    %3190 = vmatprep.subr.bf16.mxu0 0
    %3191 = vmatpush1.bf16.msra.mxu0 %v3175
    %3192 = vmatprep.subr.bf16.mxu0 0
    %3193 = vmatpush1.bf16.msra.mxu0 %v3174
    %3194 = vmatprep.subr.bf16.mxu0 0
    %3195 = vmatpush1.bf16.msra.mxu0 %v3173
    %3196 = vmatprep.subr.bf16.mxu0 0
    %3197 = vmatpush1.bf16.msra.mxu0 %v3172
    %3198 = vmatprep.subr.bf16.mxu0 0
    %3199 = vmatpush1.bf16.msra.mxu0 %v3171
    %3200 = vmatprep.subr.bf16.mxu0 0
    %3201 = vmatpush1.bf16.msra.mxu0 %v3170
    %3202 = vmatprep.subr.bf16.mxu0 0
    %3203 = vmatpush2.bf16.msra.mxu0 0
    %3204 = vmatprep.subr.bf16.mxu0 0
    %3205 = vmatpush2.bf16.msra.mxu0 0
    %3206 = vmatprep.subr.bf16.mxu0 0
    %3207 = vmatpush2.bf16.msra.mxu0 0
    %3208 = vmatprep.subr.bf16.mxu0 0
    %3209 = vmatpush2.bf16.msra.mxu0 0
    %3210 = vmatprep.subr.bf16.mxu0 0
    %3211 = vmatpush2.bf16.msra.mxu0 0
    %3212 = vmatprep.subr.bf16.mxu0 0
    %3213 = vmatpush2.bf16.msra.mxu0 0
    %3214 = vmatprep.subr.bf16.mxu0 0
    %3215 = vmatpush2.bf16.msra.mxu0 0
    %3216 = vmatprep.subr.bf16.mxu0 0
    %3217 = vmatpush2.bf16.msra.mxu0 0
    %3218 = vmatprep.mubr.bf16.mxu0 0
    %3219 = vmatmul.mubr.bf16.gmra.mxu0 %v3120
    %v3220 = vpop.f32.mrf.mxu0
    %v3221 = vadd.f32 0.0, %v3220
    %v3222 = vpop.f32.mrf.mxu0
    %v3223 = vpop.f32.mrf.mxu0
    %v3224 = vpop.f32.mrf.mxu0
    %3225 = vdwg.mxu0
    %v3226 = vadd.f32 %v3114, %v3221
    %v3228 = vrot.slane %v2334, 7
    %v3230 = vsel %vm2338, %v2333, %v3228
    %v3231 = vpack.c.bf16 %v3230, %v3230
    %s3232 = scalar_lea.vmem %s5, 512
    %v3233 = vld [vmem:[%s3232] sm:$0xf]
    %v3234 = vld [vmem:[%s3232 + $0x4] sm:$0xf]
    %v3235 = vld [vmem:[%s3232 + $0x8] sm:$0xf]
    %v3236 = vld [vmem:[%s3232 + $0xc] sm:$0xf]
    %v3237 = vld [vmem:[%s3232 + $0x10] sm:$0xf]
    %v3238 = vld [vmem:[%s3232 + $0x14] sm:$0xf]
    %v3239 = vld [vmem:[%s3232 + $0x18] sm:$0xf]
    %v3240 = vld [vmem:[%s3232 + $0x1c] sm:$0xf]
    %v3241 = vld [vmem:[%s3232 + $0x20] sm:$0xf]
    %v3242 = vld [vmem:[%s3232 + $0x24] sm:$0xf]
    %v3243 = vld [vmem:[%s3232 + $0x28] sm:$0xf]
    %v3244 = vld [vmem:[%s3232 + $0x2c] sm:$0xf]
    %v3245 = vld [vmem:[%s3232 + $0x30] sm:$0xf]
    %v3246 = vld [vmem:[%s3232 + $0x34] sm:$0xf]
    %v3247 = vld [vmem:[%s3232 + $0x38] sm:$0xf]
    %v3248 = vld [vmem:[%s3232 + $0x3c] sm:$0xf]
    %v3265 = vunpack.c.l.b16 %v3233
    %v3266 = vunpack.c.l.b16 %v3234
    %v3267 = vunpack.c.l.b16 %v3235
    %v3268 = vunpack.c.l.b16 %v3236
    %v3269 = vunpack.c.l.b16 %v3237
    %v3270 = vunpack.c.l.b16 %v3238
    %v3271 = vunpack.c.l.b16 %v3239
    %v3272 = vunpack.c.l.b16 %v3240
    %v3273 = vunpack.c.l.b16 %v3241
    %v3274 = vunpack.c.l.b16 %v3242
    %v3275 = vunpack.c.l.b16 %v3243
    %v3276 = vunpack.c.l.b16 %v3244
    %v3277 = vunpack.c.l.b16 %v3245
    %v3278 = vunpack.c.l.b16 %v3246
    %v3279 = vunpack.c.l.b16 %v3247
    %v3280 = vunpack.c.l.b16 %v3248
    %v3281 = vpack.c.b16 %v3266, %v3265
    %v3282 = vpack.c.b16 %v3268, %v3267
    %v3283 = vpack.c.b16 %v3270, %v3269
    %v3284 = vpack.c.b16 %v3272, %v3271
    %v3285 = vpack.c.b16 %v3274, %v3273
    %v3286 = vpack.c.b16 %v3276, %v3275
    %v3287 = vpack.c.b16 %v3278, %v3277
    %v3288 = vpack.c.b16 %v3280, %v3279
    %3297 = vmatprep.subr.bf16.mxu0 0
    %3298 = vmatpush1.bf16.msra.mxu0 %v3288
    %3299 = vmatprep.subr.bf16.mxu0 0
    %3300 = vmatpush1.bf16.msra.mxu0 %v3287
    %3301 = vmatprep.subr.bf16.mxu0 0
    %3302 = vmatpush1.bf16.msra.mxu0 %v3286
    %3303 = vmatprep.subr.bf16.mxu0 0
    %3304 = vmatpush1.bf16.msra.mxu0 %v3285
    %3305 = vmatprep.subr.bf16.mxu0 0
    %3306 = vmatpush1.bf16.msra.mxu0 %v3284
    %3307 = vmatprep.subr.bf16.mxu0 0
    %3308 = vmatpush1.bf16.msra.mxu0 %v3283
    %3309 = vmatprep.subr.bf16.mxu0 0
    %3310 = vmatpush1.bf16.msra.mxu0 %v3282
    %3311 = vmatprep.subr.bf16.mxu0 0
    %3312 = vmatpush1.bf16.msra.mxu0 %v3281
    %3313 = vmatprep.subr.bf16.mxu0 0
    %3314 = vmatpush2.bf16.msra.mxu0 0
    %3315 = vmatprep.subr.bf16.mxu0 0
    %3316 = vmatpush2.bf16.msra.mxu0 0
    %3317 = vmatprep.subr.bf16.mxu0 0
    %3318 = vmatpush2.bf16.msra.mxu0 0
    %3319 = vmatprep.subr.bf16.mxu0 0
    %3320 = vmatpush2.bf16.msra.mxu0 0
    %3321 = vmatprep.subr.bf16.mxu0 0
    %3322 = vmatpush2.bf16.msra.mxu0 0
    %3323 = vmatprep.subr.bf16.mxu0 0
    %3324 = vmatpush2.bf16.msra.mxu0 0
    %3325 = vmatprep.subr.bf16.mxu0 0
    %3326 = vmatpush2.bf16.msra.mxu0 0
    %3327 = vmatprep.subr.bf16.mxu0 0
    %3328 = vmatpush2.bf16.msra.mxu0 0
    %3329 = vmatprep.mubr.bf16.mxu0 0
    %3330 = vmatmul.mubr.bf16.gmra.mxu0 %v3231
    %v3331 = vpop.f32.mrf.mxu0
    %v3332 = vadd.f32 0.0, %v3331
    %v3333 = vpop.f32.mrf.mxu0
    %v3334 = vpop.f32.mrf.mxu0
    %v3335 = vpop.f32.mrf.mxu0
    %3336 = vdwg.mxu0
    %v3337 = vadd.f32 %v3226, %v3332
    %v3339 = vrot.slane %v2333, 1
    %v3341 = vsel %vm2338, %v3339, %v2334
    %v3342 = vpack.c.bf16 %v3341, %v3341
    %s3343 = scalar_lea.vmem %s5, 576
    %v3344 = vld [vmem:[%s3343] sm:$0xf]
    %v3345 = vld [vmem:[%s3343 + $0x4] sm:$0xf]
    %v3346 = vld [vmem:[%s3343 + $0x8] sm:$0xf]
    %v3347 = vld [vmem:[%s3343 + $0xc] sm:$0xf]
    %v3348 = vld [vmem:[%s3343 + $0x10] sm:$0xf]
    %v3349 = vld [vmem:[%s3343 + $0x14] sm:$0xf]
    %v3350 = vld [vmem:[%s3343 + $0x18] sm:$0xf]
    %v3351 = vld [vmem:[%s3343 + $0x1c] sm:$0xf]
    %v3352 = vld [vmem:[%s3343 + $0x20] sm:$0xf]
    %v3353 = vld [vmem:[%s3343 + $0x24] sm:$0xf]
    %v3354 = vld [vmem:[%s3343 + $0x28] sm:$0xf]
    %v3355 = vld [vmem:[%s3343 + $0x2c] sm:$0xf]
    %v3356 = vld [vmem:[%s3343 + $0x30] sm:$0xf]
    %v3357 = vld [vmem:[%s3343 + $0x34] sm:$0xf]
    %v3358 = vld [vmem:[%s3343 + $0x38] sm:$0xf]
    %v3359 = vld [vmem:[%s3343 + $0x3c] sm:$0xf]
    %v3376 = vunpack.c.l.b16 %v3344
    %v3377 = vunpack.c.l.b16 %v3345
    %v3378 = vunpack.c.l.b16 %v3346
    %v3379 = vunpack.c.l.b16 %v3347
    %v3380 = vunpack.c.l.b16 %v3348
    %v3381 = vunpack.c.l.b16 %v3349
    %v3382 = vunpack.c.l.b16 %v3350
    %v3383 = vunpack.c.l.b16 %v3351
    %v3384 = vunpack.c.l.b16 %v3352
    %v3385 = vunpack.c.l.b16 %v3353
    %v3386 = vunpack.c.l.b16 %v3354
    %v3387 = vunpack.c.l.b16 %v3355
    %v3388 = vunpack.c.l.b16 %v3356
    %v3389 = vunpack.c.l.b16 %v3357
    %v3390 = vunpack.c.l.b16 %v3358
    %v3391 = vunpack.c.l.b16 %v3359
    %v3392 = vpack.c.b16 %v3377, %v3376
    %v3393 = vpack.c.b16 %v3379, %v3378
    %v3394 = vpack.c.b16 %v3381, %v3380
    %v3395 = vpack.c.b16 %v3383, %v3382
    %v3396 = vpack.c.b16 %v3385, %v3384
    %v3397 = vpack.c.b16 %v3387, %v3386
    %v3398 = vpack.c.b16 %v3389, %v3388
    %v3399 = vpack.c.b16 %v3391, %v3390
    %3408 = vmatprep.subr.bf16.mxu0 0
    %3409 = vmatpush1.bf16.msra.mxu0 %v3399
    %3410 = vmatprep.subr.bf16.mxu0 0
    %3411 = vmatpush1.bf16.msra.mxu0 %v3398
    %3412 = vmatprep.subr.bf16.mxu0 0
    %3413 = vmatpush1.bf16.msra.mxu0 %v3397
    %3414 = vmatprep.subr.bf16.mxu0 0
    %3415 = vmatpush1.bf16.msra.mxu0 %v3396
    %3416 = vmatprep.subr.bf16.mxu0 0
    %3417 = vmatpush1.bf16.msra.mxu0 %v3395
    %3418 = vmatprep.subr.bf16.mxu0 0
    %3419 = vmatpush1.bf16.msra.mxu0 %v3394
    %3420 = vmatprep.subr.bf16.mxu0 0
    %3421 = vmatpush1.bf16.msra.mxu0 %v3393
    %3422 = vmatprep.subr.bf16.mxu0 0
    %3423 = vmatpush1.bf16.msra.mxu0 %v3392
    %3424 = vmatprep.subr.bf16.mxu0 0
    %3425 = vmatpush2.bf16.msra.mxu0 0
    %3426 = vmatprep.subr.bf16.mxu0 0
    %3427 = vmatpush2.bf16.msra.mxu0 0
    %3428 = vmatprep.subr.bf16.mxu0 0
    %3429 = vmatpush2.bf16.msra.mxu0 0
    %3430 = vmatprep.subr.bf16.mxu0 0
    %3431 = vmatpush2.bf16.msra.mxu0 0
    %3432 = vmatprep.subr.bf16.mxu0 0
    %3433 = vmatpush2.bf16.msra.mxu0 0
    %3434 = vmatprep.subr.bf16.mxu0 0
    %3435 = vmatpush2.bf16.msra.mxu0 0
    %3436 = vmatprep.subr.bf16.mxu0 0
    %3437 = vmatpush2.bf16.msra.mxu0 0
    %3438 = vmatprep.subr.bf16.mxu0 0
    %3439 = vmatpush2.bf16.msra.mxu0 0
    %3440 = vmatprep.mubr.bf16.mxu0 0
    %3441 = vmatmul.mubr.bf16.gmra.mxu0 %v3342
    %v3442 = vpop.f32.mrf.mxu0
    %v3443 = vadd.f32 0.0, %v3442
    %v3444 = vpop.f32.mrf.mxu0
    %v3445 = vpop.f32.mrf.mxu0
    %v3446 = vpop.f32.mrf.mxu0
    %3447 = vdwg.mxu0
    %v3448 = vadd.f32 %v3337, %v3443
    %v3449 = vrot.slane %v2333, 2
    %v3451 = vrot.slane %v2334, 1
    %v3453 = vsel %vm2338, %v3449, %v3451
    %v3454 = vpack.c.bf16 %v3453, %v3453
    %s3455 = scalar_lea.vmem %s5, 640
    %v3456 = vld [vmem:[%s3455] sm:$0xf]
    %v3457 = vld [vmem:[%s3455 + $0x4] sm:$0xf]
    %v3458 = vld [vmem:[%s3455 + $0x8] sm:$0xf]
    %v3459 = vld [vmem:[%s3455 + $0xc] sm:$0xf]
    %v3460 = vld [vmem:[%s3455 + $0x10] sm:$0xf]
    %v3461 = vld [vmem:[%s3455 + $0x14] sm:$0xf]
    %v3462 = vld [vmem:[%s3455 + $0x18] sm:$0xf]
    %v3463 = vld [vmem:[%s3455 + $0x1c] sm:$0xf]
    %v3464 = vld [vmem:[%s3455 + $0x20] sm:$0xf]
    %v3465 = vld [vmem:[%s3455 + $0x24] sm:$0xf]
    %v3466 = vld [vmem:[%s3455 + $0x28] sm:$0xf]
    %v3467 = vld [vmem:[%s3455 + $0x2c] sm:$0xf]
    %v3468 = vld [vmem:[%s3455 + $0x30] sm:$0xf]
    %v3469 = vld [vmem:[%s3455 + $0x34] sm:$0xf]
    %v3470 = vld [vmem:[%s3455 + $0x38] sm:$0xf]
    %v3471 = vld [vmem:[%s3455 + $0x3c] sm:$0xf]
    %v3488 = vunpack.c.l.b16 %v3456
    %v3489 = vunpack.c.l.b16 %v3457
    %v3490 = vunpack.c.l.b16 %v3458
    %v3491 = vunpack.c.l.b16 %v3459
    %v3492 = vunpack.c.l.b16 %v3460
    %v3493 = vunpack.c.l.b16 %v3461
    %v3494 = vunpack.c.l.b16 %v3462
    %v3495 = vunpack.c.l.b16 %v3463
    %v3496 = vunpack.c.l.b16 %v3464
    %v3497 = vunpack.c.l.b16 %v3465
    %v3498 = vunpack.c.l.b16 %v3466
    %v3499 = vunpack.c.l.b16 %v3467
    %v3500 = vunpack.c.l.b16 %v3468
    %v3501 = vunpack.c.l.b16 %v3469
    %v3502 = vunpack.c.l.b16 %v3470
    %v3503 = vunpack.c.l.b16 %v3471
    %v3504 = vpack.c.b16 %v3489, %v3488
    %v3505 = vpack.c.b16 %v3491, %v3490
    %v3506 = vpack.c.b16 %v3493, %v3492
    %v3507 = vpack.c.b16 %v3495, %v3494
    %v3508 = vpack.c.b16 %v3497, %v3496
    %v3509 = vpack.c.b16 %v3499, %v3498
    %v3510 = vpack.c.b16 %v3501, %v3500
    %v3511 = vpack.c.b16 %v3503, %v3502
    %3520 = vmatprep.subr.bf16.mxu0 0
    %3521 = vmatpush1.bf16.msra.mxu0 %v3511
    %3522 = vmatprep.subr.bf16.mxu0 0
    %3523 = vmatpush1.bf16.msra.mxu0 %v3510
    %3524 = vmatprep.subr.bf16.mxu0 0
    %3525 = vmatpush1.bf16.msra.mxu0 %v3509
    %3526 = vmatprep.subr.bf16.mxu0 0
    %3527 = vmatpush1.bf16.msra.mxu0 %v3508
    %3528 = vmatprep.subr.bf16.mxu0 0
    %3529 = vmatpush1.bf16.msra.mxu0 %v3507
    %3530 = vmatprep.subr.bf16.mxu0 0
    %3531 = vmatpush1.bf16.msra.mxu0 %v3506
    %3532 = vmatprep.subr.bf16.mxu0 0
    %3533 = vmatpush1.bf16.msra.mxu0 %v3505
    %3534 = vmatprep.subr.bf16.mxu0 0
    %3535 = vmatpush1.bf16.msra.mxu0 %v3504
    %3536 = vmatprep.subr.bf16.mxu0 0
    %3537 = vmatpush2.bf16.msra.mxu0 0
    %3538 = vmatprep.subr.bf16.mxu0 0
    %3539 = vmatpush2.bf16.msra.mxu0 0
    %3540 = vmatprep.subr.bf16.mxu0 0
    %3541 = vmatpush2.bf16.msra.mxu0 0
    %3542 = vmatprep.subr.bf16.mxu0 0
    %3543 = vmatpush2.bf16.msra.mxu0 0
    %3544 = vmatprep.subr.bf16.mxu0 0
    %3545 = vmatpush2.bf16.msra.mxu0 0
    %3546 = vmatprep.subr.bf16.mxu0 0
    %3547 = vmatpush2.bf16.msra.mxu0 0
    %3548 = vmatprep.subr.bf16.mxu0 0
    %3549 = vmatpush2.bf16.msra.mxu0 0
    %3550 = vmatprep.subr.bf16.mxu0 0
    %3551 = vmatpush2.bf16.msra.mxu0 0
    %3552 = vmatprep.mubr.bf16.mxu0 0
    %3553 = vmatmul.mubr.bf16.gmra.mxu0 %v3454
    %v3554 = vpop.f32.mrf.mxu0
    %v3555 = vadd.f32 0.0, %v3554
    %v3556 = vpop.f32.mrf.mxu0
    %v3557 = vpop.f32.mrf.mxu0
    %v3558 = vpop.f32.mrf.mxu0
    %3559 = vdwg.mxu0
    %v3560 = vadd.f32 %v3448, %v3555
    %v3561 = vrot.slane %v2333, 3
    %v3563 = vrot.slane %v2334, 2
    %v3565 = vsel %vm2338, %v3561, %v3563
    %v3566 = vpack.c.bf16 %v3565, %v3565
    %s3567 = scalar_lea.vmem %s5, 704
    %v3568 = vld [vmem:[%s3567] sm:$0xf]
    %v3569 = vld [vmem:[%s3567 + $0x4] sm:$0xf]
    %v3570 = vld [vmem:[%s3567 + $0x8] sm:$0xf]
    %v3571 = vld [vmem:[%s3567 + $0xc] sm:$0xf]
    %v3572 = vld [vmem:[%s3567 + $0x10] sm:$0xf]
    %v3573 = vld [vmem:[%s3567 + $0x14] sm:$0xf]
    %v3574 = vld [vmem:[%s3567 + $0x18] sm:$0xf]
    %v3575 = vld [vmem:[%s3567 + $0x1c] sm:$0xf]
    %v3576 = vld [vmem:[%s3567 + $0x20] sm:$0xf]
    %v3577 = vld [vmem:[%s3567 + $0x24] sm:$0xf]
    %v3578 = vld [vmem:[%s3567 + $0x28] sm:$0xf]
    %v3579 = vld [vmem:[%s3567 + $0x2c] sm:$0xf]
    %v3580 = vld [vmem:[%s3567 + $0x30] sm:$0xf]
    %v3581 = vld [vmem:[%s3567 + $0x34] sm:$0xf]
    %v3582 = vld [vmem:[%s3567 + $0x38] sm:$0xf]
    %v3583 = vld [vmem:[%s3567 + $0x3c] sm:$0xf]
    %v3600 = vunpack.c.l.b16 %v3568
    %v3601 = vunpack.c.l.b16 %v3569
    %v3602 = vunpack.c.l.b16 %v3570
    %v3603 = vunpack.c.l.b16 %v3571
    %v3604 = vunpack.c.l.b16 %v3572
    %v3605 = vunpack.c.l.b16 %v3573
    %v3606 = vunpack.c.l.b16 %v3574
    %v3607 = vunpack.c.l.b16 %v3575
    %v3608 = vunpack.c.l.b16 %v3576
    %v3609 = vunpack.c.l.b16 %v3577
    %v3610 = vunpack.c.l.b16 %v3578
    %v3611 = vunpack.c.l.b16 %v3579
    %v3612 = vunpack.c.l.b16 %v3580
    %v3613 = vunpack.c.l.b16 %v3581
    %v3614 = vunpack.c.l.b16 %v3582
    %v3615 = vunpack.c.l.b16 %v3583
    %v3616 = vpack.c.b16 %v3601, %v3600
    %v3617 = vpack.c.b16 %v3603, %v3602
    %v3618 = vpack.c.b16 %v3605, %v3604
    %v3619 = vpack.c.b16 %v3607, %v3606
    %v3620 = vpack.c.b16 %v3609, %v3608
    %v3621 = vpack.c.b16 %v3611, %v3610
    %v3622 = vpack.c.b16 %v3613, %v3612
    %v3623 = vpack.c.b16 %v3615, %v3614
    %3632 = vmatprep.subr.bf16.mxu0 0
    %3633 = vmatpush1.bf16.msra.mxu0 %v3623
    %3634 = vmatprep.subr.bf16.mxu0 0
    %3635 = vmatpush1.bf16.msra.mxu0 %v3622
    %3636 = vmatprep.subr.bf16.mxu0 0
    %3637 = vmatpush1.bf16.msra.mxu0 %v3621
    %3638 = vmatprep.subr.bf16.mxu0 0
    %3639 = vmatpush1.bf16.msra.mxu0 %v3620
    %3640 = vmatprep.subr.bf16.mxu0 0
    %3641 = vmatpush1.bf16.msra.mxu0 %v3619
    %3642 = vmatprep.subr.bf16.mxu0 0
    %3643 = vmatpush1.bf16.msra.mxu0 %v3618
    %3644 = vmatprep.subr.bf16.mxu0 0
    %3645 = vmatpush1.bf16.msra.mxu0 %v3617
    %3646 = vmatprep.subr.bf16.mxu0 0
    %3647 = vmatpush1.bf16.msra.mxu0 %v3616
    %3648 = vmatprep.subr.bf16.mxu0 0
    %3649 = vmatpush2.bf16.msra.mxu0 0
    %3650 = vmatprep.subr.bf16.mxu0 0
    %3651 = vmatpush2.bf16.msra.mxu0 0
    %3652 = vmatprep.subr.bf16.mxu0 0
    %3653 = vmatpush2.bf16.msra.mxu0 0
    %3654 = vmatprep.subr.bf16.mxu0 0
    %3655 = vmatpush2.bf16.msra.mxu0 0
    %3656 = vmatprep.subr.bf16.mxu0 0
    %3657 = vmatpush2.bf16.msra.mxu0 0
    %3658 = vmatprep.subr.bf16.mxu0 0
    %3659 = vmatpush2.bf16.msra.mxu0 0
    %3660 = vmatprep.subr.bf16.mxu0 0
    %3661 = vmatpush2.bf16.msra.mxu0 0
    %3662 = vmatprep.subr.bf16.mxu0 0
    %3663 = vmatpush2.bf16.msra.mxu0 0
    %3664 = vmatprep.mubr.bf16.mxu0 0
    %3665 = vmatmul.mubr.bf16.gmra.mxu0 %v3566
    %v3666 = vpop.f32.mrf.mxu0
    %v3667 = vadd.f32 0.0, %v3666
    %v3668 = vpop.f32.mrf.mxu0
    %v3669 = vpop.f32.mrf.mxu0
    %v3670 = vpop.f32.mrf.mxu0
    %3671 = vdwg.mxu0
    %v3672 = vadd.f32 %v3560, %v3667
    %v3673 = vrot.slane %v2333, 4
    %v3675 = vrot.slane %v2334, 3
    %v3677 = vsel %vm2338, %v3673, %v3675
    %v3678 = vpack.c.bf16 %v3677, %v3677
    %s3679 = scalar_lea.vmem %s5, 768
    %v3680 = vld [vmem:[%s3679] sm:$0xf]
    %v3681 = vld [vmem:[%s3679 + $0x4] sm:$0xf]
    %v3682 = vld [vmem:[%s3679 + $0x8] sm:$0xf]
    %v3683 = vld [vmem:[%s3679 + $0xc] sm:$0xf]
    %v3684 = vld [vmem:[%s3679 + $0x10] sm:$0xf]
    %v3685 = vld [vmem:[%s3679 + $0x14] sm:$0xf]
    %v3686 = vld [vmem:[%s3679 + $0x18] sm:$0xf]
    %v3687 = vld [vmem:[%s3679 + $0x1c] sm:$0xf]
    %v3688 = vld [vmem:[%s3679 + $0x20] sm:$0xf]
    %v3689 = vld [vmem:[%s3679 + $0x24] sm:$0xf]
    %v3690 = vld [vmem:[%s3679 + $0x28] sm:$0xf]
    %v3691 = vld [vmem:[%s3679 + $0x2c] sm:$0xf]
    %v3692 = vld [vmem:[%s3679 + $0x30] sm:$0xf]
    %v3693 = vld [vmem:[%s3679 + $0x34] sm:$0xf]
    %v3694 = vld [vmem:[%s3679 + $0x38] sm:$0xf]
    %v3695 = vld [vmem:[%s3679 + $0x3c] sm:$0xf]
    %v3712 = vunpack.c.l.b16 %v3680
    %v3713 = vunpack.c.l.b16 %v3681
    %v3714 = vunpack.c.l.b16 %v3682
    %v3715 = vunpack.c.l.b16 %v3683
    %v3716 = vunpack.c.l.b16 %v3684
    %v3717 = vunpack.c.l.b16 %v3685
    %v3718 = vunpack.c.l.b16 %v3686
    %v3719 = vunpack.c.l.b16 %v3687
    %v3720 = vunpack.c.l.b16 %v3688
    %v3721 = vunpack.c.l.b16 %v3689
    %v3722 = vunpack.c.l.b16 %v3690
    %v3723 = vunpack.c.l.b16 %v3691
    %v3724 = vunpack.c.l.b16 %v3692
    %v3725 = vunpack.c.l.b16 %v3693
    %v3726 = vunpack.c.l.b16 %v3694
    %v3727 = vunpack.c.l.b16 %v3695
    %v3728 = vpack.c.b16 %v3713, %v3712
    %v3729 = vpack.c.b16 %v3715, %v3714
    %v3730 = vpack.c.b16 %v3717, %v3716
    %v3731 = vpack.c.b16 %v3719, %v3718
    %v3732 = vpack.c.b16 %v3721, %v3720
    %v3733 = vpack.c.b16 %v3723, %v3722
    %v3734 = vpack.c.b16 %v3725, %v3724
    %v3735 = vpack.c.b16 %v3727, %v3726
    %3744 = vmatprep.subr.bf16.mxu0 0
    %3745 = vmatpush1.bf16.msra.mxu0 %v3735
    %3746 = vmatprep.subr.bf16.mxu0 0
    %3747 = vmatpush1.bf16.msra.mxu0 %v3734
    %3748 = vmatprep.subr.bf16.mxu0 0
    %3749 = vmatpush1.bf16.msra.mxu0 %v3733
    %3750 = vmatprep.subr.bf16.mxu0 0
    %3751 = vmatpush1.bf16.msra.mxu0 %v3732
    %3752 = vmatprep.subr.bf16.mxu0 0
    %3753 = vmatpush1.bf16.msra.mxu0 %v3731
    %3754 = vmatprep.subr.bf16.mxu0 0
    %3755 = vmatpush1.bf16.msra.mxu0 %v3730
    %3756 = vmatprep.subr.bf16.mxu0 0
    %3757 = vmatpush1.bf16.msra.mxu0 %v3729
    %3758 = vmatprep.subr.bf16.mxu0 0
    %3759 = vmatpush1.bf16.msra.mxu0 %v3728
    %3760 = vmatprep.subr.bf16.mxu0 0
    %3761 = vmatpush2.bf16.msra.mxu0 0
    %3762 = vmatprep.subr.bf16.mxu0 0
    %3763 = vmatpush2.bf16.msra.mxu0 0
    %3764 = vmatprep.subr.bf16.mxu0 0
    %3765 = vmatpush2.bf16.msra.mxu0 0
    %3766 = vmatprep.subr.bf16.mxu0 0
    %3767 = vmatpush2.bf16.msra.mxu0 0
    %3768 = vmatprep.subr.bf16.mxu0 0
    %3769 = vmatpush2.bf16.msra.mxu0 0
    %3770 = vmatprep.subr.bf16.mxu0 0
    %3771 = vmatpush2.bf16.msra.mxu0 0
    %3772 = vmatprep.subr.bf16.mxu0 0
    %3773 = vmatpush2.bf16.msra.mxu0 0
    %3774 = vmatprep.subr.bf16.mxu0 0
    %3775 = vmatpush2.bf16.msra.mxu0 0
    %3776 = vmatprep.mubr.bf16.mxu0 0
    %3777 = vmatmul.mubr.bf16.gmra.mxu0 %v3678
    %v3778 = vpop.f32.mrf.mxu0
    %v3779 = vadd.f32 0.0, %v3778
    %v3780 = vpop.f32.mrf.mxu0
    %v3781 = vpop.f32.mrf.mxu0
    %v3782 = vpop.f32.mrf.mxu0
    %3783 = vdwg.mxu0
    %v3784 = vadd.f32 %v3672, %v3779
    %v3785 = vrot.slane %v2333, 5
    %v3787 = vrot.slane %v2334, 4
    %v3789 = vsel %vm2338, %v3785, %v3787
    %v3790 = vpack.c.bf16 %v3789, %v3789
    %s3791 = scalar_lea.vmem %s5, 832
    %v3792 = vld [vmem:[%s3791] sm:$0xf]
    %v3793 = vld [vmem:[%s3791 + $0x4] sm:$0xf]
    %v3794 = vld [vmem:[%s3791 + $0x8] sm:$0xf]
    %v3795 = vld [vmem:[%s3791 + $0xc] sm:$0xf]
    %v3796 = vld [vmem:[%s3791 + $0x10] sm:$0xf]
    %v3797 = vld [vmem:[%s3791 + $0x14] sm:$0xf]
    %v3798 = vld [vmem:[%s3791 + $0x18] sm:$0xf]
    %v3799 = vld [vmem:[%s3791 + $0x1c] sm:$0xf]
    %v3800 = vld [vmem:[%s3791 + $0x20] sm:$0xf]
    %v3801 = vld [vmem:[%s3791 + $0x24] sm:$0xf]
    %v3802 = vld [vmem:[%s3791 + $0x28] sm:$0xf]
    %v3803 = vld [vmem:[%s3791 + $0x2c] sm:$0xf]
    %v3804 = vld [vmem:[%s3791 + $0x30] sm:$0xf]
    %v3805 = vld [vmem:[%s3791 + $0x34] sm:$0xf]
    %v3806 = vld [vmem:[%s3791 + $0x38] sm:$0xf]
    %v3807 = vld [vmem:[%s3791 + $0x3c] sm:$0xf]
    %v3824 = vunpack.c.l.b16 %v3792
    %v3825 = vunpack.c.l.b16 %v3793
    %v3826 = vunpack.c.l.b16 %v3794
    %v3827 = vunpack.c.l.b16 %v3795
    %v3828 = vunpack.c.l.b16 %v3796
    %v3829 = vunpack.c.l.b16 %v3797
    %v3830 = vunpack.c.l.b16 %v3798
    %v3831 = vunpack.c.l.b16 %v3799
    %v3832 = vunpack.c.l.b16 %v3800
    %v3833 = vunpack.c.l.b16 %v3801
    %v3834 = vunpack.c.l.b16 %v3802
    %v3835 = vunpack.c.l.b16 %v3803
    %v3836 = vunpack.c.l.b16 %v3804
    %v3837 = vunpack.c.l.b16 %v3805
    %v3838 = vunpack.c.l.b16 %v3806
    %v3839 = vunpack.c.l.b16 %v3807
    %v3840 = vpack.c.b16 %v3825, %v3824
    %v3841 = vpack.c.b16 %v3827, %v3826
    %v3842 = vpack.c.b16 %v3829, %v3828
    %v3843 = vpack.c.b16 %v3831, %v3830
    %v3844 = vpack.c.b16 %v3833, %v3832
    %v3845 = vpack.c.b16 %v3835, %v3834
    %v3846 = vpack.c.b16 %v3837, %v3836
    %v3847 = vpack.c.b16 %v3839, %v3838
    %3856 = vmatprep.subr.bf16.mxu0 0
    %3857 = vmatpush1.bf16.msra.mxu0 %v3847
    %3858 = vmatprep.subr.bf16.mxu0 0
    %3859 = vmatpush1.bf16.msra.mxu0 %v3846
    %3860 = vmatprep.subr.bf16.mxu0 0
    %3861 = vmatpush1.bf16.msra.mxu0 %v3845
    %3862 = vmatprep.subr.bf16.mxu0 0
    %3863 = vmatpush1.bf16.msra.mxu0 %v3844
    %3864 = vmatprep.subr.bf16.mxu0 0
    %3865 = vmatpush1.bf16.msra.mxu0 %v3843
    %3866 = vmatprep.subr.bf16.mxu0 0
    %3867 = vmatpush1.bf16.msra.mxu0 %v3842
    %3868 = vmatprep.subr.bf16.mxu0 0
    %3869 = vmatpush1.bf16.msra.mxu0 %v3841
    %3870 = vmatprep.subr.bf16.mxu0 0
    %3871 = vmatpush1.bf16.msra.mxu0 %v3840
    %3872 = vmatprep.subr.bf16.mxu0 0
    %3873 = vmatpush2.bf16.msra.mxu0 0
    %3874 = vmatprep.subr.bf16.mxu0 0
    %3875 = vmatpush2.bf16.msra.mxu0 0
    %3876 = vmatprep.subr.bf16.mxu0 0
    %3877 = vmatpush2.bf16.msra.mxu0 0
    %3878 = vmatprep.subr.bf16.mxu0 0
    %3879 = vmatpush2.bf16.msra.mxu0 0
    %3880 = vmatprep.subr.bf16.mxu0 0
    %3881 = vmatpush2.bf16.msra.mxu0 0
    %3882 = vmatprep.subr.bf16.mxu0 0
    %3883 = vmatpush2.bf16.msra.mxu0 0
    %3884 = vmatprep.subr.bf16.mxu0 0
    %3885 = vmatpush2.bf16.msra.mxu0 0
    %3886 = vmatprep.subr.bf16.mxu0 0
    %3887 = vmatpush2.bf16.msra.mxu0 0
    %3888 = vmatprep.mubr.bf16.mxu0 0
    %3889 = vmatmul.mubr.bf16.gmra.mxu0 %v3790
    %v3890 = vpop.f32.mrf.mxu0
    %v3891 = vadd.f32 0.0, %v3890
    %v3892 = vpop.f32.mrf.mxu0
    %v3893 = vpop.f32.mrf.mxu0
    %v3894 = vpop.f32.mrf.mxu0
    %3895 = vdwg.mxu0
    %v3896 = vadd.f32 %v3784, %v3891
    %v3897 = vrot.slane %v2333, 6
    %v3899 = vrot.slane %v2334, 5
    %v3901 = vsel %vm2338, %v3897, %v3899
    %v3902 = vpack.c.bf16 %v3901, %v3901
    %s3903 = scalar_lea.vmem %s5, 896
    %v3904 = vld [vmem:[%s3903] sm:$0xf]
    %v3905 = vld [vmem:[%s3903 + $0x4] sm:$0xf]
    %v3906 = vld [vmem:[%s3903 + $0x8] sm:$0xf]
    %v3907 = vld [vmem:[%s3903 + $0xc] sm:$0xf]
    %v3908 = vld [vmem:[%s3903 + $0x10] sm:$0xf]
    %v3909 = vld [vmem:[%s3903 + $0x14] sm:$0xf]
    %v3910 = vld [vmem:[%s3903 + $0x18] sm:$0xf]
    %v3911 = vld [vmem:[%s3903 + $0x1c] sm:$0xf]
    %v3912 = vld [vmem:[%s3903 + $0x20] sm:$0xf]
    %v3913 = vld [vmem:[%s3903 + $0x24] sm:$0xf]
    %v3914 = vld [vmem:[%s3903 + $0x28] sm:$0xf]
    %v3915 = vld [vmem:[%s3903 + $0x2c] sm:$0xf]
    %v3916 = vld [vmem:[%s3903 + $0x30] sm:$0xf]
    %v3917 = vld [vmem:[%s3903 + $0x34] sm:$0xf]
    %v3918 = vld [vmem:[%s3903 + $0x38] sm:$0xf]
    %v3919 = vld [vmem:[%s3903 + $0x3c] sm:$0xf]
    %v3936 = vunpack.c.l.b16 %v3904
    %v3937 = vunpack.c.l.b16 %v3905
    %v3938 = vunpack.c.l.b16 %v3906
    %v3939 = vunpack.c.l.b16 %v3907
    %v3940 = vunpack.c.l.b16 %v3908
    %v3941 = vunpack.c.l.b16 %v3909
    %v3942 = vunpack.c.l.b16 %v3910
    %v3943 = vunpack.c.l.b16 %v3911
    %v3944 = vunpack.c.l.b16 %v3912
    %v3945 = vunpack.c.l.b16 %v3913
    %v3946 = vunpack.c.l.b16 %v3914
    %v3947 = vunpack.c.l.b16 %v3915
    %v3948 = vunpack.c.l.b16 %v3916
    %v3949 = vunpack.c.l.b16 %v3917
    %v3950 = vunpack.c.l.b16 %v3918
    %v3951 = vunpack.c.l.b16 %v3919
    %v3952 = vpack.c.b16 %v3937, %v3936
    %v3953 = vpack.c.b16 %v3939, %v3938
    %v3954 = vpack.c.b16 %v3941, %v3940
    %v3955 = vpack.c.b16 %v3943, %v3942
    %v3956 = vpack.c.b16 %v3945, %v3944
    %v3957 = vpack.c.b16 %v3947, %v3946
    %v3958 = vpack.c.b16 %v3949, %v3948
    %v3959 = vpack.c.b16 %v3951, %v3950
    %3968 = vmatprep.subr.bf16.mxu0 0
    %3969 = vmatpush1.bf16.msra.mxu0 %v3959
    %3970 = vmatprep.subr.bf16.mxu0 0
    %3971 = vmatpush1.bf16.msra.mxu0 %v3958
    %3972 = vmatprep.subr.bf16.mxu0 0
    %3973 = vmatpush1.bf16.msra.mxu0 %v3957
    %3974 = vmatprep.subr.bf16.mxu0 0
    %3975 = vmatpush1.bf16.msra.mxu0 %v3956
    %3976 = vmatprep.subr.bf16.mxu0 0
    %3977 = vmatpush1.bf16.msra.mxu0 %v3955
    %3978 = vmatprep.subr.bf16.mxu0 0
    %3979 = vmatpush1.bf16.msra.mxu0 %v3954
    %3980 = vmatprep.subr.bf16.mxu0 0
    %3981 = vmatpush1.bf16.msra.mxu0 %v3953
    %3982 = vmatprep.subr.bf16.mxu0 0
    %3983 = vmatpush1.bf16.msra.mxu0 %v3952
    %3984 = vmatprep.subr.bf16.mxu0 0
    %3985 = vmatpush2.bf16.msra.mxu0 0
    %3986 = vmatprep.subr.bf16.mxu0 0
    %3987 = vmatpush2.bf16.msra.mxu0 0
    %3988 = vmatprep.subr.bf16.mxu0 0
    %3989 = vmatpush2.bf16.msra.mxu0 0
    %3990 = vmatprep.subr.bf16.mxu0 0
    %3991 = vmatpush2.bf16.msra.mxu0 0
    %3992 = vmatprep.subr.bf16.mxu0 0
    %3993 = vmatpush2.bf16.msra.mxu0 0
    %3994 = vmatprep.subr.bf16.mxu0 0
    %3995 = vmatpush2.bf16.msra.mxu0 0
    %3996 = vmatprep.subr.bf16.mxu0 0
    %3997 = vmatpush2.bf16.msra.mxu0 0
    %3998 = vmatprep.subr.bf16.mxu0 0
    %3999 = vmatpush2.bf16.msra.mxu0 0
    %4000 = vmatprep.mubr.bf16.mxu0 0
    %4001 = vmatmul.mubr.bf16.gmra.mxu0 %v3902
    %v4002 = vpop.f32.mrf.mxu0
    %v4003 = vadd.f32 0.0, %v4002
    %v4004 = vpop.f32.mrf.mxu0
    %v4005 = vpop.f32.mrf.mxu0
    %v4006 = vpop.f32.mrf.mxu0
    %4007 = vdwg.mxu0
    %v4008 = vadd.f32 %v3896, %v4003
    %v4009 = vrot.slane %v2333, 7
    %v4011 = vrot.slane %v2334, 6
    %v4013 = vsel %vm2338, %v4009, %v4011
    %v4014 = vpack.c.bf16 %v4013, %v4013
    %s4015 = scalar_lea.vmem %s5, 960
    %v4016 = vld [vmem:[%s4015] sm:$0xf]
    %v4017 = vld [vmem:[%s4015 + $0x4] sm:$0xf]
    %v4018 = vld [vmem:[%s4015 + $0x8] sm:$0xf]
    %v4019 = vld [vmem:[%s4015 + $0xc] sm:$0xf]
    %v4020 = vld [vmem:[%s4015 + $0x10] sm:$0xf]
    %v4021 = vld [vmem:[%s4015 + $0x14] sm:$0xf]
    %v4022 = vld [vmem:[%s4015 + $0x18] sm:$0xf]
    %v4023 = vld [vmem:[%s4015 + $0x1c] sm:$0xf]
    %v4024 = vld [vmem:[%s4015 + $0x20] sm:$0xf]
    %v4025 = vld [vmem:[%s4015 + $0x24] sm:$0xf]
    %v4026 = vld [vmem:[%s4015 + $0x28] sm:$0xf]
    %v4027 = vld [vmem:[%s4015 + $0x2c] sm:$0xf]
    %v4028 = vld [vmem:[%s4015 + $0x30] sm:$0xf]
    %v4029 = vld [vmem:[%s4015 + $0x34] sm:$0xf]
    %v4030 = vld [vmem:[%s4015 + $0x38] sm:$0xf]
    %v4031 = vld [vmem:[%s4015 + $0x3c] sm:$0xf]
    %v4048 = vunpack.c.l.b16 %v4016
    %v4049 = vunpack.c.l.b16 %v4017
    %v4050 = vunpack.c.l.b16 %v4018
    %v4051 = vunpack.c.l.b16 %v4019
    %v4052 = vunpack.c.l.b16 %v4020
    %v4053 = vunpack.c.l.b16 %v4021
    %v4054 = vunpack.c.l.b16 %v4022
    %v4055 = vunpack.c.l.b16 %v4023
    %v4056 = vunpack.c.l.b16 %v4024
    %v4057 = vunpack.c.l.b16 %v4025
    %v4058 = vunpack.c.l.b16 %v4026
    %v4059 = vunpack.c.l.b16 %v4027
    %v4060 = vunpack.c.l.b16 %v4028
    %v4061 = vunpack.c.l.b16 %v4029
    %v4062 = vunpack.c.l.b16 %v4030
    %v4063 = vunpack.c.l.b16 %v4031
    %v4064 = vpack.c.b16 %v4049, %v4048
    %v4065 = vpack.c.b16 %v4051, %v4050
    %v4066 = vpack.c.b16 %v4053, %v4052
    %v4067 = vpack.c.b16 %v4055, %v4054
    %v4068 = vpack.c.b16 %v4057, %v4056
    %v4069 = vpack.c.b16 %v4059, %v4058
    %v4070 = vpack.c.b16 %v4061, %v4060
    %v4071 = vpack.c.b16 %v4063, %v4062
    %4080 = vmatprep.subr.bf16.mxu0 0
    %4081 = vmatpush1.bf16.msra.mxu0 %v4071
    %4082 = vmatprep.subr.bf16.mxu0 0
    %4083 = vmatpush1.bf16.msra.mxu0 %v4070
    %4084 = vmatprep.subr.bf16.mxu0 0
    %4085 = vmatpush1.bf16.msra.mxu0 %v4069
    %4086 = vmatprep.subr.bf16.mxu0 0
    %4087 = vmatpush1.bf16.msra.mxu0 %v4068
    %4088 = vmatprep.subr.bf16.mxu0 0
    %4089 = vmatpush1.bf16.msra.mxu0 %v4067
    %4090 = vmatprep.subr.bf16.mxu0 0
    %4091 = vmatpush1.bf16.msra.mxu0 %v4066
    %4092 = vmatprep.subr.bf16.mxu0 0
    %4093 = vmatpush1.bf16.msra.mxu0 %v4065
    %4094 = vmatprep.subr.bf16.mxu0 0
    %4095 = vmatpush1.bf16.msra.mxu0 %v4064
    %4096 = vmatprep.subr.bf16.mxu0 0
    %4097 = vmatpush2.bf16.msra.mxu0 0
    %4098 = vmatprep.subr.bf16.mxu0 0
    %4099 = vmatpush2.bf16.msra.mxu0 0
    %4100 = vmatprep.subr.bf16.mxu0 0
    %4101 = vmatpush2.bf16.msra.mxu0 0
    %4102 = vmatprep.subr.bf16.mxu0 0
    %4103 = vmatpush2.bf16.msra.mxu0 0
    %4104 = vmatprep.subr.bf16.mxu0 0
    %4105 = vmatpush2.bf16.msra.mxu0 0
    %4106 = vmatprep.subr.bf16.mxu0 0
    %4107 = vmatpush2.bf16.msra.mxu0 0
    %4108 = vmatprep.subr.bf16.mxu0 0
    %4109 = vmatpush2.bf16.msra.mxu0 0
    %4110 = vmatprep.subr.bf16.mxu0 0
    %4111 = vmatpush2.bf16.msra.mxu0 0
    %4112 = vmatprep.mubr.bf16.mxu0 0
    %4113 = vmatmul.mubr.bf16.gmra.mxu0 %v4014
    %v4114 = vpop.f32.mrf.mxu0
    %v4115 = vadd.f32 0.0, %v4114
    %v4116 = vpop.f32.mrf.mxu0
    %v4117 = vpop.f32.mrf.mxu0
    %v4118 = vpop.f32.mrf.mxu0
    %4119 = vdwg.mxu0
    %v4120 = vadd.f32 %v4008, %v4115
    %v4121 = vld [vmem:[%s6] sm:$0x1]
    %v4123 = vlaneseq
    %v4124 = vshrl.u32 %v4123, 7
    %v4125 = vsub.s32 0, %v4124
    %v4126 = vrot.slane %v4121, %v4125
    %v4128 = vadd.f32 %v4120, %v4126
    %v4129 = vmax.f32 %v4128, 0.0
    %v4130 = vpack.c.bf16 %v4129, %v4129
    %v4131 = vld [vmem:[%s7] sm:$0xf]
    %v4132 = vld [vmem:[%s7 + $0x4] sm:$0xf]
    %v4133 = vld [vmem:[%s7 + $0x8] sm:$0xf]
    %v4134 = vld [vmem:[%s7 + $0xc] sm:$0xf]
    %v4135 = vld [vmem:[%s7 + $0x10] sm:$0xf]
    %v4136 = vld [vmem:[%s7 + $0x14] sm:$0xf]
    %v4137 = vld [vmem:[%s7 + $0x18] sm:$0xf]
    %v4138 = vld [vmem:[%s7 + $0x1c] sm:$0xf]
    %v4139 = vld [vmem:[%s7 + $0x20] sm:$0xf]
    %v4140 = vld [vmem:[%s7 + $0x24] sm:$0xf]
    %v4141 = vld [vmem:[%s7 + $0x28] sm:$0xf]
    %v4142 = vld [vmem:[%s7 + $0x2c] sm:$0xf]
    %v4143 = vld [vmem:[%s7 + $0x30] sm:$0xf]
    %v4144 = vld [vmem:[%s7 + $0x34] sm:$0xf]
    %v4145 = vld [vmem:[%s7 + $0x38] sm:$0xf]
    %v4146 = vld [vmem:[%s7 + $0x3c] sm:$0xf]
    %v4147 = vld [vmem:[%s8] sm:$0x1]
    %v4149 = vlaneseq
    %v4150 = vshrl.u32 %v4149, 7
    %v4151 = vsub.s32 0, %v4150
    %v4152 = vrot.slane %v4147, %v4151
    %v4170 = vunpack.c.l.b16 %v4131
    %v4171 = vunpack.c.l.b16 %v4132
    %v4172 = vunpack.c.l.b16 %v4133
    %v4173 = vunpack.c.l.b16 %v4134
    %v4174 = vunpack.c.l.b16 %v4135
    %v4175 = vunpack.c.l.b16 %v4136
    %v4176 = vunpack.c.l.b16 %v4137
    %v4177 = vunpack.c.l.b16 %v4138
    %v4178 = vunpack.c.l.b16 %v4139
    %v4179 = vunpack.c.l.b16 %v4140
    %v4180 = vunpack.c.l.b16 %v4141
    %v4181 = vunpack.c.l.b16 %v4142
    %v4182 = vunpack.c.l.b16 %v4143
    %v4183 = vunpack.c.l.b16 %v4144
    %v4184 = vunpack.c.l.b16 %v4145
    %v4185 = vunpack.c.l.b16 %v4146
    %v4186 = vpack.c.b16 %v4171, %v4170
    %v4187 = vpack.c.b16 %v4173, %v4172
    %v4188 = vpack.c.b16 %v4175, %v4174
    %v4189 = vpack.c.b16 %v4177, %v4176
    %v4190 = vpack.c.b16 %v4179, %v4178
    %v4191 = vpack.c.b16 %v4181, %v4180
    %v4192 = vpack.c.b16 %v4183, %v4182
    %v4193 = vpack.c.b16 %v4185, %v4184
    %4202 = vmatprep.subr.bf16.mxu0 0
    %4203 = vmatpush1.bf16.msra.mxu0 %v4193
    %4204 = vmatprep.subr.bf16.mxu0 0
    %4205 = vmatpush1.bf16.msra.mxu0 %v4192
    %4206 = vmatprep.subr.bf16.mxu0 0
    %4207 = vmatpush1.bf16.msra.mxu0 %v4191
    %4208 = vmatprep.subr.bf16.mxu0 0
    %4209 = vmatpush1.bf16.msra.mxu0 %v4190
    %4210 = vmatprep.subr.bf16.mxu0 0
    %4211 = vmatpush1.bf16.msra.mxu0 %v4189
    %4212 = vmatprep.subr.bf16.mxu0 0
    %4213 = vmatpush1.bf16.msra.mxu0 %v4188
    %4214 = vmatprep.subr.bf16.mxu0 0
    %4215 = vmatpush1.bf16.msra.mxu0 %v4187
    %4216 = vmatprep.subr.bf16.mxu0 0
    %4217 = vmatpush1.bf16.msra.mxu0 %v4186
    %4218 = vmatprep.subr.bf16.mxu0 0
    %4219 = vmatpush2.bf16.msra.mxu0 0
    %4220 = vmatprep.subr.bf16.mxu0 0
    %4221 = vmatpush2.bf16.msra.mxu0 0
    %4222 = vmatprep.subr.bf16.mxu0 0
    %4223 = vmatpush2.bf16.msra.mxu0 0
    %4224 = vmatprep.subr.bf16.mxu0 0
    %4225 = vmatpush2.bf16.msra.mxu0 0
    %4226 = vmatprep.subr.bf16.mxu0 0
    %4227 = vmatpush2.bf16.msra.mxu0 0
    %4228 = vmatprep.subr.bf16.mxu0 0
    %4229 = vmatpush2.bf16.msra.mxu0 0
    %4230 = vmatprep.subr.bf16.mxu0 0
    %4231 = vmatpush2.bf16.msra.mxu0 0
    %4232 = vmatprep.subr.bf16.mxu0 0
    %4233 = vmatpush2.bf16.msra.mxu0 0
    %4234 = vmatprep.mubr.bf16.mxu0 0
    %4235 = vmatmul.mubr.bf16.gmra.mxu0 %v4130
    %v4236 = vpop.f32.mrf.mxu0
    %v4237 = vadd.f32 %v4152, %v4236
    %v4238 = vpop.f32.mrf.mxu0
    %v4239 = vpop.f32.mrf.mxu0
    %v4240 = vpop.f32.mrf.mxu0
    %4241 = vdwg.mxu0
    %v4242 = vmax.f32 %v4237, 0.0
    %v4243 = vpack.c.bf16 %v4242, %v4242
    %v4244 = vld [vmem:[%s9] sm:$0xf]
    %v4245 = vld [vmem:[%s9 + $0x4] sm:$0xf]
    %v4246 = vld [vmem:[%s9 + $0x8] sm:$0xf]
    %v4247 = vld [vmem:[%s9 + $0xc] sm:$0xf]
    %v4248 = vld [vmem:[%s9 + $0x10] sm:$0xf]
    %v4249 = vld [vmem:[%s9 + $0x14] sm:$0xf]
    %v4250 = vld [vmem:[%s9 + $0x18] sm:$0xf]
    %v4251 = vld [vmem:[%s9 + $0x1c] sm:$0xf]
    %v4252 = vld [vmem:[%s9 + $0x20] sm:$0xf]
    %v4253 = vld [vmem:[%s9 + $0x24] sm:$0xf]
    %v4254 = vld [vmem:[%s9 + $0x28] sm:$0xf]
    %v4255 = vld [vmem:[%s9 + $0x2c] sm:$0xf]
    %v4256 = vld [vmem:[%s9 + $0x30] sm:$0xf]
    %v4257 = vld [vmem:[%s9 + $0x34] sm:$0xf]
    %v4258 = vld [vmem:[%s9 + $0x38] sm:$0xf]
    %v4259 = vld [vmem:[%s9 + $0x3c] sm:$0xf]
    %v4260 = vld [vmem:[%s10] sm:$0x1]
    %v4262 = vlaneseq
    %v4263 = vshrl.u32 %v4262, 7
    %v4264 = vsub.s32 0, %v4263
    %v4265 = vrot.slane %v4260, %v4264
    %v4283 = vunpack.c.l.b16 %v4244
    %v4284 = vunpack.c.l.b16 %v4245
    %v4285 = vunpack.c.l.b16 %v4246
    %v4286 = vunpack.c.l.b16 %v4247
    %v4287 = vunpack.c.l.b16 %v4248
    %v4288 = vunpack.c.l.b16 %v4249
    %v4289 = vunpack.c.l.b16 %v4250
    %v4290 = vunpack.c.l.b16 %v4251
    %v4291 = vunpack.c.l.b16 %v4252
    %v4292 = vunpack.c.l.b16 %v4253
    %v4293 = vunpack.c.l.b16 %v4254
    %v4294 = vunpack.c.l.b16 %v4255
    %v4295 = vunpack.c.l.b16 %v4256
    %v4296 = vunpack.c.l.b16 %v4257
    %v4297 = vunpack.c.l.b16 %v4258
    %v4298 = vunpack.c.l.b16 %v4259
    %v4299 = vpack.c.b16 %v4284, %v4283
    %v4300 = vpack.c.b16 %v4286, %v4285
    %v4301 = vpack.c.b16 %v4288, %v4287
    %v4302 = vpack.c.b16 %v4290, %v4289
    %v4303 = vpack.c.b16 %v4292, %v4291
    %v4304 = vpack.c.b16 %v4294, %v4293
    %v4305 = vpack.c.b16 %v4296, %v4295
    %v4306 = vpack.c.b16 %v4298, %v4297
    %4315 = vmatprep.subr.bf16.mxu0 0
    %4316 = vmatpush1.bf16.msra.mxu0 %v4306
    %4317 = vmatprep.subr.bf16.mxu0 0
    %4318 = vmatpush1.bf16.msra.mxu0 %v4305
    %4319 = vmatprep.subr.bf16.mxu0 0
    %4320 = vmatpush1.bf16.msra.mxu0 %v4304
    %4321 = vmatprep.subr.bf16.mxu0 0
    %4322 = vmatpush1.bf16.msra.mxu0 %v4303
    %4323 = vmatprep.subr.bf16.mxu0 0
    %4324 = vmatpush1.bf16.msra.mxu0 %v4302
    %4325 = vmatprep.subr.bf16.mxu0 0
    %4326 = vmatpush1.bf16.msra.mxu0 %v4301
    %4327 = vmatprep.subr.bf16.mxu0 0
    %4328 = vmatpush1.bf16.msra.mxu0 %v4300
    %4329 = vmatprep.subr.bf16.mxu0 0
    %4330 = vmatpush1.bf16.msra.mxu0 %v4299
    %4331 = vmatprep.subr.bf16.mxu0 0
    %4332 = vmatpush2.bf16.msra.mxu0 0
    %4333 = vmatprep.subr.bf16.mxu0 0
    %4334 = vmatpush2.bf16.msra.mxu0 0
    %4335 = vmatprep.subr.bf16.mxu0 0
    %4336 = vmatpush2.bf16.msra.mxu0 0
    %4337 = vmatprep.subr.bf16.mxu0 0
    %4338 = vmatpush2.bf16.msra.mxu0 0
    %4339 = vmatprep.subr.bf16.mxu0 0
    %4340 = vmatpush2.bf16.msra.mxu0 0
    %4341 = vmatprep.subr.bf16.mxu0 0
    %4342 = vmatpush2.bf16.msra.mxu0 0
    %4343 = vmatprep.subr.bf16.mxu0 0
    %4344 = vmatpush2.bf16.msra.mxu0 0
    %4345 = vmatprep.subr.bf16.mxu0 0
    %4346 = vmatpush2.bf16.msra.mxu0 0
    %4347 = vmatprep.mubr.bf16.mxu0 0
    %4348 = vmatmul.mubr.bf16.gmra.mxu0 %v4243
    %v4349 = vpop.f32.mrf.mxu0
    %v4350 = vadd.f32 %v4265, %v4349
    %v4351 = vpop.f32.mrf.mxu0
    %v4352 = vpop.f32.mrf.mxu0
    %v4353 = vpop.f32.mrf.mxu0
    %4354 = vdwg.mxu0
    %v4355 = vlaneseq
    %v4356 = vand.u32 %v4355, 127
    %vm4357 = vcmp.lt.s32.totalorder %v4356, 10
    %v4358 = vsel %vm4357, %v4350, -1e+30
    %vm4359 = vcmask 1041408
    %v4360 = vsel %vm4359, %v4358, -inf
    %4361 = vmax.xlane.f32.xlu0 %v4360
    %v4362 = vpop.xlane.xlu0 %4361
    %v4363 = vsub.f32 %v4358, %v4362
    %v4364 = vmul.f32 %v4363, 1.442695
    %v4365 = vpow.pop %v4364
    %v4366 = vsel %vm4359, %v4365, 0.0
    %4367 = vadd.xlane.f32.xlu0 %v4366
    %v4368 = vpop.xlane.xlu0 %4367
    %v4369 = vrcp.pop %v4368
    %v4370 = vmul.f32 %v4365, %v4369
    %4371 = vst [vmem:[#allocation2] sm:$0x3] %v4370
    // Predicated region
    $region46: #{net_forward.1} parent=1 // pred_check
      _
    $region47: #{net_forward.1} parent=1 // pred_check_branch
      %4373 = sbr.rel (0) target = $region49
    $region48: #{net_forward.1} parent=1 // pred_region
      %s4375 = ssub.s32 32, 32
      %4376 = vsyncadd [#allocation3], %s4375
      %s4378 = sshll.u32 [#allocation2], 4
      %s4379 = int_to_ptr.vmem [resolvable:$true] %s4378
      %4381 = dma.vmem_to_hbm [thread:$0]  %s4379, 32, %s11, [#allocation3]
    $region49: #{net_forward.1} parent=1 // pred_fallthru
      _
    // Predicated region
    $region50: #{net_forward.1} parent=1 // pred_check
      _
    $region51: #{net_forward.1} parent=1 // pred_check_branch
      %4383 = sbr.rel (0) target = $region53
    $region52: #{net_forward.1} parent=1 // pred_region
      %4384 = dma.done [#allocation3], 32
    $region53: #{net_forward.1} parent=1 // pred_fallthru
      _
    %4385 = vsyncpa [#allocation3], 1

</llo_original>
